<compile_context>
chip_gen: v7x
topology: tpu7x:2x2x1
jax: 0.10.0
libtpu: 0.0.40
codegen_flags: <defaults>
</compile_context>

<pallas_src>
import numpy as np
import jax
import jax.numpy as jnp
from jax.experimental import pallas as pl
from jax.experimental.pallas import tpu as pltpu


# ----------------------------------------------------------------------------
# Fused SPADE + AdaIN forward
# ----------------------------------------------------------------------------
def spade_style_block(x, segmap, z, w_fc, b_fc, w1, b1, wg, bg, wb, bb):
    """x: (N,H,W,C) NHWC, segmap: (N,Hs,Ws,Cl), z: (N,w_dim).
    Conv weights HWIO, FC weight (2C, w_dim). Returns NHWC output."""
    N, H, W, C = x.shape
    Hs, Ws, Cl = segmap.shape[1:]
    w_dim = z.shape[1]
    nh = w1.shape[-1]
    HW = H * W
    Clp = 8                                    # pad label channels to one sublane tile

    taps = [(dy, dx) for dy in (-1, 0, 1) for dx in (-1, 0, 1)]

    # ------------- wrapper-side layout plumbing (tiny, mostly constants) -------------
    # nearest upsample (PyTorch 'nearest': src = floor(dst * in/out)); trace-time indices
    ridx = (np.arange(H) * Hs) // H
    cidx = (np.arange(W) * Ws) // W
    seg_up = segmap[:, ridx][:, :, cidx]                              # (N,H,W,Cl)
    seg_cm = seg_up.transpose(0, 3, 1, 2).reshape(N, Cl, HW)          # channel-major, lane-dense
    seg_cm = jnp.pad(seg_cm, ((0, 0), (0, Clp - Cl), (0, 0)))         # (N, 8, HW)

    x_cm = x.transpose(0, 3, 1, 2).reshape(N, C, HW)                  # channel-major, lane-dense
    z3 = z.reshape(N, 1, w_dim)

    # Per-tap conv weights, OUTPUT-channel-major, so every tap is a standard
    # (Cout, Cin) @ (Cin, HW) matmul that lands directly in (C, HW) layout.
    w1t = jnp.transpose(w1, (0, 1, 3, 2)).reshape(9, nh, Cl)          # (9, nh, Cl)
    w1t = jnp.pad(w1t, ((0, 0), (0, 0), (0, Clp - Cl)))               # (9, nh, 8)
    b1c = b1.reshape(nh, 1)
    wgbt = jnp.transpose(jnp.concatenate([wg, wb], axis=-1),
                         (0, 1, 3, 2)).reshape(9, 2 * C, nh)          # (9, 2C, nh) fused gamma|beta
    bgbc = jnp.concatenate([bg, bb]).reshape(2 * C, 1)                # (2C, 1)
    bfcc = b_fc.reshape(2 * C, 1)

    # Per-tap boundary masks for the roll-based 3x3 'SAME' conv (trace-time constants).
    yy = np.arange(HW) // W
    xx = np.arange(HW) % W
    mlist = []
    for dy, dx in taps:
        m = np.ones(HW, dtype=bool)
        if dy == -1:
            m &= yy >= 1
        elif dy == 1:
            m &= yy <= H - 2
        if dx == -1:
            m &= xx >= 1
        elif dx == 1:
            m &= xx <= W - 2
        mlist.append(m)
    masks = jnp.asarray(np.stack(mlist).astype(np.float32).reshape(9, 1, HW))

    # ---------------------------------- the kernel ----------------------------------
    def kernel(x_ref, seg_ref, z_ref, mask_ref, wfc_ref, bfc_ref,
               w1_ref, b1_ref, wgb_ref, bgb_ref, o_ref):
        xc = x_ref[0]                                                 # (C, HW)  lane-dense
        segc = seg_ref[0]                                             # (Clp, HW)

        # --- ApplyStyle FC fused: style = leaky_relu(W @ z + b, 0.2), column form ---
        sty = jnp.sum(wfc_ref[...] * z_ref[0], axis=1, keepdims=True) + bfc_ref[...]
        sty = jnp.where(sty >= 0.0, sty, 0.2 * sty)                   # (2C, 1)
        adain = xc * (sty[0:C, :] + 1.0) + sty[C:2 * C, :]            # (C, HW)

        # --- InstanceNorm2d(affine=False), eps=1e-5, two-pass biased stats ---
        mean = jnp.sum(xc, axis=1, keepdims=True) * (1.0 / HW)
        xm = xc - mean
        var = jnp.sum(xm * xm, axis=1, keepdims=True) * (1.0 / HW)
        normalized = xm * jax.lax.rsqrt(var + 1e-5)                   # (C, HW)

        # 3x3 SAME conv on channel-major data: 9 accumulated shift-matmul taps.
        # Rolls use the (otherwise idle) XLU slot; each tap is one small MXU push.
        def conv3x3(inp, w_ref, bias):
            acc = None
            for t, (dy, dx) in enumerate(taps):
                s = dy * W + dx
                v = inp
                if s != 0:
                    v = pltpu.roll(v, (-s) % HW, axis=1) * mask_ref[t]
                c = jnp.dot(w_ref[t], v, preferred_element_type=jnp.float32)
                acc = c if acc is None else acc + c
            return acc + bias

        # --- mlp_shared: conv + ReLU, result stays channel-major (nh, HW) ---
        actv = jnp.maximum(conv3x3(segc, w1_ref, b1_ref[...]), 0.0)   # (nh, HW)

        # --- fused gamma|beta conv: result directly (2C, HW), no transpose/padding ---
        gb = conv3x3(actv, wgb_ref, bgb_ref[...])                     # (2C, HW)

        spade = normalized * (1.0 + gb[0:C, :]) + gb[C:2 * C, :]
        # lane-dense output store: last dim = HW = 256 -> unmasked full-lane vst
        o_ref[0] = ((spade + adain) * 0.5).astype(o_ref.dtype)

    out_cm = pl.pallas_call(
        kernel,
        out_shape=jax.ShapeDtypeStruct((N, C, HW), jnp.float32),
        grid=(N,),
        in_specs=[
            pl.BlockSpec((1, C, HW), lambda n: (n, 0, 0)),            # x (channel-major)
            pl.BlockSpec((1, Clp, HW), lambda n: (n, 0, 0)),          # upsampled segmap
            pl.BlockSpec((1, 1, w_dim), lambda n: (n, 0, 0)),         # latent z
            pl.BlockSpec((9, 1, HW), lambda n: (0, 0, 0)),            # per-tap boundary masks
            pl.BlockSpec((2 * C, w_dim), lambda n: (0, 0)),           # FC weight
            pl.BlockSpec((2 * C, 1), lambda n: (0, 0)),               # FC bias (column)
            pl.BlockSpec((9, nh, Clp), lambda n: (0, 0, 0)),          # mlp_shared tap weights
            pl.BlockSpec((nh, 1), lambda n: (0, 0)),                  # mlp_shared bias (column)
            pl.BlockSpec((9, 2 * C, nh), lambda n: (0, 0, 0)),        # fused gamma|beta tap weights
            pl.BlockSpec((2 * C, 1), lambda n: (0, 0)),               # fused gamma|beta bias
        ],
        out_specs=pl.BlockSpec((1, C, HW), lambda n: (n, 0, 0)),
        compiler_params=pltpu.CompilerParams(dimension_semantics=("parallel",)),
    )(x_cm, seg_cm, z3, masks, w_fc, bfcc, w1t, b1c, wgbt, bgbc)

    return out_cm.reshape(N, C, H, W).transpose(0, 2, 3, 1)           # back to NHWC


# ----------------------------------------------------------------------------
# Pure-JAX reference (mirrors the PyTorch forward semantics, NHWC)
# ----------------------------------------------------------------------------
def reference(x, segmap_small, z, w_fc, b_fc, w1, b1, wg, bg, wb, bb):
    N, H, W, C = x.shape
    # AdaIN
    style = z @ w_fc.T + b_fc
    style = jnp.where(style >= 0, style, 0.2 * style)
    s0 = style[:, :C].reshape(N, 1, 1, C)
    s1 = style[:, C:].reshape(N, 1, 1, C)
    adain = x * (s0 + 1.0) + s1
    # SPADE: instance norm
    mean = jnp.mean(x, axis=(1, 2), keepdims=True)
    var = jnp.mean((x - mean) ** 2, axis=(1, 2), keepdims=True)
    normed = (x - mean) / jnp.sqrt(var + 1e-5)
    # nearest interpolation
    hi, wi = segmap_small.shape[1:3]
    ridx = (jnp.arange(H) * hi) // H
    cidx = (jnp.arange(W) * wi) // W
    seg_up = segmap_small[:, ridx][:, :, cidx]

    def conv(inp, w, b):
        y = jax.lax.conv_general_dilated(
            inp, w, (1, 1), 'SAME', dimension_numbers=('NHWC', 'HWIO', 'NHWC'))
        return y + b.reshape(1, 1, 1, -1)

    actv = jax.nn.relu(conv(seg_up, w1, b1))
    gamma = conv(actv, wg, bg)
    beta = conv(actv, wb, bb)
    spade = normed * (1.0 + gamma) + beta
    return (spade + adain) / 2.0


if __name__ == "__main__":
    key = jax.random.PRNGKey(0)
    N, C, H, W = 2, 4, 16, 16          # fin = 4
    Cl = 4                             # opt.semantic_nc
    w_dim = 32                         # opt.w_dim
    nh = 128                           # SPADE nhidden (fixed in module)
    Hs, Ws = 8, 8                      # segmap resolution before nearest upsample

    ks = jax.random.split(key, 10)
    x = jax.random.normal(ks[0], (N, H, W, C), jnp.float32)
    segmap_small = jax.random.normal(ks[1], (N, Hs, Ws, Cl), jnp.float32)
    z = jax.random.normal(ks[2], (N, w_dim), jnp.float32)

    # ApplyStyle FC params: weight = randn(out,in) * (gain * in^-0.5), bias zeros, lrmul=1
    init_std = 1.0 * w_dim ** (-0.5)
    w_fc = jax.random.normal(ks[3], (2 * C, w_dim), jnp.float32) * init_std
    b_fc = jnp.zeros((2 * C,), jnp.float32)

    # SPADE conv params (HWIO), deterministic synthetic init
    w1 = jax.random.normal(ks[4], (3, 3, Cl, nh), jnp.float32) * 0.1
    b1 = jax.random.normal(ks[5], (nh,), jnp.float32) * 0.1
    wg = jax.random.normal(ks[6], (3, 3, nh, C), jnp.float32) * 0.05
    bg = jax.random.normal(ks[7], (C,), jnp.float32) * 0.1
    wb = jax.random.normal(ks[8], (3, 3, nh, C), jnp.float32) * 0.05
    bb = jax.random.normal(ks[9], (C,), jnp.float32) * 0.1

    fwd = jax.jit(spade_style_block)
    out = fwd(x, segmap_small, z, w_fc, b_fc, w1, b1, wg, bg, wb, bb)
    out = jax.block_until_ready(out)

    ref = reference(x, segmap_small, z, w_fc, b_fc, w1, b1, wg, bg, wb, bb)
    err = float(jnp.max(jnp.abs(out - ref)))
    assert jnp.allclose(out, ref, atol=1e-3, rtol=1e-3), f"max abs err = {err}"
    print("KERNEL_OK")
</pallas_src>

<mosaic_0001>
module attributes {stable_mosaic.version = 11 : i64} {
  func.func @kernel(%arg0: i32, %arg1: memref<1x4x256xf32, #tpu.memory_space<vmem>>, %arg2: memref<1x8x256xf32, #tpu.memory_space<vmem>>, %arg3: memref<1x1x32xf32, #tpu.memory_space<vmem>>, %arg4: memref<9x1x256xf32, #tpu.memory_space<vmem>>, %arg5: memref<8x32xf32, #tpu.memory_space<vmem>>, %arg6: memref<8x1xf32, #tpu.memory_space<vmem>>, %arg7: memref<9x128x8xf32, #tpu.memory_space<vmem>>, %arg8: memref<128x1xf32, #tpu.memory_space<vmem>>, %arg9: memref<9x8x128xf32, #tpu.memory_space<vmem>>, %arg10: memref<8x1xf32, #tpu.memory_space<vmem>>, %arg11: memref<1x4x256xf32, #tpu.memory_space<vmem>>) attributes {dimension_semantics = [#tpu.dimension_semantics<parallel>], iteration_bounds = array<i64: 2>, scalar_prefetch = 0 : i64, scratch_operands = 0 : i64, tpu.core_type = #tpu.core_type<tc>, window_params = [{transform_indices = @transform_0, window_bounds = array<i64: 1, 4, 256>}, {transform_indices = @transform_1, window_bounds = array<i64: 1, 8, 256>}, {transform_indices = @transform_2, window_bounds = array<i64: 1, 1, 32>}, {pipeline_mode = #tpu.pipeline_mode<synchronous>, transform_indices = @transform_3, window_bounds = array<i64: 9, 1, 256>}, {pipeline_mode = #tpu.pipeline_mode<synchronous>, transform_indices = @transform_4, window_bounds = array<i64: 8, 32>}, {pipeline_mode = #tpu.pipeline_mode<synchronous>, transform_indices = @transform_5, window_bounds = array<i64: 8, 1>}, {pipeline_mode = #tpu.pipeline_mode<synchronous>, transform_indices = @transform_6, window_bounds = array<i64: 9, 128, 8>}, {pipeline_mode = #tpu.pipeline_mode<synchronous>, transform_indices = @transform_7, window_bounds = array<i64: 128, 1>}, {pipeline_mode = #tpu.pipeline_mode<synchronous>, transform_indices = @transform_8, window_bounds = array<i64: 9, 8, 128>}, {pipeline_mode = #tpu.pipeline_mode<synchronous>, transform_indices = @transform_9, window_bounds = array<i64: 8, 1>}, {transform_indices = @transform_10, window_bounds = array<i64: 1, 4, 256>}]} {
    %c0 = arith.constant 0 : index
    %c0_0 = arith.constant 0 : index
    %c0_1 = arith.constant 0 : index
    %0 = vector.load %arg1[%c0, %c0_0, %c0_1] : memref<1x4x256xf32, #tpu.memory_space<vmem>>, vector<1x4x256xf32>
    %1 = vector.shape_cast %0 : vector<1x4x256xf32> to vector<4x256xf32>
    %c0_2 = arith.constant 0 : index
    %c0_3 = arith.constant 0 : index
    %c0_4 = arith.constant 0 : index
    %2 = vector.load %arg2[%c0_2, %c0_3, %c0_4] : memref<1x8x256xf32, #tpu.memory_space<vmem>>, vector<1x8x256xf32>
    %3 = vector.shape_cast %2 : vector<1x8x256xf32> to vector<8x256xf32>
    %c0_5 = arith.constant 0 : index
    %c0_6 = arith.constant 0 : index
    %4 = vector.load %arg5[%c0_5, %c0_6] : memref<8x32xf32, #tpu.memory_space<vmem>>, vector<8x32xf32>
    %c0_7 = arith.constant 0 : index
    %c0_8 = arith.constant 0 : index
    %c0_9 = arith.constant 0 : index
    %5 = vector.load %arg3[%c0_7, %c0_8, %c0_9] : memref<1x1x32xf32, #tpu.memory_space<vmem>>, vector<1x1x32xf32>
    %6 = vector.shape_cast %5 : vector<1x1x32xf32> to vector<1x32xf32>
    %7 = vector.broadcast %6 : vector<1x32xf32> to vector<8x32xf32>
    %8 = arith.mulf %4, %7 : vector<8x32xf32>
    %cst = arith.constant dense<0.000000e+00> : vector<8xf32>
    %9 = vector.multi_reduction <add>, %8, %cst [1] : vector<8x32xf32> to vector<8xf32>
    %10 = vector.shape_cast %9 : vector<8xf32> to vector<8x1xf32>
    %c0_10 = arith.constant 0 : index
    %c0_11 = arith.constant 0 : index
    %11 = vector.load %arg6[%c0_10, %c0_11] : memref<8x1xf32, #tpu.memory_space<vmem>>, vector<8x1xf32>
    %12 = arith.addf %10, %11 : vector<8x1xf32>
    %cst_12 = arith.constant 0.000000e+00 : f32
    %13 = vector.broadcast %cst_12 : f32 to vector<8x1xf32>
    %14 = arith.cmpf oge, %12, %13 : vector<8x1xf32>
    %cst_13 = arith.constant 2.000000e-01 : f32
    %15 = vector.broadcast %cst_13 : f32 to vector<8x1xf32>
    %16 = arith.mulf %15, %12 : vector<8x1xf32>
    %17 = arith.select %14, %12, %16 : vector<8x1xi1>, vector<8x1xf32>
    %18 = vector.extract_strided_slice %17 {offsets = [0, 0], sizes = [4, 1], strides = [1, 1]} : vector<8x1xf32> to vector<4x1xf32>
    %cst_14 = arith.constant 1.000000e+00 : f32
    %19 = vector.broadcast %cst_14 : f32 to vector<4x1xf32>
    %20 = arith.addf %18, %19 : vector<4x1xf32>
    %21 = vector.broadcast %20 : vector<4x1xf32> to vector<4x256xf32>
    %22 = arith.mulf %1, %21 : vector<4x256xf32>
    %23 = vector.extract_strided_slice %17 {offsets = [4, 0], sizes = [4, 1], strides = [1, 1]} : vector<8x1xf32> to vector<4x1xf32>
    %24 = vector.broadcast %23 : vector<4x1xf32> to vector<4x256xf32>
    %25 = arith.addf %22, %24 : vector<4x256xf32>
    %cst_15 = arith.constant dense<0.000000e+00> : vector<4xf32>
    %26 = vector.multi_reduction <add>, %1, %cst_15 [1] : vector<4x256xf32> to vector<4xf32>
    %27 = vector.shape_cast %26 : vector<4xf32> to vector<4x1xf32>
    %cst_16 = arith.constant 3.906250e-03 : f32
    %28 = vector.broadcast %cst_16 : f32 to vector<4x1xf32>
    %29 = arith.mulf %27, %28 : vector<4x1xf32>
    %30 = vector.broadcast %29 : vector<4x1xf32> to vector<4x256xf32>
    %31 = arith.subf %1, %30 : vector<4x256xf32>
    %32 = arith.mulf %31, %31 : vector<4x256xf32>
    %cst_17 = arith.constant dense<0.000000e+00> : vector<4xf32>
    %33 = vector.multi_reduction <add>, %32, %cst_17 [1] : vector<4x256xf32> to vector<4xf32>
    %34 = vector.shape_cast %33 : vector<4xf32> to vector<4x1xf32>
    %cst_18 = arith.constant 3.906250e-03 : f32
    %35 = vector.broadcast %cst_18 : f32 to vector<4x1xf32>
    %36 = arith.mulf %34, %35 : vector<4x1xf32>
    %cst_19 = arith.constant 9.99999974E-6 : f32
    %37 = vector.broadcast %cst_19 : f32 to vector<4x1xf32>
    %38 = arith.addf %36, %37 : vector<4x1xf32>
    %39 = math.rsqrt %38 : vector<4x1xf32>
    %40 = vector.broadcast %39 : vector<4x1xf32> to vector<4x256xf32>
    %41 = arith.mulf %31, %40 : vector<4x256xf32>
    %c0_20 = arith.constant 0 : index
    %c0_21 = arith.constant 0 : index
    %42 = vector.load %arg8[%c0_20, %c0_21] : memref<128x1xf32, #tpu.memory_space<vmem>>, vector<128x1xf32>
    %c17_i32 = arith.constant 17 : i32
    %43 = tpu.dynamic_rotate %3 by %c17_i32 dim 1 : vector<8x256xf32>, i32 -> vector<8x256xf32>
    %c0_22 = arith.constant 0 : index
    %c0_23 = arith.constant 0 : index
    %c0_24 = arith.constant 0 : index
    %44 = vector.load %arg4[%c0_22, %c0_23, %c0_24] : memref<9x1x256xf32, #tpu.memory_space<vmem>>, vector<1x1x256xf32>
    %45 = vector.shape_cast %44 : vector<1x1x256xf32> to vector<1x256xf32>
    %46 = vector.broadcast %45 : vector<1x256xf32> to vector<8x256xf32>
    %47 = arith.mulf %43, %46 : vector<8x256xf32>
    %c0_25 = arith.constant 0 : index
    %c0_26 = arith.constant 0 : index
    %c0_27 = arith.constant 0 : index
    %48 = vector.load %arg7[%c0_25, %c0_26, %c0_27] : memref<9x128x8xf32, #tpu.memory_space<vmem>>, vector<1x128x8xf32>
    %49 = vector.shape_cast %48 : vector<1x128x8xf32> to vector<128x8xf32>
    %cst_28 = arith.constant dense<0.000000e+00> : vector<128x256xf32>
    %50 = tpu.matmul %49, %47, %cst_28 {dimension_numbers = #tpu.dot_dimension_numbers<[1], [0], [0], [1], [0, 0, 1, 1], [], []>} : vector<128x8xf32>, vector<8x256xf32>, vector<128x256xf32> -> vector<128x256xf32>
    %c16_i32 = arith.constant 16 : i32
    %51 = tpu.dynamic_rotate %3 by %c16_i32 dim 1 : vector<8x256xf32>, i32 -> vector<8x256xf32>
    %c1 = arith.constant 1 : index
    %c0_29 = arith.constant 0 : index
    %c0_30 = arith.constant 0 : index
    %52 = vector.load %arg4[%c1, %c0_29, %c0_30] : memref<9x1x256xf32, #tpu.memory_space<vmem>>, vector<1x1x256xf32>
    %53 = vector.shape_cast %52 : vector<1x1x256xf32> to vector<1x256xf32>
    %54 = vector.broadcast %53 : vector<1x256xf32> to vector<8x256xf32>
    %55 = arith.mulf %51, %54 : vector<8x256xf32>
    %c1_31 = arith.constant 1 : index
    %c0_32 = arith.constant 0 : index
    %c0_33 = arith.constant 0 : index
    %56 = vector.load %arg7[%c1_31, %c0_32, %c0_33] : memref<9x128x8xf32, #tpu.memory_space<vmem>>, vector<1x128x8xf32>
    %57 = vector.shape_cast %56 : vector<1x128x8xf32> to vector<128x8xf32>
    %cst_34 = arith.constant dense<0.000000e+00> : vector<128x256xf32>
    %58 = tpu.matmul %57, %55, %cst_34 {dimension_numbers = #tpu.dot_dimension_numbers<[1], [0], [0], [1], [0, 0, 1, 1], [], []>} : vector<128x8xf32>, vector<8x256xf32>, vector<128x256xf32> -> vector<128x256xf32>
    %59 = arith.addf %50, %58 : vector<128x256xf32>
    %c15_i32 = arith.constant 15 : i32
    %60 = tpu.dynamic_rotate %3 by %c15_i32 dim 1 : vector<8x256xf32>, i32 -> vector<8x256xf32>
    %c2 = arith.constant 2 : index
    %c0_35 = arith.constant 0 : index
    %c0_36 = arith.constant 0 : index
    %61 = vector.load %arg4[%c2, %c0_35, %c0_36] : memref<9x1x256xf32, #tpu.memory_space<vmem>>, vector<1x1x256xf32>
    %62 = vector.shape_cast %61 : vector<1x1x256xf32> to vector<1x256xf32>
    %63 = vector.broadcast %62 : vector<1x256xf32> to vector<8x256xf32>
    %64 = arith.mulf %60, %63 : vector<8x256xf32>
    %c2_37 = arith.constant 2 : index
    %c0_38 = arith.constant 0 : index
    %c0_39 = arith.constant 0 : index
    %65 = vector.load %arg7[%c2_37, %c0_38, %c0_39] : memref<9x128x8xf32, #tpu.memory_space<vmem>>, vector<1x128x8xf32>
    %66 = vector.shape_cast %65 : vector<1x128x8xf32> to vector<128x8xf32>
    %cst_40 = arith.constant dense<0.000000e+00> : vector<128x256xf32>
    %67 = tpu.matmul %66, %64, %cst_40 {dimension_numbers = #tpu.dot_dimension_numbers<[1], [0], [0], [1], [0, 0, 1, 1], [], []>} : vector<128x8xf32>, vector<8x256xf32>, vector<128x256xf32> -> vector<128x256xf32>
    %68 = arith.addf %59, %67 : vector<128x256xf32>
    %c1_i32 = arith.constant 1 : i32
    %69 = tpu.dynamic_rotate %3 by %c1_i32 dim 1 : vector<8x256xf32>, i32 -> vector<8x256xf32>
    %c3 = arith.constant 3 : index
    %c0_41 = arith.constant 0 : index
    %c0_42 = arith.constant 0 : index
    %70 = vector.load %arg4[%c3, %c0_41, %c0_42] : memref<9x1x256xf32, #tpu.memory_space<vmem>>, vector<1x1x256xf32>
    %71 = vector.shape_cast %70 : vector<1x1x256xf32> to vector<1x256xf32>
    %72 = vector.broadcast %71 : vector<1x256xf32> to vector<8x256xf32>
    %73 = arith.mulf %69, %72 : vector<8x256xf32>
    %c3_43 = arith.constant 3 : index
    %c0_44 = arith.constant 0 : index
    %c0_45 = arith.constant 0 : index
    %74 = vector.load %arg7[%c3_43, %c0_44, %c0_45] : memref<9x128x8xf32, #tpu.memory_space<vmem>>, vector<1x128x8xf32>
    %75 = vector.shape_cast %74 : vector<1x128x8xf32> to vector<128x8xf32>
    %cst_46 = arith.constant dense<0.000000e+00> : vector<128x256xf32>
    %76 = tpu.matmul %75, %73, %cst_46 {dimension_numbers = #tpu.dot_dimension_numbers<[1], [0], [0], [1], [0, 0, 1, 1], [], []>} : vector<128x8xf32>, vector<8x256xf32>, vector<128x256xf32> -> vector<128x256xf32>
    %77 = arith.addf %68, %76 : vector<128x256xf32>
    %c4 = arith.constant 4 : index
    %c0_47 = arith.constant 0 : index
    %c0_48 = arith.constant 0 : index
    %78 = vector.load %arg7[%c4, %c0_47, %c0_48] : memref<9x128x8xf32, #tpu.memory_space<vmem>>, vector<1x128x8xf32>
    %79 = vector.shape_cast %78 : vector<1x128x8xf32> to vector<128x8xf32>
    %cst_49 = arith.constant dense<0.000000e+00> : vector<128x256xf32>
    %80 = tpu.matmul %79, %3, %cst_49 {dimension_numbers = #tpu.dot_dimension_numbers<[1], [0], [0], [1], [0, 0, 1, 1], [], []>} : vector<128x8xf32>, vector<8x256xf32>, vector<128x256xf32> -> vector<128x256xf32>
    %81 = arith.addf %77, %80 : vector<128x256xf32>
    %c255_i32 = arith.constant 255 : i32
    %82 = tpu.dynamic_rotate %3 by %c255_i32 dim 1 : vector<8x256xf32>, i32 -> vector<8x256xf32>
    %c5 = arith.constant 5 : index
    %c0_50 = arith.constant 0 : index
    %c0_51 = arith.constant 0 : index
    %83 = vector.load %arg4[%c5, %c0_50, %c0_51] : memref<9x1x256xf32, #tpu.memory_space<vmem>>, vector<1x1x256xf32>
    %84 = vector.shape_cast %83 : vector<1x1x256xf32> to vector<1x256xf32>
    %85 = vector.broadcast %84 : vector<1x256xf32> to vector<8x256xf32>
    %86 = arith.mulf %82, %85 : vector<8x256xf32>
    %c5_52 = arith.constant 5 : index
    %c0_53 = arith.constant 0 : index
    %c0_54 = arith.constant 0 : index
    %87 = vector.load %arg7[%c5_52, %c0_53, %c0_54] : memref<9x128x8xf32, #tpu.memory_space<vmem>>, vector<1x128x8xf32>
    %88 = vector.shape_cast %87 : vector<1x128x8xf32> to vector<128x8xf32>
    %cst_55 = arith.constant dense<0.000000e+00> : vector<128x256xf32>
    %89 = tpu.matmul %88, %86, %cst_55 {dimension_numbers = #tpu.dot_dimension_numbers<[1], [0], [0], [1], [0, 0, 1, 1], [], []>} : vector<128x8xf32>, vector<8x256xf32>, vector<128x256xf32> -> vector<128x256xf32>
    %90 = arith.addf %81, %89 : vector<128x256xf32>
    %c241_i32 = arith.constant 241 : i32
    %91 = tpu.dynamic_rotate %3 by %c241_i32 dim 1 : vector<8x256xf32>, i32 -> vector<8x256xf32>
    %c6 = arith.constant 6 : index
    %c0_56 = arith.constant 0 : index
    %c0_57 = arith.constant 0 : index
    %92 = vector.load %arg4[%c6, %c0_56, %c0_57] : memref<9x1x256xf32, #tpu.memory_space<vmem>>, vector<1x1x256xf32>
    %93 = vector.shape_cast %92 : vector<1x1x256xf32> to vector<1x256xf32>
    %94 = vector.broadcast %93 : vector<1x256xf32> to vector<8x256xf32>
    %95 = arith.mulf %91, %94 : vector<8x256xf32>
    %c6_58 = arith.constant 6 : index
    %c0_59 = arith.constant 0 : index
    %c0_60 = arith.constant 0 : index
    %96 = vector.load %arg7[%c6_58, %c0_59, %c0_60] : memref<9x128x8xf32, #tpu.memory_space<vmem>>, vector<1x128x8xf32>
    %97 = vector.shape_cast %96 : vector<1x128x8xf32> to vector<128x8xf32>
    %cst_61 = arith.constant dense<0.000000e+00> : vector<128x256xf32>
    %98 = tpu.matmul %97, %95, %cst_61 {dimension_numbers = #tpu.dot_dimension_numbers<[1], [0], [0], [1], [0, 0, 1, 1], [], []>} : vector<128x8xf32>, vector<8x256xf32>, vector<128x256xf32> -> vector<128x256xf32>
    %99 = arith.addf %90, %98 : vector<128x256xf32>
    %c240_i32 = arith.constant 240 : i32
    %100 = tpu.dynamic_rotate %3 by %c240_i32 dim 1 : vector<8x256xf32>, i32 -> vector<8x256xf32>
    %c7 = arith.constant 7 : index
    %c0_62 = arith.constant 0 : index
    %c0_63 = arith.constant 0 : index
    %101 = vector.load %arg4[%c7, %c0_62, %c0_63] : memref<9x1x256xf32, #tpu.memory_space<vmem>>, vector<1x1x256xf32>
    %102 = vector.shape_cast %101 : vector<1x1x256xf32> to vector<1x256xf32>
    %103 = vector.broadcast %102 : vector<1x256xf32> to vector<8x256xf32>
    %104 = arith.mulf %100, %103 : vector<8x256xf32>
    %c7_64 = arith.constant 7 : index
    %c0_65 = arith.constant 0 : index
    %c0_66 = arith.constant 0 : index
    %105 = vector.load %arg7[%c7_64, %c0_65, %c0_66] : memref<9x128x8xf32, #tpu.memory_space<vmem>>, vector<1x128x8xf32>
    %106 = vector.shape_cast %105 : vector<1x128x8xf32> to vector<128x8xf32>
    %cst_67 = arith.constant dense<0.000000e+00> : vector<128x256xf32>
    %107 = tpu.matmul %106, %104, %cst_67 {dimension_numbers = #tpu.dot_dimension_numbers<[1], [0], [0], [1], [0, 0, 1, 1], [], []>} : vector<128x8xf32>, vector<8x256xf32>, vector<128x256xf32> -> vector<128x256xf32>
    %108 = arith.addf %99, %107 : vector<128x256xf32>
    %c239_i32 = arith.constant 239 : i32
    %109 = tpu.dynamic_rotate %3 by %c239_i32 dim 1 : vector<8x256xf32>, i32 -> vector<8x256xf32>
    %c8 = arith.constant 8 : index
    %c0_68 = arith.constant 0 : index
    %c0_69 = arith.constant 0 : index
    %110 = vector.load %arg4[%c8, %c0_68, %c0_69] : memref<9x1x256xf32, #tpu.memory_space<vmem>>, vector<1x1x256xf32>
    %111 = vector.shape_cast %110 : vector<1x1x256xf32> to vector<1x256xf32>
    %112 = vector.broadcast %111 : vector<1x256xf32> to vector<8x256xf32>
    %113 = arith.mulf %109, %112 : vector<8x256xf32>
    %c8_70 = arith.constant 8 : index
    %c0_71 = arith.constant 0 : index
    %c0_72 = arith.constant 0 : index
    %114 = vector.load %arg7[%c8_70, %c0_71, %c0_72] : memref<9x128x8xf32, #tpu.memory_space<vmem>>, vector<1x128x8xf32>
    %115 = vector.shape_cast %114 : vector<1x128x8xf32> to vector<128x8xf32>
    %cst_73 = arith.constant dense<0.000000e+00> : vector<128x256xf32>
    %116 = tpu.matmul %115, %113, %cst_73 {dimension_numbers = #tpu.dot_dimension_numbers<[1], [0], [0], [1], [0, 0, 1, 1], [], []>} : vector<128x8xf32>, vector<8x256xf32>, vector<128x256xf32> -> vector<128x256xf32>
    %117 = arith.addf %108, %116 : vector<128x256xf32>
    %118 = vector.broadcast %42 : vector<128x1xf32> to vector<128x256xf32>
    %119 = arith.addf %117, %118 : vector<128x256xf32>
    %cst_74 = arith.constant 0.000000e+00 : f32
    %120 = vector.broadcast %cst_74 : f32 to vector<128x256xf32>
    %121 = arith.maximumf %119, %120 : vector<128x256xf32>
    %c0_75 = arith.constant 0 : index
    %c0_76 = arith.constant 0 : index
    %122 = vector.load %arg10[%c0_75, %c0_76] : memref<8x1xf32, #tpu.memory_space<vmem>>, vector<8x1xf32>
    %c17_i32_77 = arith.constant 17 : i32
    %123 = tpu.dynamic_rotate %121 by %c17_i32_77 dim 1 : vector<128x256xf32>, i32 -> vector<128x256xf32>
    %c0_78 = arith.constant 0 : index
    %c0_79 = arith.constant 0 : index
    %c0_80 = arith.constant 0 : index
    %124 = vector.load %arg4[%c0_78, %c0_79, %c0_80] : memref<9x1x256xf32, #tpu.memory_space<vmem>>, vector<1x1x256xf32>
    %125 = vector.shape_cast %124 : vector<1x1x256xf32> to vector<1x256xf32>
    %126 = vector.broadcast %125 : vector<1x256xf32> to vector<128x256xf32>
    %127 = arith.mulf %123, %126 : vector<128x256xf32>
    %c0_81 = arith.constant 0 : index
    %c0_82 = arith.constant 0 : index
    %c0_83 = arith.constant 0 : index
    %128 = vector.load %arg9[%c0_81, %c0_82, %c0_83] : memref<9x8x128xf32, #tpu.memory_space<vmem>>, vector<1x8x128xf32>
    %129 = vector.shape_cast %128 : vector<1x8x128xf32> to vector<8x128xf32>
    %cst_84 = arith.constant dense<0.000000e+00> : vector<8x256xf32>
    %130 = tpu.matmul %129, %127, %cst_84 {dimension_numbers = #tpu.dot_dimension_numbers<[1], [0], [0], [1], [0, 0, 1, 1], [], []>} : vector<8x128xf32>, vector<128x256xf32>, vector<8x256xf32> -> vector<8x256xf32>
    %c16_i32_85 = arith.constant 16 : i32
    %131 = tpu.dynamic_rotate %121 by %c16_i32_85 dim 1 : vector<128x256xf32>, i32 -> vector<128x256xf32>
    %c1_86 = arith.constant 1 : index
    %c0_87 = arith.constant 0 : index
    %c0_88 = arith.constant 0 : index
    %132 = vector.load %arg4[%c1_86, %c0_87, %c0_88] : memref<9x1x256xf32, #tpu.memory_space<vmem>>, vector<1x1x256xf32>
    %133 = vector.shape_cast %132 : vector<1x1x256xf32> to vector<1x256xf32>
    %134 = vector.broadcast %133 : vector<1x256xf32> to vector<128x256xf32>
    %135 = arith.mulf %131, %134 : vector<128x256xf32>
    %c1_89 = arith.constant 1 : index
    %c0_90 = arith.constant 0 : index
    %c0_91 = arith.constant 0 : index
    %136 = vector.load %arg9[%c1_89, %c0_90, %c0_91] : memref<9x8x128xf32, #tpu.memory_space<vmem>>, vector<1x8x128xf32>
    %137 = vector.shape_cast %136 : vector<1x8x128xf32> to vector<8x128xf32>
    %cst_92 = arith.constant dense<0.000000e+00> : vector<8x256xf32>
    %138 = tpu.matmul %137, %135, %cst_92 {dimension_numbers = #tpu.dot_dimension_numbers<[1], [0], [0], [1], [0, 0, 1, 1], [], []>} : vector<8x128xf32>, vector<128x256xf32>, vector<8x256xf32> -> vector<8x256xf32>
    %139 = arith.addf %130, %138 : vector<8x256xf32>
    %c15_i32_93 = arith.constant 15 : i32
    %140 = tpu.dynamic_rotate %121 by %c15_i32_93 dim 1 : vector<128x256xf32>, i32 -> vector<128x256xf32>
    %c2_94 = arith.constant 2 : index
    %c0_95 = arith.constant 0 : index
    %c0_96 = arith.constant 0 : index
    %141 = vector.load %arg4[%c2_94, %c0_95, %c0_96] : memref<9x1x256xf32, #tpu.memory_space<vmem>>, vector<1x1x256xf32>
    %142 = vector.shape_cast %141 : vector<1x1x256xf32> to vector<1x256xf32>
    %143 = vector.broadcast %142 : vector<1x256xf32> to vector<128x256xf32>
    %144 = arith.mulf %140, %143 : vector<128x256xf32>
    %c2_97 = arith.constant 2 : index
    %c0_98 = arith.constant 0 : index
    %c0_99 = arith.constant 0 : index
    %145 = vector.load %arg9[%c2_97, %c0_98, %c0_99] : memref<9x8x128xf32, #tpu.memory_space<vmem>>, vector<1x8x128xf32>
    %146 = vector.shape_cast %145 : vector<1x8x128xf32> to vector<8x128xf32>
    %cst_100 = arith.constant dense<0.000000e+00> : vector<8x256xf32>
    %147 = tpu.matmul %146, %144, %cst_100 {dimension_numbers = #tpu.dot_dimension_numbers<[1], [0], [0], [1], [0, 0, 1, 1], [], []>} : vector<8x128xf32>, vector<128x256xf32>, vector<8x256xf32> -> vector<8x256xf32>
    %148 = arith.addf %139, %147 : vector<8x256xf32>
    %c1_i32_101 = arith.constant 1 : i32
    %149 = tpu.dynamic_rotate %121 by %c1_i32_101 dim 1 : vector<128x256xf32>, i32 -> vector<128x256xf32>
    %c3_102 = arith.constant 3 : index
    %c0_103 = arith.constant 0 : index
    %c0_104 = arith.constant 0 : index
    %150 = vector.load %arg4[%c3_102, %c0_103, %c0_104] : memref<9x1x256xf32, #tpu.memory_space<vmem>>, vector<1x1x256xf32>
    %151 = vector.shape_cast %150 : vector<1x1x256xf32> to vector<1x256xf32>
    %152 = vector.broadcast %151 : vector<1x256xf32> to vector<128x256xf32>
    %153 = arith.mulf %149, %152 : vector<128x256xf32>
    %c3_105 = arith.constant 3 : index
    %c0_106 = arith.constant 0 : index
    %c0_107 = arith.constant 0 : index
    %154 = vector.load %arg9[%c3_105, %c0_106, %c0_107] : memref<9x8x128xf32, #tpu.memory_space<vmem>>, vector<1x8x128xf32>
    %155 = vector.shape_cast %154 : vector<1x8x128xf32> to vector<8x128xf32>
    %cst_108 = arith.constant dense<0.000000e+00> : vector<8x256xf32>
    %156 = tpu.matmul %155, %153, %cst_108 {dimension_numbers = #tpu.dot_dimension_numbers<[1], [0], [0], [1], [0, 0, 1, 1], [], []>} : vector<8x128xf32>, vector<128x256xf32>, vector<8x256xf32> -> vector<8x256xf32>
    %157 = arith.addf %148, %156 : vector<8x256xf32>
    %c4_109 = arith.constant 4 : index
    %c0_110 = arith.constant 0 : index
    %c0_111 = arith.constant 0 : index
    %158 = vector.load %arg9[%c4_109, %c0_110, %c0_111] : memref<9x8x128xf32, #tpu.memory_space<vmem>>, vector<1x8x128xf32>
    %159 = vector.shape_cast %158 : vector<1x8x128xf32> to vector<8x128xf32>
    %cst_112 = arith.constant dense<0.000000e+00> : vector<8x256xf32>
    %160 = tpu.matmul %159, %121, %cst_112 {dimension_numbers = #tpu.dot_dimension_numbers<[1], [0], [0], [1], [0, 0, 1, 1], [], []>} : vector<8x128xf32>, vector<128x256xf32>, vector<8x256xf32> -> vector<8x256xf32>
    %161 = arith.addf %157, %160 : vector<8x256xf32>
    %c255_i32_113 = arith.constant 255 : i32
    %162 = tpu.dynamic_rotate %121 by %c255_i32_113 dim 1 : vector<128x256xf32>, i32 -> vector<128x256xf32>
    %c5_114 = arith.constant 5 : index
    %c0_115 = arith.constant 0 : index
    %c0_116 = arith.constant 0 : index
    %163 = vector.load %arg4[%c5_114, %c0_115, %c0_116] : memref<9x1x256xf32, #tpu.memory_space<vmem>>, vector<1x1x256xf32>
    %164 = vector.shape_cast %163 : vector<1x1x256xf32> to vector<1x256xf32>
    %165 = vector.broadcast %164 : vector<1x256xf32> to vector<128x256xf32>
    %166 = arith.mulf %162, %165 : vector<128x256xf32>
    %c5_117 = arith.constant 5 : index
    %c0_118 = arith.constant 0 : index
    %c0_119 = arith.constant 0 : index
    %167 = vector.load %arg9[%c5_117, %c0_118, %c0_119] : memref<9x8x128xf32, #tpu.memory_space<vmem>>, vector<1x8x128xf32>
    %168 = vector.shape_cast %167 : vector<1x8x128xf32> to vector<8x128xf32>
    %cst_120 = arith.constant dense<0.000000e+00> : vector<8x256xf32>
    %169 = tpu.matmul %168, %166, %cst_120 {dimension_numbers = #tpu.dot_dimension_numbers<[1], [0], [0], [1], [0, 0, 1, 1], [], []>} : vector<8x128xf32>, vector<128x256xf32>, vector<8x256xf32> -> vector<8x256xf32>
    %170 = arith.addf %161, %169 : vector<8x256xf32>
    %c241_i32_121 = arith.constant 241 : i32
    %171 = tpu.dynamic_rotate %121 by %c241_i32_121 dim 1 : vector<128x256xf32>, i32 -> vector<128x256xf32>
    %c6_122 = arith.constant 6 : index
    %c0_123 = arith.constant 0 : index
    %c0_124 = arith.constant 0 : index
    %172 = vector.load %arg4[%c6_122, %c0_123, %c0_124] : memref<9x1x256xf32, #tpu.memory_space<vmem>>, vector<1x1x256xf32>
    %173 = vector.shape_cast %172 : vector<1x1x256xf32> to vector<1x256xf32>
    %174 = vector.broadcast %173 : vector<1x256xf32> to vector<128x256xf32>
    %175 = arith.mulf %171, %174 : vector<128x256xf32>
    %c6_125 = arith.constant 6 : index
    %c0_126 = arith.constant 0 : index
    %c0_127 = arith.constant 0 : index
    %176 = vector.load %arg9[%c6_125, %c0_126, %c0_127] : memref<9x8x128xf32, #tpu.memory_space<vmem>>, vector<1x8x128xf32>
    %177 = vector.shape_cast %176 : vector<1x8x128xf32> to vector<8x128xf32>
    %cst_128 = arith.constant dense<0.000000e+00> : vector<8x256xf32>
    %178 = tpu.matmul %177, %175, %cst_128 {dimension_numbers = #tpu.dot_dimension_numbers<[1], [0], [0], [1], [0, 0, 1, 1], [], []>} : vector<8x128xf32>, vector<128x256xf32>, vector<8x256xf32> -> vector<8x256xf32>
    %179 = arith.addf %170, %178 : vector<8x256xf32>
    %c240_i32_129 = arith.constant 240 : i32
    %180 = tpu.dynamic_rotate %121 by %c240_i32_129 dim 1 : vector<128x256xf32>, i32 -> vector<128x256xf32>
    %c7_130 = arith.constant 7 : index
    %c0_131 = arith.constant 0 : index
    %c0_132 = arith.constant 0 : index
    %181 = vector.load %arg4[%c7_130, %c0_131, %c0_132] : memref<9x1x256xf32, #tpu.memory_space<vmem>>, vector<1x1x256xf32>
    %182 = vector.shape_cast %181 : vector<1x1x256xf32> to vector<1x256xf32>
    %183 = vector.broadcast %182 : vector<1x256xf32> to vector<128x256xf32>
    %184 = arith.mulf %180, %183 : vector<128x256xf32>
    %c7_133 = arith.constant 7 : index
    %c0_134 = arith.constant 0 : index
    %c0_135 = arith.constant 0 : index
    %185 = vector.load %arg9[%c7_133, %c0_134, %c0_135] : memref<9x8x128xf32, #tpu.memory_space<vmem>>, vector<1x8x128xf32>
    %186 = vector.shape_cast %185 : vector<1x8x128xf32> to vector<8x128xf32>
    %cst_136 = arith.constant dense<0.000000e+00> : vector<8x256xf32>
    %187 = tpu.matmul %186, %184, %cst_136 {dimension_numbers = #tpu.dot_dimension_numbers<[1], [0], [0], [1], [0, 0, 1, 1], [], []>} : vector<8x128xf32>, vector<128x256xf32>, vector<8x256xf32> -> vector<8x256xf32>
    %188 = arith.addf %179, %187 : vector<8x256xf32>
    %c239_i32_137 = arith.constant 239 : i32
    %189 = tpu.dynamic_rotate %121 by %c239_i32_137 dim 1 : vector<128x256xf32>, i32 -> vector<128x256xf32>
    %c8_138 = arith.constant 8 : index
    %c0_139 = arith.constant 0 : index
    %c0_140 = arith.constant 0 : index
    %190 = vector.load %arg4[%c8_138, %c0_139, %c0_140] : memref<9x1x256xf32, #tpu.memory_space<vmem>>, vector<1x1x256xf32>
    %191 = vector.shape_cast %190 : vector<1x1x256xf32> to vector<1x256xf32>
    %192 = vector.broadcast %191 : vector<1x256xf32> to vector<128x256xf32>
    %193 = arith.mulf %189, %192 : vector<128x256xf32>
    %c8_141 = arith.constant 8 : index
    %c0_142 = arith.constant 0 : index
    %c0_143 = arith.constant 0 : index
    %194 = vector.load %arg9[%c8_141, %c0_142, %c0_143] : memref<9x8x128xf32, #tpu.memory_space<vmem>>, vector<1x8x128xf32>
    %195 = vector.shape_cast %194 : vector<1x8x128xf32> to vector<8x128xf32>
    %cst_144 = arith.constant dense<0.000000e+00> : vector<8x256xf32>
    %196 = tpu.matmul %195, %193, %cst_144 {dimension_numbers = #tpu.dot_dimension_numbers<[1], [0], [0], [1], [0, 0, 1, 1], [], []>} : vector<8x128xf32>, vector<128x256xf32>, vector<8x256xf32> -> vector<8x256xf32>
    %197 = arith.addf %188, %196 : vector<8x256xf32>
    %198 = vector.broadcast %122 : vector<8x1xf32> to vector<8x256xf32>
    %199 = arith.addf %197, %198 : vector<8x256xf32>
    %200 = vector.extract_strided_slice %199 {offsets = [0, 0], sizes = [4, 256], strides = [1, 1]} : vector<8x256xf32> to vector<4x256xf32>
    %cst_145 = arith.constant 1.000000e+00 : f32
    %201 = vector.broadcast %cst_145 : f32 to vector<4x256xf32>
    %202 = arith.addf %201, %200 : vector<4x256xf32>
    %203 = arith.mulf %41, %202 : vector<4x256xf32>
    %204 = vector.extract_strided_slice %199 {offsets = [4, 0], sizes = [4, 256], strides = [1, 1]} : vector<8x256xf32> to vector<4x256xf32>
    %205 = arith.addf %203, %204 : vector<4x256xf32>
    %206 = arith.addf %205, %25 : vector<4x256xf32>
    %cst_146 = arith.constant 5.000000e-01 : f32
    %207 = vector.broadcast %cst_146 : f32 to vector<4x256xf32>
    %208 = arith.mulf %206, %207 : vector<4x256xf32>
    %c0_147 = arith.constant 0 : index
    %c0_148 = arith.constant 0 : index
    %c0_149 = arith.constant 0 : index
    %209 = vector.load %arg11[%c0_147, %c0_148, %c0_149] : memref<1x4x256xf32, #tpu.memory_space<vmem>>, vector<1x4x256xf32>
    %210 = vector.shape_cast %209 : vector<1x4x256xf32> to vector<4x256xf32>
    %211 = vector.shape_cast %208 : vector<4x256xf32> to vector<1x4x256xf32>
    tpu.vector_store %arg11[%c0_147, %c0_148, %c0_149], %211 {strides = array<i32>} : memref<1x4x256xf32, #tpu.memory_space<vmem>>, vector<1x4x256xf32>,
    return
  }
  func.func @transform_0(%arg0: i32) -> (i32, i32, i32) {
    %c0_i32 = arith.constant 0 : i32
    %c0_i32_0 = arith.constant 0 : i32
    %c0_i32_1 = arith.constant 0 : i32
    return %arg0, %c0_i32, %c0_i32_0 : i32, i32, i32
  }
  func.func @transform_1(%arg0: i32) -> (i32, i32, i32) {
    %c0_i32 = arith.constant 0 : i32
    %c0_i32_0 = arith.constant 0 : i32
    %c0_i32_1 = arith.constant 0 : i32
    return %arg0, %c0_i32, %c0_i32_0 : i32, i32, i32
  }
  func.func @transform_2(%arg0: i32) -> (i32, i32, i32) {
    %c0_i32 = arith.constant 0 : i32
    %c0_i32_0 = arith.constant 0 : i32
    %c0_i32_1 = arith.constant 0 : i32
    return %arg0, %c0_i32, %c0_i32_0 : i32, i32, i32
  }
  func.func @transform_3(%arg0: i32) -> (i32, i32, i32) {
    %c0_i32 = arith.constant 0 : i32
    %c0_i32_0 = arith.constant 0 : i32
    %c0_i32_1 = arith.constant 0 : i32
    %c0_i32_2 = arith.constant 0 : i32
    return %c0_i32, %c0_i32_0, %c0_i32_1 : i32, i32, i32
  }
  func.func @transform_4(%arg0: i32) -> (i32, i32) {
    %c0_i32 = arith.constant 0 : i32
    %c0_i32_0 = arith.constant 0 : i32
    %c0_i32_1 = arith.constant 0 : i32
    return %c0_i32, %c0_i32_0 : i32, i32
  }
  func.func @transform_5(%arg0: i32) -> (i32, i32) {
    %c0_i32 = arith.constant 0 : i32
    %c0_i32_0 = arith.constant 0 : i32
    %c0_i32_1 = arith.constant 0 : i32
    return %c0_i32, %c0_i32_0 : i32, i32
  }
  func.func @transform_6(%arg0: i32) -> (i32, i32, i32) {
    %c0_i32 = arith.constant 0 : i32
    %c0_i32_0 = arith.constant 0 : i32
    %c0_i32_1 = arith.constant 0 : i32
    %c0_i32_2 = arith.constant 0 : i32
    return %c0_i32, %c0_i32_0, %c0_i32_1 : i32, i32, i32
  }
  func.func @transform_7(%arg0: i32) -> (i32, i32) {
    %c0_i32 = arith.constant 0 : i32
    %c0_i32_0 = arith.constant 0 : i32
    %c0_i32_1 = arith.constant 0 : i32
    return %c0_i32, %c0_i32_0 : i32, i32
  }
  func.func @transform_8(%arg0: i32) -> (i32, i32, i32) {
    %c0_i32 = arith.constant 0 : i32
    %c0_i32_0 = arith.constant 0 : i32
    %c0_i32_1 = arith.constant 0 : i32
    %c0_i32_2 = arith.constant 0 : i32
    return %c0_i32, %c0_i32_0, %c0_i32_1 : i32, i32, i32
  }
  func.func @transform_9(%arg0: i32) -> (i32, i32) {
    %c0_i32 = arith.constant 0 : i32
    %c0_i32_0 = arith.constant 0 : i32
    %c0_i32_1 = arith.constant 0 : i32
    return %c0_i32, %c0_i32_0 : i32, i32
  }
  func.func @transform_10(%arg0: i32) -> (i32, i32, i32) {
    %c0_i32 = arith.constant 0 : i32
    %c0_i32_0 = arith.constant 0 : i32
    %c0_i32_1 = arith.constant 0 : i32
    return %arg0, %c0_i32, %c0_i32_0 : i32, i32, i32
  }
}

</mosaic_0001>

<llo_original>
// kernel: spade_style_block.1
$region0: #{spade_style_block.1}
  #allocation0 [shape = 'u32[]', space=smem, size = 0x4, offset = 0x4, fixed_abs, tag = 'smem constant byte address 0x4 - core index']
  #allocation1 [shape = 'u32[144,128]{1,0:T(1,128)}', space=vmem, size = 0x12000, scoped, tag = 'internal scratch']
  %s0 = inlined_call_operand.vmem [shape: f32[2,4,256], index: 0, kind: input, shape index: {}]
  %s1 = inlined_call_operand.vmem [shape: f32[2,8,256], index: 1, kind: input, shape index: {}]
  %s2 = inlined_call_operand.vmem [shape: f32[2,1,32], index: 2, kind: input, shape index: {}]
  %s3 = inlined_call_operand.vmem [shape: f32[9,1,256], index: 3, kind: input, shape index: {}]
  %s4 = inlined_call_operand.vmem [shape: f32[8,32], index: 4, kind: input, shape index: {}]
  %s5 = inlined_call_operand.vmem [shape: f32[8,1], index: 5, kind: input, shape index: {}]
  %s6 = inlined_call_operand.vmem [shape: f32[9,128,8], index: 6, kind: input, shape index: {}]
  %s7 = inlined_call_operand.vmem [shape: f32[128,1], index: 7, kind: input, shape index: {}]
  %s8 = inlined_call_operand.vmem [shape: f32[9,8,128], index: 8, kind: input, shape index: {}]
  %s9 = inlined_call_operand.vmem [shape: f32[8,1], index: 9, kind: input, shape index: {}]
  %s10 = inlined_call_operand.vmem [shape: f32[2,4,256], index: 10, kind: output, shape index: {}]
  %s11 = sld [smem:[#allocation0]]
  $region73: #{spade_style_block.1} parent=0
    _
  %s13 = ssub.s32 1, %s11
  %s14 = scalar_select 0, %s13, %s11
  loop: start=0, step=1, limit=4
  $region2: #{spade_style_block.1} parent=0 // loop_pre_header
    _
  $region3: #{spade_style_block.1} parent=0 // loop_header
    %s16 = sphi 0, %s20
    %p17 = scmp.ge.s32.totalorder %s16, 4
    %s26 = sphi 0, %s28
    %s29 = sphi 0, %s26
    %s30 = sphi 0, %s29
    %s46 = sphi 0, %s30
    %s52 = sphi 0, %s54
    %s55 = sphi 0, %s52
    %s56 = sphi 0, %s55
    %s72 = sphi 0, %s56
    %s78 = sphi 0, %s80
    %s81 = sphi 0, %s78
    %s82 = sphi 0, %s81
    %s98 = sphi 0, %s82
    %s102 = sphi 0, %s102
    %s104 = sphi 0, %s102
    %s105 = sphi 0, %s104
    %s119 = sphi 0, %s105
    %s123 = sphi 0, %s123
    %s125 = sphi 0, %s123
    %s126 = sphi 0, %s125
    %s140 = sphi 0, %s126
    %s144 = sphi 0, %s144
    %s146 = sphi 0, %s144
    %s147 = sphi 0, %s146
    %s161 = sphi 0, %s147
    %s165 = sphi 0, %s165
    %s167 = sphi 0, %s165
    %s168 = sphi 0, %s167
    %s182 = sphi 0, %s168
    %s186 = sphi 0, %s186
    %s188 = sphi 0, %s186
    %s189 = sphi 0, %s188
    %s203 = sphi 0, %s189
    %s207 = sphi 0, %s207
    %s209 = sphi 0, %s207
    %s210 = sphi 0, %s209
    %s224 = sphi 0, %s210
    %s228 = sphi 0, %s228
    %s230 = sphi 0, %s228
    %s231 = sphi 0, %s230
    %s245 = sphi 0, %s231
    %s251 = sphi 0, %s253
    %s254 = sphi 0, %s251
    %s255 = sphi 0, %s254
    %s271 = sphi 0, %s255
  $region4: #{spade_style_block.1} parent=0 // loop_header_branch
    %19 = sbr.rel (%p17) target = $region8
  $region5: #{spade_style_block.1} parent=0 // loop_body
    %s21 = ssub.s32 %s16, 1
    %s22 = ssub.s32 %s16, 2
    %s23 = sadd.s32 %s16, 1
    %s24 = ssub.s32 %s16, %s23
    %p25 = scmp.eq.s32.totalorder %s24, 0
    %s27 = sadd.s32 %s26, 1
    %s28 = scalar_select %p25, %s26, %s27
    %p31 = pneg %p25
    %p32 = scmp.eq.s32.totalorder %s16, 1
    %p33 = por %p31, %p32
    %p34 = scmp.ne.s32.totalorder %s26, %s29
    %p35 = scmp.eq.s32.totalorder %s16, 0
    %p36 = por %p34, %p35
    %p37 = scmp.ne.s32.totalorder %s26, %s29
    %p38 = scmp.eq.s32.totalorder %s21, 1
    %p39 = por %p37, %p38
    %p40 = scmp.ne.s32.totalorder %s29, %s30
    %p41 = scmp.eq.s32.totalorder %s21, 0
    %p42 = por %p40, %p41
    %p43 = scmp.ne.s32.totalorder %s29, %s30
    %p44 = scmp.eq.s32.totalorder %s22, 1
    %p45 = por %p43, %p44
    %p47 = scmp.ne.s32.totalorder %s30, %s46
    %p48 = scmp.eq.s32.totalorder %s22, 0
    %p49 = por %p47, %p48
    %s50 = ssub.s32 %s16, %s23
    %p51 = scmp.eq.s32.totalorder %s50, 0
    %s53 = sadd.s32 %s52, 1
    %s54 = scalar_select %p51, %s52, %s53
    %p57 = pneg %p51
    %p58 = scmp.eq.s32.totalorder %s16, 1
    %p59 = por %p57, %p58
    %p60 = scmp.ne.s32.totalorder %s52, %s55
    %p61 = scmp.eq.s32.totalorder %s16, 0
    %p62 = por %p60, %p61
    %p63 = scmp.ne.s32.totalorder %s52, %s55
    %p64 = scmp.eq.s32.totalorder %s21, 1
    %p65 = por %p63, %p64
    %p66 = scmp.ne.s32.totalorder %s55, %s56
    %p67 = scmp.eq.s32.totalorder %s21, 0
    %p68 = por %p66, %p67
    %p69 = scmp.ne.s32.totalorder %s55, %s56
    %p70 = scmp.eq.s32.totalorder %s22, 1
    %p71 = por %p69, %p70
    %p73 = scmp.ne.s32.totalorder %s56, %s72
    %p74 = scmp.eq.s32.totalorder %s22, 0
    %p75 = por %p73, %p74
    %s76 = ssub.s32 %s16, %s23
    %p77 = scmp.eq.s32.totalorder %s76, 0
    %s79 = sadd.s32 %s78, 1
    %s80 = scalar_select %p77, %s78, %s79
    %p83 = pneg %p77
    %p84 = scmp.eq.s32.totalorder %s16, 1
    %p85 = por %p83, %p84
    %p86 = scmp.ne.s32.totalorder %s78, %s81
    %p87 = scmp.eq.s32.totalorder %s16, 0
    %p88 = por %p86, %p87
    %p89 = scmp.ne.s32.totalorder %s78, %s81
    %p90 = scmp.eq.s32.totalorder %s21, 1
    %p91 = por %p89, %p90
    %p92 = scmp.ne.s32.totalorder %s81, %s82
    %p93 = scmp.eq.s32.totalorder %s21, 0
    %p94 = por %p92, %p93
    %p95 = scmp.ne.s32.totalorder %s81, %s82
    %p96 = scmp.eq.s32.totalorder %s22, 1
    %p97 = por %p95, %p96
    %p99 = scmp.ne.s32.totalorder %s82, %s98
    %p100 = scmp.eq.s32.totalorder %s22, 0
    %p101 = por %p99, %p100
    %s103 = sadd.s32 %s102, 1
    %p106 = scmp.eq.s32.totalorder %s16, 1
    %p107 = scmp.ne.s32.totalorder %s102, %s104
    %p108 = scmp.eq.s32.totalorder %s16, 0
    %p109 = por %p107, %p108
    %p110 = scmp.ne.s32.totalorder %s102, %s104
    %p111 = scmp.eq.s32.totalorder %s21, 1
    %p112 = por %p110, %p111
    %p113 = scmp.ne.s32.totalorder %s104, %s105
    %p114 = scmp.eq.s32.totalorder %s21, 0
    %p115 = por %p113, %p114
    %p116 = scmp.ne.s32.totalorder %s104, %s105
    %p117 = scmp.eq.s32.totalorder %s22, 1
    %p118 = por %p116, %p117
    %p120 = scmp.ne.s32.totalorder %s105, %s119
    %p121 = scmp.eq.s32.totalorder %s22, 0
    %p122 = por %p120, %p121
    %s124 = sadd.s32 %s123, 1
    %p127 = scmp.eq.s32.totalorder %s16, 1
    %p128 = scmp.ne.s32.totalorder %s123, %s125
    %p129 = scmp.eq.s32.totalorder %s16, 0
    %p130 = por %p128, %p129
    %p131 = scmp.ne.s32.totalorder %s123, %s125
    %p132 = scmp.eq.s32.totalorder %s21, 1
    %p133 = por %p131, %p132
    %p134 = scmp.ne.s32.totalorder %s125, %s126
    %p135 = scmp.eq.s32.totalorder %s21, 0
    %p136 = por %p134, %p135
    %p137 = scmp.ne.s32.totalorder %s125, %s126
    %p138 = scmp.eq.s32.totalorder %s22, 1
    %p139 = por %p137, %p138
    %p141 = scmp.ne.s32.totalorder %s126, %s140
    %p142 = scmp.eq.s32.totalorder %s22, 0
    %p143 = por %p141, %p142
    %s145 = sadd.s32 %s144, 1
    %p148 = scmp.eq.s32.totalorder %s16, 1
    %p149 = scmp.ne.s32.totalorder %s144, %s146
    %p150 = scmp.eq.s32.totalorder %s16, 0
    %p151 = por %p149, %p150
    %p152 = scmp.ne.s32.totalorder %s144, %s146
    %p153 = scmp.eq.s32.totalorder %s21, 1
    %p154 = por %p152, %p153
    %p155 = scmp.ne.s32.totalorder %s146, %s147
    %p156 = scmp.eq.s32.totalorder %s21, 0
    %p157 = por %p155, %p156
    %p158 = scmp.ne.s32.totalorder %s146, %s147
    %p159 = scmp.eq.s32.totalorder %s22, 1
    %p160 = por %p158, %p159
    %p162 = scmp.ne.s32.totalorder %s147, %s161
    %p163 = scmp.eq.s32.totalorder %s22, 0
    %p164 = por %p162, %p163
    %s166 = sadd.s32 %s165, 1
    %p169 = scmp.eq.s32.totalorder %s16, 1
    %p170 = scmp.ne.s32.totalorder %s165, %s167
    %p171 = scmp.eq.s32.totalorder %s16, 0
    %p172 = por %p170, %p171
    %p173 = scmp.ne.s32.totalorder %s165, %s167
    %p174 = scmp.eq.s32.totalorder %s21, 1
    %p175 = por %p173, %p174
    %p176 = scmp.ne.s32.totalorder %s167, %s168
    %p177 = scmp.eq.s32.totalorder %s21, 0
    %p178 = por %p176, %p177
    %p179 = scmp.ne.s32.totalorder %s167, %s168
    %p180 = scmp.eq.s32.totalorder %s22, 1
    %p181 = por %p179, %p180
    %p183 = scmp.ne.s32.totalorder %s168, %s182
    %p184 = scmp.eq.s32.totalorder %s22, 0
    %p185 = por %p183, %p184
    %s187 = sadd.s32 %s186, 1
    %p190 = scmp.eq.s32.totalorder %s16, 1
    %p191 = scmp.ne.s32.totalorder %s186, %s188
    %p192 = scmp.eq.s32.totalorder %s16, 0
    %p193 = por %p191, %p192
    %p194 = scmp.ne.s32.totalorder %s186, %s188
    %p195 = scmp.eq.s32.totalorder %s21, 1
    %p196 = por %p194, %p195
    %p197 = scmp.ne.s32.totalorder %s188, %s189
    %p198 = scmp.eq.s32.totalorder %s21, 0
    %p199 = por %p197, %p198
    %p200 = scmp.ne.s32.totalorder %s188, %s189
    %p201 = scmp.eq.s32.totalorder %s22, 1
    %p202 = por %p200, %p201
    %p204 = scmp.ne.s32.totalorder %s189, %s203
    %p205 = scmp.eq.s32.totalorder %s22, 0
    %p206 = por %p204, %p205
    %s208 = sadd.s32 %s207, 1
    %p211 = scmp.eq.s32.totalorder %s16, 1
    %p212 = scmp.ne.s32.totalorder %s207, %s209
    %p213 = scmp.eq.s32.totalorder %s16, 0
    %p214 = por %p212, %p213
    %p215 = scmp.ne.s32.totalorder %s207, %s209
    %p216 = scmp.eq.s32.totalorder %s21, 1
    %p217 = por %p215, %p216
    %p218 = scmp.ne.s32.totalorder %s209, %s210
    %p219 = scmp.eq.s32.totalorder %s21, 0
    %p220 = por %p218, %p219
    %p221 = scmp.ne.s32.totalorder %s209, %s210
    %p222 = scmp.eq.s32.totalorder %s22, 1
    %p223 = por %p221, %p222
    %p225 = scmp.ne.s32.totalorder %s210, %s224
    %p226 = scmp.eq.s32.totalorder %s22, 0
    %p227 = por %p225, %p226
    %s229 = sadd.s32 %s228, 1
    %p232 = scmp.eq.s32.totalorder %s16, 1
    %p233 = scmp.ne.s32.totalorder %s228, %s230
    %p234 = scmp.eq.s32.totalorder %s16, 0
    %p235 = por %p233, %p234
    %p236 = scmp.ne.s32.totalorder %s228, %s230
    %p237 = scmp.eq.s32.totalorder %s21, 1
    %p238 = por %p236, %p237
    %p239 = scmp.ne.s32.totalorder %s230, %s231
    %p240 = scmp.eq.s32.totalorder %s21, 0
    %p241 = por %p239, %p240
    %p242 = scmp.ne.s32.totalorder %s230, %s231
    %p243 = scmp.eq.s32.totalorder %s22, 1
    %p244 = por %p242, %p243
    %p246 = scmp.ne.s32.totalorder %s231, %s245
    %p247 = scmp.eq.s32.totalorder %s22, 0
    %p248 = por %p246, %p247
    %s249 = ssub.s32 %s16, %s23
    %p250 = scmp.eq.s32.totalorder %s249, 0
    %s252 = sadd.s32 %s251, 1
    %s253 = scalar_select %p250, %s251, %s252
    %p256 = pneg %p250
    %p257 = scmp.eq.s32.totalorder %s16, 1
    %p258 = por %p256, %p257
    %p259 = scmp.ne.s32.totalorder %s251, %s254
    %p260 = scmp.eq.s32.totalorder %s16, 0
    %p261 = por %p259, %p260
    %p262 = scmp.ne.s32.totalorder %s251, %s254
    %p263 = scmp.eq.s32.totalorder %s21, 1
    %p264 = por %p262, %p263
    %p265 = scmp.ne.s32.totalorder %s254, %s255
    %p266 = scmp.eq.s32.totalorder %s21, 0
    %p267 = por %p265, %p266
    %p268 = scmp.ne.s32.totalorder %s254, %s255
    %p269 = scmp.eq.s32.totalorder %s22, 1
    %p270 = por %p268, %p269
    %p272 = scmp.ne.s32.totalorder %s255, %s271
    %p273 = scmp.eq.s32.totalorder %s22, 0
    %p274 = por %p272, %p273
    %p275 = scmp.le.s32.totalorder 1, %s16
    %p276 = scmp.lt.s32.totalorder %s16, 3
    %p277 = pnand %p275, %p276
    %p278 = pneg %p277
    // Predicated region
    $region9: #{spade_style_block.1} parent=5 // pred_check
      _
    $region10: #{spade_style_block.1} parent=5 // pred_check_branch
      %280 = sbr.rel (%p277) target = $region12
    $region11: #{spade_style_block.1} parent=5 // pred_region
      %s281 = ssub.s32 %s16, 1
      // Predicated region
      $region13: #{spade_style_block.1} parent=11 // pred_check
        %p282 = pneg %p115
      $region14: #{spade_style_block.1} parent=11 // pred_check_branch
        %284 = sbr.rel (%p282) target = $region16
      $region15: #{spade_style_block.1} parent=11 // pred_region
        _
      $region16: #{spade_style_block.1} parent=11 // pred_fallthru
        _
      // Predicated region
      $region17: #{spade_style_block.1} parent=11 // pred_check
        %p285 = pneg %p136
      $region18: #{spade_style_block.1} parent=11 // pred_check_branch
        %287 = sbr.rel (%p285) target = $region20
      $region19: #{spade_style_block.1} parent=11 // pred_region
        _
      $region20: #{spade_style_block.1} parent=11 // pred_fallthru
        _
      // Predicated region
      $region21: #{spade_style_block.1} parent=11 // pred_check
        %p288 = pneg %p157
      $region22: #{spade_style_block.1} parent=11 // pred_check_branch
        %290 = sbr.rel (%p288) target = $region24
      $region23: #{spade_style_block.1} parent=11 // pred_region
        _
      $region24: #{spade_style_block.1} parent=11 // pred_fallthru
        _
      // Predicated region
      $region25: #{spade_style_block.1} parent=11 // pred_check
        %p291 = pneg %p178
      $region26: #{spade_style_block.1} parent=11 // pred_check_branch
        %293 = sbr.rel (%p291) target = $region28
      $region27: #{spade_style_block.1} parent=11 // pred_region
        _
      $region28: #{spade_style_block.1} parent=11 // pred_fallthru
        _
      // Predicated region
      $region29: #{spade_style_block.1} parent=11 // pred_check
        %p294 = pneg %p199
      $region30: #{spade_style_block.1} parent=11 // pred_check_branch
        %296 = sbr.rel (%p294) target = $region32
      $region31: #{spade_style_block.1} parent=11 // pred_region
        _
      $region32: #{spade_style_block.1} parent=11 // pred_fallthru
        _
      // Predicated region
      $region33: #{spade_style_block.1} parent=11 // pred_check
        %p297 = pneg %p220
      $region34: #{spade_style_block.1} parent=11 // pred_check_branch
        %299 = sbr.rel (%p297) target = $region36
      $region35: #{spade_style_block.1} parent=11 // pred_region
        _
      $region36: #{spade_style_block.1} parent=11 // pred_fallthru
        _
      // Predicated region
      $region37: #{spade_style_block.1} parent=11 // pred_check
        %p300 = pneg %p241
      $region38: #{spade_style_block.1} parent=11 // pred_check_branch
        %302 = sbr.rel (%p300) target = $region40
      $region39: #{spade_style_block.1} parent=11 // pred_region
        _
      $region40: #{spade_style_block.1} parent=11 // pred_fallthru
        _
    $region12: #{spade_style_block.1} parent=5 // pred_fallthru
      _
    %p303 = scmp.lt.s32.totalorder %s16, 2
    // Predicated region
    $region41: #{spade_style_block.1} parent=5 // pred_check
      %p304 = pneg %p303
    $region42: #{spade_style_block.1} parent=5 // pred_check_branch
      %306 = sbr.rel (%p304) target = $region44
    $region43: #{spade_style_block.1} parent=5 // pred_region
      // Predicated region
      $region45: #{spade_style_block.1} parent=43 // pred_check
        %p307 = pneg %p36
      $region46: #{spade_style_block.1} parent=43 // pred_check_branch
        %309 = sbr.rel (%p307) target = $region48
      $region47: #{spade_style_block.1} parent=43 // pred_region
        %p310 = scmp.lt.s32.totalorder %s16, 1
        %s311 = scalar_select %p310, %s16, 1
        %s312 = smul.addr %s311, 2
        %s313 = smul.addr %s312, 4
        %s314 = scalar_lea.vmem %s0, %s313
      $region48: #{spade_style_block.1} parent=43 // pred_fallthru
        _
      // Predicated region
      $region49: #{spade_style_block.1} parent=43 // pred_check
        %p315 = pneg %p62
      $region50: #{spade_style_block.1} parent=43 // pred_check_branch
        %317 = sbr.rel (%p315) target = $region52
      $region51: #{spade_style_block.1} parent=43 // pred_region
        %p318 = scmp.lt.s32.totalorder %s16, 1
        %s319 = scalar_select %p318, %s16, 1
        %s320 = smul.addr %s319, 2
        %s321 = smul.addr %s320, 8
        %s322 = scalar_lea.vmem %s1, %s321
      $region52: #{spade_style_block.1} parent=43 // pred_fallthru
        _
      // Predicated region
      $region53: #{spade_style_block.1} parent=43 // pred_check
        %p323 = pneg %p88
      $region54: #{spade_style_block.1} parent=43 // pred_check_branch
        %325 = sbr.rel (%p323) target = $region56
      $region55: #{spade_style_block.1} parent=43 // pred_region
        %p326 = scmp.lt.s32.totalorder %s16, 1
        %s327 = scalar_select %p326, %s16, 1
        %s328 = scalar_lea.vmem %s2, %s327
      $region56: #{spade_style_block.1} parent=43 // pred_fallthru
        _
    $region44: #{spade_style_block.1} parent=5 // pred_fallthru
      _
    %p329 = scmp.le.s32.totalorder 1, %s16
    %p330 = scmp.lt.s32.totalorder %s16, 3
    %p331 = pnand %p329, %p330
    %p332 = pneg %p331
    // Predicated region
    $region57: #{spade_style_block.1} parent=5 // pred_check
      _
    $region58: #{spade_style_block.1} parent=5 // pred_check_branch
      %334 = sbr.rel (%p331) target = $region60
    $region59: #{spade_style_block.1} parent=5 // pred_region
      %s335 = ssub.s32 %s16, 1
      %p336 = scmp.lt.s32.totalorder %s21, 1
      %s337 = scalar_select %p336, %s21, 1
      %s338 = smul.addr %s337, 2
      %s339 = smul.addr %s338, 4
      %s340 = scalar_lea.vmem %s0, %s339
      %p341 = pneg %p42
      %p342 = pneg %p39
      %p343 = scmp.lt.s32.totalorder %s21, 1
      %s344 = scalar_select %p343, %s21, 1
      %s345 = smul.addr %s344, 2
      %s346 = smul.addr %s345, 8
      %s347 = scalar_lea.vmem %s1, %s346
      %p348 = pneg %p68
      %p349 = pneg %p65
      %p350 = scmp.lt.s32.totalorder %s21, 1
      %s351 = scalar_select %p350, %s21, 1
      %s352 = scalar_lea.vmem %s2, %s351
      %p353 = pneg %p94
      %p354 = pneg %p91
      %p355 = pneg %p115
      %p356 = pneg %p112
      %p357 = pneg %p136
      %p358 = pneg %p133
      %p359 = pneg %p157
      %p360 = pneg %p154
      %p361 = pneg %p178
      %p362 = pneg %p175
      %p363 = pneg %p199
      %p364 = pneg %p196
      %p365 = pneg %p220
      %p366 = pneg %p217
      %p367 = pneg %p241
      %p368 = pneg %p238
      %p369 = pneg %p267
      %p370 = pneg %p264
      %p371 = scmp.lt.s32.totalorder %s21, 1
      %s372 = scalar_select %p371, %s21, 1
      %s373 = smul.addr %s372, 2
      %s374 = smul.addr %s373, 4
      %s375 = scalar_lea.vmem %s10, %s374
      %p376 = scmp.lt.s32.totalorder %s21, 1
      %s377 = scalar_select %p376, %s21, 1
      %s378 = smul.addr %s377, 2
      %s379 = smul.addr %s378, 4
      %s380 = scalar_lea.vmem %s0, %s379
      %p381 = scmp.lt.s32.totalorder %s21, 1
      %s382 = scalar_select %p381, %s21, 1
      %s383 = smul.addr %s382, 2
      %s384 = smul.addr %s383, 8
      %s385 = scalar_lea.vmem %s1, %s384
      %p386 = scmp.lt.s32.totalorder %s21, 1
      %s387 = scalar_select %p386, %s21, 1
      %s388 = scalar_lea.vmem %s2, %s387
      %p389 = scmp.lt.s32.totalorder %s21, 1
      %s390 = scalar_select %p389, %s21, 1
      %s391 = smul.addr %s390, 2
      %s392 = smul.addr %s391, 4
      %s393 = scalar_lea.vmem %s10, %s392
      %v394 = vld [vmem:[%s380] sm:$0xff]
      %v395 = vld [vmem:[%s385] sm:$0xff]
      %v396 = vld [vmem:[%s385 + $0x8] sm:$0xff]
      %v397 = vld [vmem:[%s4] sm:$0xff]
      %v398 = vld [vmem:[%s388] sm:$0x1]
      %v400 = vlaneseq
      %v401 = vshrl.u32 %v400, 7
      %v402 = vsub.s32 0, %v401
      %v403 = vrot.slane %v398, %v402
      %v405 = vmul.f32 %v397, %v403
      %vm406 = vcmask 261120
      %v407 = vsel %vm406, %v405, 0.0
      %408 = vadd.xlane.f32.xlu0 %v407
      %v409 = vpop.xlane.xlu0 %408
      %v410 = vld [vmem:[%s5] sm:$0xff]
      %v411 = vadd.f32 %v409, %v410
      %vm412 = vcmp.ge.f32.partialorder %v411, 0.0
      %v413 = vmul.f32 %v411, 0.2
      %v414 = vsel %vm412, %v411, %v413
      %v415 = vadd.f32 %v414, 1.0
      %417 = vset.pattern.permute.xlu0 0
      %418 = vperm.xlu0 %417, %v415
      %v419 = vpop.permute.xlu0 %418
      %v421 = vunpack.c.l.s4 839922192
      %v422 = vunpack.c.0.s8 %v421
      %v423 = vlaneseq
      %v424 = vshrl.u32 %v423, 7
      %v425 = vsub.s32 %v422, %v424
      %v426 = vrot.slane %v419, %v425
      %v428 = vmul.f32 %v394, %v426
      %430 = vset.pattern.permute.xlu0 0
      %431 = vperm.xlu0 %430, %v414
      %v432 = vpop.permute.xlu0 %431
      %v434 = vunpack.c.l.s4 1985246804
      %v435 = vunpack.c.0.s8 %v434
      %v436 = vlaneseq
      %v437 = vshrl.u32 %v436, 7
      %v438 = vsub.s32 %v435, %v437
      %v439 = vrot.slane %v432, %v438
      %v441 = vadd.f32 %v428, %v439
      %v443 = vcombine.high %v394, %v394
      %vm445 = vcmask 1043456
      %v446 = vsel %vm445, %v394, 0.0
      %v447 = vsel %vm445, %v443, 0.0
      %v448 = vadd.f32 %v446, %v447
      %449 = vadd.xlane.f32.xlu0 %v448
      %v450 = vpop.xlane.xlu0 %449
      %v451 = vmul.f32 %v450, 0.00390625
      %v454 = vunpack.c.l.s4 839922192
      %v455 = vunpack.c.0.s8 %v454
      %v456 = vlaneseq
      %v457 = vshrl.u32 %v456, 7
      %v458 = vsub.s32 %v455, %v457
      %v459 = vrot.slane %v451, %v458
      %v461 = vsub.f32 %v394, %v459
      %v462 = vmul.f32 %v461, %v461
      %v464 = vcombine.high %v462, %v462
      %v466 = vsel %vm445, %v462, 0.0
      %v467 = vsel %vm445, %v464, 0.0
      %v468 = vadd.f32 %v466, %v467
      %469 = vadd.xlane.f32.xlu0 %v468
      %v470 = vpop.xlane.xlu0 %469
      %v471 = vmul.f32 %v470, 0.00390625
      %v472 = vadd.f32 %v471, 1e-05
      %v473 = vrsqrt.pop %v472
      %v476 = vunpack.c.l.s4 839922192
      %v477 = vunpack.c.0.s8 %v476
      %v478 = vlaneseq
      %v479 = vshrl.u32 %v478, 7
      %v480 = vsub.s32 %v477, %v479
      %v481 = vrot.slane %v473, %v480
      %v483 = vmul.f32 %v461, %v481
      %v484 = vld [vmem:[%s7] sm:$0xff]
      %v485 = vld [vmem:[%s7 + $0x8] sm:$0xff]
      %v486 = vld [vmem:[%s7 + $0x10] sm:$0xff]
      %v487 = vld [vmem:[%s7 + $0x18] sm:$0xff]
      %v488 = vld [vmem:[%s7 + $0x20] sm:$0xff]
      %v489 = vld [vmem:[%s7 + $0x28] sm:$0xff]
      %v490 = vld [vmem:[%s7 + $0x30] sm:$0xff]
      %v491 = vld [vmem:[%s7 + $0x38] sm:$0xff]
      %v492 = vld [vmem:[%s7 + $0x40] sm:$0xff]
      %v493 = vld [vmem:[%s7 + $0x48] sm:$0xff]
      %v494 = vld [vmem:[%s7 + $0x50] sm:$0xff]
      %v495 = vld [vmem:[%s7 + $0x58] sm:$0xff]
      %v496 = vld [vmem:[%s7 + $0x60] sm:$0xff]
      %v497 = vld [vmem:[%s7 + $0x68] sm:$0xff]
      %v498 = vld [vmem:[%s7 + $0x70] sm:$0xff]
      %v499 = vld [vmem:[%s7 + $0x78] sm:$0xff]
      %500 = vrot.lane.b32.xlu0 %v395, 17
      %v501 = vpop.permute.xlu0 %500
      %502 = vrot.lane.b32.xlu0 %v396, 17
      %v503 = vpop.permute.xlu0 %502
      %v504 = vlaneseq
      %v505 = vand.u32 %v504, 127
      %vm506 = vcmp.lt.s32.totalorder %v505, 17
      %v507 = vsel %vm506, %v501, %v503
      %v508 = vsel %vm506, %v503, %v501
      %v509 = vld [vmem:[%s3] sm:$0x3]
      %v511 = vlaneseq
      %v512 = vshrl.u32 %v511, 7
      %v513 = vsub.s32 0, %v512
      %v514 = vrot.slane %v509, %v513
      %v515 = vlaneseq
      %v516 = vshrl.u32 %v515, 7
      %v517 = vsub.s32 1, %v516
      %v518 = vrot.slane %v509, %v517
      %v521 = vmul.f32 %v508, %v514
      %v522 = vmul.f32 %v507, %v518
      %v523 = vld [vmem:[%s6] sm:$0xff]
      %v524 = vld [vmem:[%s6 + $0x8] sm:$0xff]
      %v525 = vld [vmem:[%s6 + $0x10] sm:$0xff]
      %v526 = vld [vmem:[%s6 + $0x18] sm:$0xff]
      %v527 = vld [vmem:[%s6 + $0x20] sm:$0xff]
      %v528 = vld [vmem:[%s6 + $0x28] sm:$0xff]
      %v529 = vld [vmem:[%s6 + $0x30] sm:$0xff]
      %v530 = vld [vmem:[%s6 + $0x38] sm:$0xff]
      %v531 = vld [vmem:[%s6 + $0x40] sm:$0xff]
      %v532 = vld [vmem:[%s6 + $0x48] sm:$0xff]
      %v533 = vld [vmem:[%s6 + $0x50] sm:$0xff]
      %v534 = vld [vmem:[%s6 + $0x58] sm:$0xff]
      %v535 = vld [vmem:[%s6 + $0x60] sm:$0xff]
      %v536 = vld [vmem:[%s6 + $0x68] sm:$0xff]
      %v537 = vld [vmem:[%s6 + $0x70] sm:$0xff]
      %v538 = vld [vmem:[%s6 + $0x78] sm:$0xff]
      %539 = vrot.lane.b32.xlu0 %v395, 16
      %v540 = vpop.permute.xlu0 %539
      %541 = vrot.lane.b32.xlu0 %v396, 16
      %v542 = vpop.permute.xlu0 %541
      %vm543 = vcmp.lt.s32.totalorder %v505, 16
      %v544 = vsel %vm543, %v540, %v542
      %v545 = vsel %vm543, %v542, %v540
      %s546 = scalar_lea.vmem %s3, 2
      %v547 = vld [vmem:[%s546] sm:$0x3]
      %v549 = vlaneseq
      %v550 = vshrl.u32 %v549, 7
      %v551 = vsub.s32 0, %v550
      %v552 = vrot.slane %v547, %v551
      %v553 = vlaneseq
      %v554 = vshrl.u32 %v553, 7
      %v555 = vsub.s32 1, %v554
      %v556 = vrot.slane %v547, %v555
      %v559 = vmul.f32 %v545, %v552
      %v560 = vmul.f32 %v544, %v556
      %s561 = scalar_lea.vmem %s6, 128
      %v562 = vld [vmem:[%s561] sm:$0xff]
      %v563 = vld [vmem:[%s561 + $0x8] sm:$0xff]
      %v564 = vld [vmem:[%s561 + $0x10] sm:$0xff]
      %v565 = vld [vmem:[%s561 + $0x18] sm:$0xff]
      %v566 = vld [vmem:[%s561 + $0x20] sm:$0xff]
      %v567 = vld [vmem:[%s561 + $0x28] sm:$0xff]
      %v568 = vld [vmem:[%s561 + $0x30] sm:$0xff]
      %v569 = vld [vmem:[%s561 + $0x38] sm:$0xff]
      %v570 = vld [vmem:[%s561 + $0x40] sm:$0xff]
      %v571 = vld [vmem:[%s561 + $0x48] sm:$0xff]
      %v572 = vld [vmem:[%s561 + $0x50] sm:$0xff]
      %v573 = vld [vmem:[%s561 + $0x58] sm:$0xff]
      %v574 = vld [vmem:[%s561 + $0x60] sm:$0xff]
      %v575 = vld [vmem:[%s561 + $0x68] sm:$0xff]
      %v576 = vld [vmem:[%s561 + $0x70] sm:$0xff]
      %v577 = vld [vmem:[%s561 + $0x78] sm:$0xff]
      %vm578 = vcmask 64512
      %v580 = vsel %vm578, %v562, 0
      %v583 = vsel %vm578, %v563, 0
      %v586 = vsel %vm578, %v564, 0
      %v589 = vsel %vm578, %v565, 0
      %v592 = vsel %vm578, %v566, 0
      %v595 = vsel %vm578, %v567, 0
      %v598 = vsel %vm578, %v568, 0
      %v601 = vsel %vm578, %v569, 0
      %v604 = vsel %vm578, %v570, 0
      %v607 = vsel %vm578, %v571, 0
      %v610 = vsel %vm578, %v572, 0
      %v613 = vsel %vm578, %v573, 0
      %v616 = vsel %vm578, %v574, 0
      %v619 = vsel %vm578, %v575, 0
      %v622 = vsel %vm578, %v576, 0
      %v625 = vsel %vm578, %v577, 0
      %627 = vmatprep.subr.mxu0 %v560
      %628 = vmatpush1.msra.mxu0 %v559
      %629 = vmatprep.subr.mxu0 0.0
      %630 = vmatpush1.msra.mxu0 0.0
      %631 = vmatprep.subr.mxu0 0.0
      %632 = vmatpush1.msra.mxu0 0.0
      %633 = vmatprep.subr.mxu0 0.0
      %634 = vmatpush1.msra.mxu0 0.0
      %635 = vmatprep.subr.mxu0 0.0
      %636 = vmatpush1.msra.mxu0 0.0
      %637 = vmatprep.subr.mxu0 0.0
      %638 = vmatpush1.msra.mxu0 0.0
      %639 = vmatprep.subr.mxu0 0.0
      %640 = vmatpush1.msra.mxu0 0.0
      %641 = vmatprep.subr.mxu0 0.0
      %642 = vmatpush1.msra.mxu0 0.0
      %643 = vmatprep.subr.mxu0 0.0
      %644 = vmatpush1.msra.mxu0 0.0
      %645 = vmatprep.subr.mxu0 0.0
      %646 = vmatpush1.msra.mxu0 0.0
      %647 = vmatprep.subr.mxu0 0.0
      %648 = vmatpush1.msra.mxu0 0.0
      %649 = vmatprep.subr.mxu0 0.0
      %650 = vmatpush1.msra.mxu0 0.0
      %651 = vmatprep.subr.mxu0 0.0
      %652 = vmatpush1.msra.mxu0 0.0
      %653 = vmatprep.subr.mxu0 0.0
      %654 = vmatpush1.msra.mxu0 0.0
      %655 = vmatprep.subr.mxu0 0.0
      %656 = vmatpush1.msra.mxu0 0.0
      %657 = vmatprep.subr.mxu0 0.0
      %658 = vmatpush1.msra.mxu0 0.0
      %659 = vmatprep.subr.mxu0 0.0
      %660 = vmatpush1.msra.mxu0 0.0
      %661 = vmatprep.subr.mxu0 0.0
      %662 = vmatpush1.msra.mxu0 0.0
      %663 = vmatprep.subr.mxu0 0.0
      %664 = vmatpush1.msra.mxu0 0.0
      %665 = vmatprep.subr.mxu0 0.0
      %666 = vmatpush1.msra.mxu0 0.0
      %667 = vmatprep.subr.mxu0 0.0
      %668 = vmatpush1.msra.mxu0 0.0
      %669 = vmatprep.subr.mxu0 0.0
      %670 = vmatpush1.msra.mxu0 0.0
      %671 = vmatprep.subr.mxu0 0.0
      %672 = vmatpush1.msra.mxu0 0.0
      %673 = vmatprep.subr.mxu0 0.0
      %674 = vmatpush1.msra.mxu0 0.0
      %675 = vmatprep.subr.mxu0 0.0
      %676 = vmatpush1.msra.mxu0 0.0
      %677 = vmatprep.subr.mxu0 0.0
      %678 = vmatpush1.msra.mxu0 0.0
      %679 = vmatprep.subr.mxu0 0.0
      %680 = vmatpush1.msra.mxu0 0.0
      %681 = vmatprep.subr.mxu0 0.0
      %682 = vmatpush1.msra.mxu0 0.0
      %683 = vmatprep.subr.mxu0 0.0
      %684 = vmatpush1.msra.mxu0 0.0
      %685 = vmatprep.subr.mxu0 0.0
      %686 = vmatpush1.msra.mxu0 0.0
      %687 = vmatprep.subr.mxu0 0.0
      %688 = vmatpush1.msra.mxu0 0.0
      %689 = vmatprep.subr.mxu0 0.0
      %690 = vmatpush1.msra.mxu0 0.0
      %691 = vmatprep.mubr.f32.mxu0 0.0
      %692 = vmatmul.mubr.f32.gmra.mrb[0].mxu0 %v580
      %v693 = vpop.f32.mrb[0].mxu0
      %v694 = vadd.f32 0.0, %v693
      %v695 = vpop.f32.mrb[0].mxu0
      %v696 = vadd.f32 0.0, %v695
      %697 = vmatprep.mubr.f32.mxu0 0.0
      %698 = vmatmul.mubr.f32.gmra.mrb[0].mxu0 %v583
      %v699 = vpop.f32.mrb[0].mxu0
      %v700 = vadd.f32 0.0, %v699
      %v701 = vpop.f32.mrb[0].mxu0
      %v702 = vadd.f32 0.0, %v701
      %703 = vmatprep.mubr.f32.mxu0 0.0
      %704 = vmatmul.mubr.f32.gmra.mrb[0].mxu0 %v586
      %v705 = vpop.f32.mrb[0].mxu0
      %v706 = vadd.f32 0.0, %v705
      %v707 = vpop.f32.mrb[0].mxu0
      %v708 = vadd.f32 0.0, %v707
      %709 = vmatprep.mubr.f32.mxu0 0.0
      %710 = vmatmul.mubr.f32.gmra.mrb[0].mxu0 %v589
      %v711 = vpop.f32.mrb[0].mxu0
      %v712 = vadd.f32 0.0, %v711
      %v713 = vpop.f32.mrb[0].mxu0
      %v714 = vadd.f32 0.0, %v713
      %715 = vmatprep.mubr.f32.mxu0 0.0
      %716 = vmatmul.mubr.f32.gmra.mrb[0].mxu0 %v592
      %v717 = vpop.f32.mrb[0].mxu0
      %v718 = vadd.f32 0.0, %v717
      %v719 = vpop.f32.mrb[0].mxu0
      %v720 = vadd.f32 0.0, %v719
      %721 = vmatprep.mubr.f32.mxu0 0.0
      %722 = vmatmul.mubr.f32.gmra.mrb[0].mxu0 %v595
      %v723 = vpop.f32.mrb[0].mxu0
      %v724 = vadd.f32 0.0, %v723
      %v725 = vpop.f32.mrb[0].mxu0
      %v726 = vadd.f32 0.0, %v725
      %727 = vmatprep.mubr.f32.mxu0 0.0
      %728 = vmatmul.mubr.f32.gmra.mrb[0].mxu0 %v598
      %v729 = vpop.f32.mrb[0].mxu0
      %v730 = vadd.f32 0.0, %v729
      %v731 = vpop.f32.mrb[0].mxu0
      %v732 = vadd.f32 0.0, %v731
      %733 = vmatprep.mubr.f32.mxu0 0.0
      %734 = vmatmul.mubr.f32.gmra.mrb[0].mxu0 %v601
      %v735 = vpop.f32.mrb[0].mxu0
      %v736 = vadd.f32 0.0, %v735
      %v737 = vpop.f32.mrb[0].mxu0
      %v738 = vadd.f32 0.0, %v737
      %739 = vmatprep.mubr.f32.mxu0 0.0
      %740 = vmatmul.mubr.f32.gmra.mrb[0].mxu0 %v604
      %v741 = vpop.f32.mrb[0].mxu0
      %v742 = vadd.f32 0.0, %v741
      %v743 = vpop.f32.mrb[0].mxu0
      %v744 = vadd.f32 0.0, %v743
      %745 = vmatprep.mubr.f32.mxu0 0.0
      %746 = vmatmul.mubr.f32.gmra.mrb[0].mxu0 %v607
      %v747 = vpop.f32.mrb[0].mxu0
      %v748 = vadd.f32 0.0, %v747
      %v749 = vpop.f32.mrb[0].mxu0
      %v750 = vadd.f32 0.0, %v749
      %751 = vmatprep.mubr.f32.mxu0 0.0
      %752 = vmatmul.mubr.f32.gmra.mrb[0].mxu0 %v610
      %v753 = vpop.f32.mrb[0].mxu0
      %v754 = vadd.f32 0.0, %v753
      %v755 = vpop.f32.mrb[0].mxu0
      %v756 = vadd.f32 0.0, %v755
      %757 = vmatprep.mubr.f32.mxu0 0.0
      %758 = vmatmul.mubr.f32.gmra.mrb[0].mxu0 %v613
      %v759 = vpop.f32.mrb[0].mxu0
      %v760 = vadd.f32 0.0, %v759
      %v761 = vpop.f32.mrb[0].mxu0
      %v762 = vadd.f32 0.0, %v761
      %763 = vmatprep.mubr.f32.mxu0 0.0
      %764 = vmatmul.mubr.f32.gmra.mrb[0].mxu0 %v616
      %v765 = vpop.f32.mrb[0].mxu0
      %v766 = vadd.f32 0.0, %v765
      %v767 = vpop.f32.mrb[0].mxu0
      %v768 = vadd.f32 0.0, %v767
      %769 = vmatprep.mubr.f32.mxu0 0.0
      %770 = vmatmul.mubr.f32.gmra.mrb[0].mxu0 %v619
      %v771 = vpop.f32.mrb[0].mxu0
      %v772 = vadd.f32 0.0, %v771
      %v773 = vpop.f32.mrb[0].mxu0
      %v774 = vadd.f32 0.0, %v773
      %775 = vmatprep.mubr.f32.mxu0 0.0
      %776 = vmatmul.mubr.f32.gmra.mrb[0].mxu0 %v622
      %v777 = vpop.f32.mrb[0].mxu0
      %v778 = vadd.f32 0.0, %v777
      %v779 = vpop.f32.mrb[0].mxu0
      %v780 = vadd.f32 0.0, %v779
      %781 = vmatprep.mubr.f32.mxu0 0.0
      %782 = vmatmul.mubr.f32.gmra.mrb[0].mxu0 %v625
      %v783 = vpop.f32.mrb[0].mxu0
      %v784 = vadd.f32 0.0, %v783
      %v785 = vpop.f32.mrb[0].mxu0
      %v786 = vadd.f32 0.0, %v785
      %787 = vdwg.mxu0
      %v789 = vsel %vm578, %v523, 0
      %v792 = vsel %vm578, %v524, 0
      %v795 = vsel %vm578, %v525, 0
      %v798 = vsel %vm578, %v526, 0
      %v801 = vsel %vm578, %v527, 0
      %v804 = vsel %vm578, %v528, 0
      %v807 = vsel %vm578, %v529, 0
      %v810 = vsel %vm578, %v530, 0
      %v813 = vsel %vm578, %v531, 0
      %v816 = vsel %vm578, %v532, 0
      %v819 = vsel %vm578, %v533, 0
      %v822 = vsel %vm578, %v534, 0
      %v825 = vsel %vm578, %v535, 0
      %v828 = vsel %vm578, %v536, 0
      %v831 = vsel %vm578, %v537, 0
      %v834 = vsel %vm578, %v538, 0
      %836 = vmatprep.subr.mxu0 %v522
      %837 = vmatpush1.msra.mxu0 %v521
      %838 = vmatprep.subr.mxu0 0.0
      %839 = vmatpush1.msra.mxu0 0.0
      %840 = vmatprep.subr.mxu0 0.0
      %841 = vmatpush1.msra.mxu0 0.0
      %842 = vmatprep.subr.mxu0 0.0
      %843 = vmatpush1.msra.mxu0 0.0
      %844 = vmatprep.subr.mxu0 0.0
      %845 = vmatpush1.msra.mxu0 0.0
      %846 = vmatprep.subr.mxu0 0.0
      %847 = vmatpush1.msra.mxu0 0.0
      %848 = vmatprep.subr.mxu0 0.0
      %849 = vmatpush1.msra.mxu0 0.0
      %850 = vmatprep.subr.mxu0 0.0
      %851 = vmatpush1.msra.mxu0 0.0
      %852 = vmatprep.subr.mxu0 0.0
      %853 = vmatpush1.msra.mxu0 0.0
      %854 = vmatprep.subr.mxu0 0.0
      %855 = vmatpush1.msra.mxu0 0.0
      %856 = vmatprep.subr.mxu0 0.0
      %857 = vmatpush1.msra.mxu0 0.0
      %858 = vmatprep.subr.mxu0 0.0
      %859 = vmatpush1.msra.mxu0 0.0
      %860 = vmatprep.subr.mxu0 0.0
      %861 = vmatpush1.msra.mxu0 0.0
      %862 = vmatprep.subr.mxu0 0.0
      %863 = vmatpush1.msra.mxu0 0.0
      %864 = vmatprep.subr.mxu0 0.0
      %865 = vmatpush1.msra.mxu0 0.0
      %866 = vmatprep.subr.mxu0 0.0
      %867 = vmatpush1.msra.mxu0 0.0
      %868 = vmatprep.subr.mxu0 0.0
      %869 = vmatpush1.msra.mxu0 0.0
      %870 = vmatprep.subr.mxu0 0.0
      %871 = vmatpush1.msra.mxu0 0.0
      %872 = vmatprep.subr.mxu0 0.0
      %873 = vmatpush1.msra.mxu0 0.0
      %874 = vmatprep.subr.mxu0 0.0
      %875 = vmatpush1.msra.mxu0 0.0
      %876 = vmatprep.subr.mxu0 0.0
      %877 = vmatpush1.msra.mxu0 0.0
      %878 = vmatprep.subr.mxu0 0.0
      %879 = vmatpush1.msra.mxu0 0.0
      %880 = vmatprep.subr.mxu0 0.0
      %881 = vmatpush1.msra.mxu0 0.0
      %882 = vmatprep.subr.mxu0 0.0
      %883 = vmatpush1.msra.mxu0 0.0
      %884 = vmatprep.subr.mxu0 0.0
      %885 = vmatpush1.msra.mxu0 0.0
      %886 = vmatprep.subr.mxu0 0.0
      %887 = vmatpush1.msra.mxu0 0.0
      %888 = vmatprep.subr.mxu0 0.0
      %889 = vmatpush1.msra.mxu0 0.0
      %890 = vmatprep.subr.mxu0 0.0
      %891 = vmatpush1.msra.mxu0 0.0
      %892 = vmatprep.subr.mxu0 0.0
      %893 = vmatpush1.msra.mxu0 0.0
      %894 = vmatprep.subr.mxu0 0.0
      %895 = vmatpush1.msra.mxu0 0.0
      %896 = vmatprep.subr.mxu0 0.0
      %897 = vmatpush1.msra.mxu0 0.0
      %898 = vmatprep.subr.mxu0 0.0
      %899 = vmatpush1.msra.mxu0 0.0
      %900 = vmatprep.mubr.f32.mxu0 0.0
      %901 = vmatmul.mubr.f32.gmra.mrb[0].mxu0 %v789
      %v902 = vpop.f32.mrb[0].mxu0
      %v903 = vadd.f32 %v694, %v902
      %v904 = vpop.f32.mrb[0].mxu0
      %v905 = vadd.f32 %v696, %v904
      %906 = vmatprep.mubr.f32.mxu0 0.0
      %907 = vmatmul.mubr.f32.gmra.mrb[0].mxu0 %v792
      %v908 = vpop.f32.mrb[0].mxu0
      %v909 = vadd.f32 %v700, %v908
      %v910 = vpop.f32.mrb[0].mxu0
      %v911 = vadd.f32 %v702, %v910
      %912 = vmatprep.mubr.f32.mxu0 0.0
      %913 = vmatmul.mubr.f32.gmra.mrb[0].mxu0 %v795
      %v914 = vpop.f32.mrb[0].mxu0
      %v915 = vadd.f32 %v706, %v914
      %v916 = vpop.f32.mrb[0].mxu0
      %v917 = vadd.f32 %v708, %v916
      %918 = vmatprep.mubr.f32.mxu0 0.0
      %919 = vmatmul.mubr.f32.gmra.mrb[0].mxu0 %v798
      %v920 = vpop.f32.mrb[0].mxu0
      %v921 = vadd.f32 %v712, %v920
      %v922 = vpop.f32.mrb[0].mxu0
      %v923 = vadd.f32 %v714, %v922
      %924 = vmatprep.mubr.f32.mxu0 0.0
      %925 = vmatmul.mubr.f32.gmra.mrb[0].mxu0 %v801
      %v926 = vpop.f32.mrb[0].mxu0
      %v927 = vadd.f32 %v718, %v926
      %v928 = vpop.f32.mrb[0].mxu0
      %v929 = vadd.f32 %v720, %v928
      %930 = vmatprep.mubr.f32.mxu0 0.0
      %931 = vmatmul.mubr.f32.gmra.mrb[0].mxu0 %v804
      %v932 = vpop.f32.mrb[0].mxu0
      %v933 = vadd.f32 %v724, %v932
      %v934 = vpop.f32.mrb[0].mxu0
      %v935 = vadd.f32 %v726, %v934
      %936 = vmatprep.mubr.f32.mxu0 0.0
      %937 = vmatmul.mubr.f32.gmra.mrb[0].mxu0 %v807
      %v938 = vpop.f32.mrb[0].mxu0
      %v939 = vadd.f32 %v730, %v938
      %v940 = vpop.f32.mrb[0].mxu0
      %v941 = vadd.f32 %v732, %v940
      %942 = vmatprep.mubr.f32.mxu0 0.0
      %943 = vmatmul.mubr.f32.gmra.mrb[0].mxu0 %v810
      %v944 = vpop.f32.mrb[0].mxu0
      %v945 = vadd.f32 %v736, %v944
      %v946 = vpop.f32.mrb[0].mxu0
      %v947 = vadd.f32 %v738, %v946
      %948 = vmatprep.mubr.f32.mxu0 0.0
      %949 = vmatmul.mubr.f32.gmra.mrb[0].mxu0 %v813
      %v950 = vpop.f32.mrb[0].mxu0
      %v951 = vadd.f32 %v742, %v950
      %v952 = vpop.f32.mrb[0].mxu0
      %v953 = vadd.f32 %v744, %v952
      %954 = vmatprep.mubr.f32.mxu0 0.0
      %955 = vmatmul.mubr.f32.gmra.mrb[0].mxu0 %v816
      %v956 = vpop.f32.mrb[0].mxu0
      %v957 = vadd.f32 %v748, %v956
      %v958 = vpop.f32.mrb[0].mxu0
      %v959 = vadd.f32 %v750, %v958
      %960 = vmatprep.mubr.f32.mxu0 0.0
      %961 = vmatmul.mubr.f32.gmra.mrb[0].mxu0 %v819
      %v962 = vpop.f32.mrb[0].mxu0
      %v963 = vadd.f32 %v754, %v962
      %v964 = vpop.f32.mrb[0].mxu0
      %v965 = vadd.f32 %v756, %v964
      %966 = vmatprep.mubr.f32.mxu0 0.0
      %967 = vmatmul.mubr.f32.gmra.mrb[0].mxu0 %v822
      %v968 = vpop.f32.mrb[0].mxu0
      %v969 = vadd.f32 %v760, %v968
      %v970 = vpop.f32.mrb[0].mxu0
      %v971 = vadd.f32 %v762, %v970
      %972 = vmatprep.mubr.f32.mxu0 0.0
      %973 = vmatmul.mubr.f32.gmra.mrb[0].mxu0 %v825
      %v974 = vpop.f32.mrb[0].mxu0
      %v975 = vadd.f32 %v766, %v974
      %v976 = vpop.f32.mrb[0].mxu0
      %v977 = vadd.f32 %v768, %v976
      %978 = vmatprep.mubr.f32.mxu0 0.0
      %979 = vmatmul.mubr.f32.gmra.mrb[0].mxu0 %v828
      %v980 = vpop.f32.mrb[0].mxu0
      %v981 = vadd.f32 %v772, %v980
      %v982 = vpop.f32.mrb[0].mxu0
      %v983 = vadd.f32 %v774, %v982
      %984 = vmatprep.mubr.f32.mxu0 0.0
      %985 = vmatmul.mubr.f32.gmra.mrb[0].mxu0 %v831
      %v986 = vpop.f32.mrb[0].mxu0
      %v987 = vadd.f32 %v778, %v986
      %v988 = vpop.f32.mrb[0].mxu0
      %v989 = vadd.f32 %v780, %v988
      %990 = vmatprep.mubr.f32.mxu0 0.0
      %991 = vmatmul.mubr.f32.gmra.mrb[0].mxu0 %v834
      %v992 = vpop.f32.mrb[0].mxu0
      %v993 = vadd.f32 %v784, %v992
      %v994 = vpop.f32.mrb[0].mxu0
      %v995 = vadd.f32 %v786, %v994
      %996 = vdwg.mxu0
      %997 = vrot.lane.b32.xlu0 %v395, 15
      %v998 = vpop.permute.xlu0 %997
      %999 = vrot.lane.b32.xlu0 %v396, 15
      %v1000 = vpop.permute.xlu0 %999
      %vm1001 = vcmp.lt.s32.totalorder %v505, 15
      %v1002 = vsel %vm1001, %v998, %v1000
      %v1003 = vsel %vm1001, %v1000, %v998
      %s1004 = scalar_lea.vmem %s3, 4
      %v1005 = vld [vmem:[%s1004] sm:$0x3]
      %v1007 = vlaneseq
      %v1008 = vshrl.u32 %v1007, 7
      %v1009 = vsub.s32 0, %v1008
      %v1010 = vrot.slane %v1005, %v1009
      %v1011 = vlaneseq
      %v1012 = vshrl.u32 %v1011, 7
      %v1013 = vsub.s32 1, %v1012
      %v1014 = vrot.slane %v1005, %v1013
      %v1017 = vmul.f32 %v1003, %v1010
      %v1018 = vmul.f32 %v1002, %v1014
      %s1019 = scalar_lea.vmem %s6, 256
      %v1020 = vld [vmem:[%s1019] sm:$0xff]
      %v1021 = vld [vmem:[%s1019 + $0x8] sm:$0xff]
      %v1022 = vld [vmem:[%s1019 + $0x10] sm:$0xff]
      %v1023 = vld [vmem:[%s1019 + $0x18] sm:$0xff]
      %v1024 = vld [vmem:[%s1019 + $0x20] sm:$0xff]
      %v1025 = vld [vmem:[%s1019 + $0x28] sm:$0xff]
      %v1026 = vld [vmem:[%s1019 + $0x30] sm:$0xff]
      %v1027 = vld [vmem:[%s1019 + $0x38] sm:$0xff]
      %v1028 = vld [vmem:[%s1019 + $0x40] sm:$0xff]
      %v1029 = vld [vmem:[%s1019 + $0x48] sm:$0xff]
      %v1030 = vld [vmem:[%s1019 + $0x50] sm:$0xff]
      %v1031 = vld [vmem:[%s1019 + $0x58] sm:$0xff]
      %v1032 = vld [vmem:[%s1019 + $0x60] sm:$0xff]
      %v1033 = vld [vmem:[%s1019 + $0x68] sm:$0xff]
      %v1034 = vld [vmem:[%s1019 + $0x70] sm:$0xff]
      %v1035 = vld [vmem:[%s1019 + $0x78] sm:$0xff]
      %v1037 = vsel %vm578, %v1020, 0
      %v1040 = vsel %vm578, %v1021, 0
      %v1043 = vsel %vm578, %v1022, 0
      %v1046 = vsel %vm578, %v1023, 0
      %v1049 = vsel %vm578, %v1024, 0
      %v1052 = vsel %vm578, %v1025, 0
      %v1055 = vsel %vm578, %v1026, 0
      %v1058 = vsel %vm578, %v1027, 0
      %v1061 = vsel %vm578, %v1028, 0
      %v1064 = vsel %vm578, %v1029, 0
      %v1067 = vsel %vm578, %v1030, 0
      %v1070 = vsel %vm578, %v1031, 0
      %v1073 = vsel %vm578, %v1032, 0
      %v1076 = vsel %vm578, %v1033, 0
      %v1079 = vsel %vm578, %v1034, 0
      %v1082 = vsel %vm578, %v1035, 0
      %1084 = vmatprep.subr.mxu0 %v1018
      %1085 = vmatpush1.msra.mxu0 %v1017
      %1086 = vmatprep.subr.mxu0 0.0
      %1087 = vmatpush1.msra.mxu0 0.0
      %1088 = vmatprep.subr.mxu0 0.0
      %1089 = vmatpush1.msra.mxu0 0.0
      %1090 = vmatprep.subr.mxu0 0.0
      %1091 = vmatpush1.msra.mxu0 0.0
      %1092 = vmatprep.subr.mxu0 0.0
      %1093 = vmatpush1.msra.mxu0 0.0
      %1094 = vmatprep.subr.mxu0 0.0
      %1095 = vmatpush1.msra.mxu0 0.0
      %1096 = vmatprep.subr.mxu0 0.0
      %1097 = vmatpush1.msra.mxu0 0.0
      %1098 = vmatprep.subr.mxu0 0.0
      %1099 = vmatpush1.msra.mxu0 0.0
      %1100 = vmatprep.subr.mxu0 0.0
      %1101 = vmatpush1.msra.mxu0 0.0
      %1102 = vmatprep.subr.mxu0 0.0
      %1103 = vmatpush1.msra.mxu0 0.0
      %1104 = vmatprep.subr.mxu0 0.0
      %1105 = vmatpush1.msra.mxu0 0.0
      %1106 = vmatprep.subr.mxu0 0.0
      %1107 = vmatpush1.msra.mxu0 0.0
      %1108 = vmatprep.subr.mxu0 0.0
      %1109 = vmatpush1.msra.mxu0 0.0
      %1110 = vmatprep.subr.mxu0 0.0
      %1111 = vmatpush1.msra.mxu0 0.0
      %1112 = vmatprep.subr.mxu0 0.0
      %1113 = vmatpush1.msra.mxu0 0.0
      %1114 = vmatprep.subr.mxu0 0.0
      %1115 = vmatpush1.msra.mxu0 0.0
      %1116 = vmatprep.subr.mxu0 0.0
      %1117 = vmatpush1.msra.mxu0 0.0
      %1118 = vmatprep.subr.mxu0 0.0
      %1119 = vmatpush1.msra.mxu0 0.0
      %1120 = vmatprep.subr.mxu0 0.0
      %1121 = vmatpush1.msra.mxu0 0.0
      %1122 = vmatprep.subr.mxu0 0.0
      %1123 = vmatpush1.msra.mxu0 0.0
      %1124 = vmatprep.subr.mxu0 0.0
      %1125 = vmatpush1.msra.mxu0 0.0
      %1126 = vmatprep.subr.mxu0 0.0
      %1127 = vmatpush1.msra.mxu0 0.0
      %1128 = vmatprep.subr.mxu0 0.0
      %1129 = vmatpush1.msra.mxu0 0.0
      %1130 = vmatprep.subr.mxu0 0.0
      %1131 = vmatpush1.msra.mxu0 0.0
      %1132 = vmatprep.subr.mxu0 0.0
      %1133 = vmatpush1.msra.mxu0 0.0
      %1134 = vmatprep.subr.mxu0 0.0
      %1135 = vmatpush1.msra.mxu0 0.0
      %1136 = vmatprep.subr.mxu0 0.0
      %1137 = vmatpush1.msra.mxu0 0.0
      %1138 = vmatprep.subr.mxu0 0.0
      %1139 = vmatpush1.msra.mxu0 0.0
      %1140 = vmatprep.subr.mxu0 0.0
      %1141 = vmatpush1.msra.mxu0 0.0
      %1142 = vmatprep.subr.mxu0 0.0
      %1143 = vmatpush1.msra.mxu0 0.0
      %1144 = vmatprep.subr.mxu0 0.0
      %1145 = vmatpush1.msra.mxu0 0.0
      %1146 = vmatprep.subr.mxu0 0.0
      %1147 = vmatpush1.msra.mxu0 0.0
      %1148 = vmatprep.mubr.f32.mxu0 0.0
      %1149 = vmatmul.mubr.f32.gmra.mrb[0].mxu0 %v1037
      %v1150 = vpop.f32.mrb[0].mxu0
      %v1151 = vadd.f32 0.0, %v1150
      %v1152 = vpop.f32.mrb[0].mxu0
      %v1153 = vadd.f32 0.0, %v1152
      %1154 = vmatprep.mubr.f32.mxu0 0.0
      %1155 = vmatmul.mubr.f32.gmra.mrb[0].mxu0 %v1040
      %v1156 = vpop.f32.mrb[0].mxu0
      %v1157 = vadd.f32 0.0, %v1156
      %v1158 = vpop.f32.mrb[0].mxu0
      %v1159 = vadd.f32 0.0, %v1158
      %1160 = vmatprep.mubr.f32.mxu0 0.0
      %1161 = vmatmul.mubr.f32.gmra.mrb[0].mxu0 %v1043
      %v1162 = vpop.f32.mrb[0].mxu0
      %v1163 = vadd.f32 0.0, %v1162
      %v1164 = vpop.f32.mrb[0].mxu0
      %v1165 = vadd.f32 0.0, %v1164
      %1166 = vmatprep.mubr.f32.mxu0 0.0
      %1167 = vmatmul.mubr.f32.gmra.mrb[0].mxu0 %v1046
      %v1168 = vpop.f32.mrb[0].mxu0
      %v1169 = vadd.f32 0.0, %v1168
      %v1170 = vpop.f32.mrb[0].mxu0
      %v1171 = vadd.f32 0.0, %v1170
      %1172 = vmatprep.mubr.f32.mxu0 0.0
      %1173 = vmatmul.mubr.f32.gmra.mrb[0].mxu0 %v1049
      %v1174 = vpop.f32.mrb[0].mxu0
      %v1175 = vadd.f32 0.0, %v1174
      %v1176 = vpop.f32.mrb[0].mxu0
      %v1177 = vadd.f32 0.0, %v1176
      %1178 = vmatprep.mubr.f32.mxu0 0.0
      %1179 = vmatmul.mubr.f32.gmra.mrb[0].mxu0 %v1052
      %v1180 = vpop.f32.mrb[0].mxu0
      %v1181 = vadd.f32 0.0, %v1180
      %v1182 = vpop.f32.mrb[0].mxu0
      %v1183 = vadd.f32 0.0, %v1182
      %1184 = vmatprep.mubr.f32.mxu0 0.0
      %1185 = vmatmul.mubr.f32.gmra.mrb[0].mxu0 %v1055
      %v1186 = vpop.f32.mrb[0].mxu0
      %v1187 = vadd.f32 0.0, %v1186
      %v1188 = vpop.f32.mrb[0].mxu0
      %v1189 = vadd.f32 0.0, %v1188
      %1190 = vmatprep.mubr.f32.mxu0 0.0
      %1191 = vmatmul.mubr.f32.gmra.mrb[0].mxu0 %v1058
      %v1192 = vpop.f32.mrb[0].mxu0
      %v1193 = vadd.f32 0.0, %v1192
      %v1194 = vpop.f32.mrb[0].mxu0
      %v1195 = vadd.f32 0.0, %v1194
      %1196 = vmatprep.mubr.f32.mxu0 0.0
      %1197 = vmatmul.mubr.f32.gmra.mrb[0].mxu0 %v1061
      %v1198 = vpop.f32.mrb[0].mxu0
      %v1199 = vadd.f32 0.0, %v1198
      %v1200 = vpop.f32.mrb[0].mxu0
      %v1201 = vadd.f32 0.0, %v1200
      %1202 = vmatprep.mubr.f32.mxu0 0.0
      %1203 = vmatmul.mubr.f32.gmra.mrb[0].mxu0 %v1064
      %v1204 = vpop.f32.mrb[0].mxu0
      %v1205 = vadd.f32 0.0, %v1204
      %v1206 = vpop.f32.mrb[0].mxu0
      %v1207 = vadd.f32 0.0, %v1206
      %1208 = vmatprep.mubr.f32.mxu0 0.0
      %1209 = vmatmul.mubr.f32.gmra.mrb[0].mxu0 %v1067
      %v1210 = vpop.f32.mrb[0].mxu0
      %v1211 = vadd.f32 0.0, %v1210
      %v1212 = vpop.f32.mrb[0].mxu0
      %v1213 = vadd.f32 0.0, %v1212
      %1214 = vmatprep.mubr.f32.mxu0 0.0
      %1215 = vmatmul.mubr.f32.gmra.mrb[0].mxu0 %v1070
      %v1216 = vpop.f32.mrb[0].mxu0
      %v1217 = vadd.f32 0.0, %v1216
      %v1218 = vpop.f32.mrb[0].mxu0
      %v1219 = vadd.f32 0.0, %v1218
      %1220 = vmatprep.mubr.f32.mxu0 0.0
      %1221 = vmatmul.mubr.f32.gmra.mrb[0].mxu0 %v1073
      %v1222 = vpop.f32.mrb[0].mxu0
      %v1223 = vadd.f32 0.0, %v1222
      %v1224 = vpop.f32.mrb[0].mxu0
      %v1225 = vadd.f32 0.0, %v1224
      %1226 = vmatprep.mubr.f32.mxu0 0.0
      %1227 = vmatmul.mubr.f32.gmra.mrb[0].mxu0 %v1076
      %v1228 = vpop.f32.mrb[0].mxu0
      %v1229 = vadd.f32 0.0, %v1228
      %v1230 = vpop.f32.mrb[0].mxu0
      %v1231 = vadd.f32 0.0, %v1230
      %1232 = vmatprep.mubr.f32.mxu0 0.0
      %1233 = vmatmul.mubr.f32.gmra.mrb[0].mxu0 %v1079
      %v1234 = vpop.f32.mrb[0].mxu0
      %v1235 = vadd.f32 0.0, %v1234
      %v1236 = vpop.f32.mrb[0].mxu0
      %v1237 = vadd.f32 0.0, %v1236
      %1238 = vmatprep.mubr.f32.mxu0 0.0
      %1239 = vmatmul.mubr.f32.gmra.mrb[0].mxu0 %v1082
      %v1240 = vpop.f32.mrb[0].mxu0
      %v1241 = vadd.f32 0.0, %v1240
      %v1242 = vpop.f32.mrb[0].mxu0
      %v1243 = vadd.f32 0.0, %v1242
      %1244 = vdwg.mxu0
      %v1245 = vadd.f32 %v903, %v1151
      %v1246 = vadd.f32 %v905, %v1153
      %v1247 = vadd.f32 %v909, %v1157
      %v1248 = vadd.f32 %v911, %v1159
      %v1249 = vadd.f32 %v915, %v1163
      %v1250 = vadd.f32 %v917, %v1165
      %v1251 = vadd.f32 %v921, %v1169
      %v1252 = vadd.f32 %v923, %v1171
      %v1253 = vadd.f32 %v927, %v1175
      %v1254 = vadd.f32 %v929, %v1177
      %v1255 = vadd.f32 %v933, %v1181
      %v1256 = vadd.f32 %v935, %v1183
      %v1257 = vadd.f32 %v939, %v1187
      %v1258 = vadd.f32 %v941, %v1189
      %v1259 = vadd.f32 %v945, %v1193
      %v1260 = vadd.f32 %v947, %v1195
      %v1261 = vadd.f32 %v951, %v1199
      %v1262 = vadd.f32 %v953, %v1201
      %v1263 = vadd.f32 %v957, %v1205
      %v1264 = vadd.f32 %v959, %v1207
      %v1265 = vadd.f32 %v963, %v1211
      %v1266 = vadd.f32 %v965, %v1213
      %v1267 = vadd.f32 %v969, %v1217
      %v1268 = vadd.f32 %v971, %v1219
      %v1269 = vadd.f32 %v975, %v1223
      %v1270 = vadd.f32 %v977, %v1225
      %v1271 = vadd.f32 %v981, %v1229
      %v1272 = vadd.f32 %v983, %v1231
      %v1273 = vadd.f32 %v987, %v1235
      %v1274 = vadd.f32 %v989, %v1237
      %v1275 = vadd.f32 %v993, %v1241
      %v1276 = vadd.f32 %v995, %v1243
      %1277 = vrot.lane.b32.xlu0 %v395, 1
      %v1278 = vpop.permute.xlu0 %1277
      %1279 = vrot.lane.b32.xlu0 %v396, 1
      %v1280 = vpop.permute.xlu0 %1279
      %vm1281 = vcmp.lt.s32.totalorder %v505, 1
      %v1282 = vsel %vm1281, %v1278, %v1280
      %v1283 = vsel %vm1281, %v1280, %v1278
      %s1284 = scalar_lea.vmem %s3, 6
      %v1285 = vld [vmem:[%s1284] sm:$0x3]
      %v1287 = vlaneseq
      %v1288 = vshrl.u32 %v1287, 7
      %v1289 = vsub.s32 0, %v1288
      %v1290 = vrot.slane %v1285, %v1289
      %v1291 = vlaneseq
      %v1292 = vshrl.u32 %v1291, 7
      %v1293 = vsub.s32 1, %v1292
      %v1294 = vrot.slane %v1285, %v1293
      %v1297 = vmul.f32 %v1283, %v1290
      %v1298 = vmul.f32 %v1282, %v1294
      %s1299 = scalar_lea.vmem %s6, 384
      %v1300 = vld [vmem:[%s1299] sm:$0xff]
      %v1301 = vld [vmem:[%s1299 + $0x8] sm:$0xff]
      %v1302 = vld [vmem:[%s1299 + $0x10] sm:$0xff]
      %v1303 = vld [vmem:[%s1299 + $0x18] sm:$0xff]
      %v1304 = vld [vmem:[%s1299 + $0x20] sm:$0xff]
      %v1305 = vld [vmem:[%s1299 + $0x28] sm:$0xff]
      %v1306 = vld [vmem:[%s1299 + $0x30] sm:$0xff]
      %v1307 = vld [vmem:[%s1299 + $0x38] sm:$0xff]
      %v1308 = vld [vmem:[%s1299 + $0x40] sm:$0xff]
      %v1309 = vld [vmem:[%s1299 + $0x48] sm:$0xff]
      %v1310 = vld [vmem:[%s1299 + $0x50] sm:$0xff]
      %v1311 = vld [vmem:[%s1299 + $0x58] sm:$0xff]
      %v1312 = vld [vmem:[%s1299 + $0x60] sm:$0xff]
      %v1313 = vld [vmem:[%s1299 + $0x68] sm:$0xff]
      %v1314 = vld [vmem:[%s1299 + $0x70] sm:$0xff]
      %v1315 = vld [vmem:[%s1299 + $0x78] sm:$0xff]
      %v1317 = vsel %vm578, %v1300, 0
      %v1320 = vsel %vm578, %v1301, 0
      %v1323 = vsel %vm578, %v1302, 0
      %v1326 = vsel %vm578, %v1303, 0
      %v1329 = vsel %vm578, %v1304, 0
      %v1332 = vsel %vm578, %v1305, 0
      %v1335 = vsel %vm578, %v1306, 0
      %v1338 = vsel %vm578, %v1307, 0
      %v1341 = vsel %vm578, %v1308, 0
      %v1344 = vsel %vm578, %v1309, 0
      %v1347 = vsel %vm578, %v1310, 0
      %v1350 = vsel %vm578, %v1311, 0
      %v1353 = vsel %vm578, %v1312, 0
      %v1356 = vsel %vm578, %v1313, 0
      %v1359 = vsel %vm578, %v1314, 0
      %v1362 = vsel %vm578, %v1315, 0
      %1364 = vmatprep.subr.mxu0 %v1298
      %1365 = vmatpush1.msra.mxu0 %v1297
      %1366 = vmatprep.subr.mxu0 0.0
      %1367 = vmatpush1.msra.mxu0 0.0
      %1368 = vmatprep.subr.mxu0 0.0
      %1369 = vmatpush1.msra.mxu0 0.0
      %1370 = vmatprep.subr.mxu0 0.0
      %1371 = vmatpush1.msra.mxu0 0.0
      %1372 = vmatprep.subr.mxu0 0.0
      %1373 = vmatpush1.msra.mxu0 0.0
      %1374 = vmatprep.subr.mxu0 0.0
      %1375 = vmatpush1.msra.mxu0 0.0
      %1376 = vmatprep.subr.mxu0 0.0
      %1377 = vmatpush1.msra.mxu0 0.0
      %1378 = vmatprep.subr.mxu0 0.0
      %1379 = vmatpush1.msra.mxu0 0.0
      %1380 = vmatprep.subr.mxu0 0.0
      %1381 = vmatpush1.msra.mxu0 0.0
      %1382 = vmatprep.subr.mxu0 0.0
      %1383 = vmatpush1.msra.mxu0 0.0
      %1384 = vmatprep.subr.mxu0 0.0
      %1385 = vmatpush1.msra.mxu0 0.0
      %1386 = vmatprep.subr.mxu0 0.0
      %1387 = vmatpush1.msra.mxu0 0.0
      %1388 = vmatprep.subr.mxu0 0.0
      %1389 = vmatpush1.msra.mxu0 0.0
      %1390 = vmatprep.subr.mxu0 0.0
      %1391 = vmatpush1.msra.mxu0 0.0
      %1392 = vmatprep.subr.mxu0 0.0
      %1393 = vmatpush1.msra.mxu0 0.0
      %1394 = vmatprep.subr.mxu0 0.0
      %1395 = vmatpush1.msra.mxu0 0.0
      %1396 = vmatprep.subr.mxu0 0.0
      %1397 = vmatpush1.msra.mxu0 0.0
      %1398 = vmatprep.subr.mxu0 0.0
      %1399 = vmatpush1.msra.mxu0 0.0
      %1400 = vmatprep.subr.mxu0 0.0
      %1401 = vmatpush1.msra.mxu0 0.0
      %1402 = vmatprep.subr.mxu0 0.0
      %1403 = vmatpush1.msra.mxu0 0.0
      %1404 = vmatprep.subr.mxu0 0.0
      %1405 = vmatpush1.msra.mxu0 0.0
      %1406 = vmatprep.subr.mxu0 0.0
      %1407 = vmatpush1.msra.mxu0 0.0
      %1408 = vmatprep.subr.mxu0 0.0
      %1409 = vmatpush1.msra.mxu0 0.0
      %1410 = vmatprep.subr.mxu0 0.0
      %1411 = vmatpush1.msra.mxu0 0.0
      %1412 = vmatprep.subr.mxu0 0.0
      %1413 = vmatpush1.msra.mxu0 0.0
      %1414 = vmatprep.subr.mxu0 0.0
      %1415 = vmatpush1.msra.mxu0 0.0
      %1416 = vmatprep.subr.mxu0 0.0
      %1417 = vmatpush1.msra.mxu0 0.0
      %1418 = vmatprep.subr.mxu0 0.0
      %1419 = vmatpush1.msra.mxu0 0.0
      %1420 = vmatprep.subr.mxu0 0.0
      %1421 = vmatpush1.msra.mxu0 0.0
      %1422 = vmatprep.subr.mxu0 0.0
      %1423 = vmatpush1.msra.mxu0 0.0
      %1424 = vmatprep.subr.mxu0 0.0
      %1425 = vmatpush1.msra.mxu0 0.0
      %1426 = vmatprep.subr.mxu0 0.0
      %1427 = vmatpush1.msra.mxu0 0.0
      %1428 = vmatprep.mubr.f32.mxu0 0.0
      %1429 = vmatmul.mubr.f32.gmra.mrb[0].mxu0 %v1317
      %v1430 = vpop.f32.mrb[0].mxu0
      %v1431 = vadd.f32 0.0, %v1430
      %v1432 = vpop.f32.mrb[0].mxu0
      %v1433 = vadd.f32 0.0, %v1432
      %1434 = vmatprep.mubr.f32.mxu0 0.0
      %1435 = vmatmul.mubr.f32.gmra.mrb[0].mxu0 %v1320
      %v1436 = vpop.f32.mrb[0].mxu0
      %v1437 = vadd.f32 0.0, %v1436
      %v1438 = vpop.f32.mrb[0].mxu0
      %v1439 = vadd.f32 0.0, %v1438
      %1440 = vmatprep.mubr.f32.mxu0 0.0
      %1441 = vmatmul.mubr.f32.gmra.mrb[0].mxu0 %v1323
      %v1442 = vpop.f32.mrb[0].mxu0
      %v1443 = vadd.f32 0.0, %v1442
      %v1444 = vpop.f32.mrb[0].mxu0
      %v1445 = vadd.f32 0.0, %v1444
      %1446 = vmatprep.mubr.f32.mxu0 0.0
      %1447 = vmatmul.mubr.f32.gmra.mrb[0].mxu0 %v1326
      %v1448 = vpop.f32.mrb[0].mxu0
      %v1449 = vadd.f32 0.0, %v1448
      %v1450 = vpop.f32.mrb[0].mxu0
      %v1451 = vadd.f32 0.0, %v1450
      %1452 = vmatprep.mubr.f32.mxu0 0.0
      %1453 = vmatmul.mubr.f32.gmra.mrb[0].mxu0 %v1329
      %v1454 = vpop.f32.mrb[0].mxu0
      %v1455 = vadd.f32 0.0, %v1454
      %v1456 = vpop.f32.mrb[0].mxu0
      %v1457 = vadd.f32 0.0, %v1456
      %1458 = vmatprep.mubr.f32.mxu0 0.0
      %1459 = vmatmul.mubr.f32.gmra.mrb[0].mxu0 %v1332
      %v1460 = vpop.f32.mrb[0].mxu0
      %v1461 = vadd.f32 0.0, %v1460
      %v1462 = vpop.f32.mrb[0].mxu0
      %v1463 = vadd.f32 0.0, %v1462
      %1464 = vmatprep.mubr.f32.mxu0 0.0
      %1465 = vmatmul.mubr.f32.gmra.mrb[0].mxu0 %v1335
      %v1466 = vpop.f32.mrb[0].mxu0
      %v1467 = vadd.f32 0.0, %v1466
      %v1468 = vpop.f32.mrb[0].mxu0
      %v1469 = vadd.f32 0.0, %v1468
      %1470 = vmatprep.mubr.f32.mxu0 0.0
      %1471 = vmatmul.mubr.f32.gmra.mrb[0].mxu0 %v1338
      %v1472 = vpop.f32.mrb[0].mxu0
      %v1473 = vadd.f32 0.0, %v1472
      %v1474 = vpop.f32.mrb[0].mxu0
      %v1475 = vadd.f32 0.0, %v1474
      %1476 = vmatprep.mubr.f32.mxu0 0.0
      %1477 = vmatmul.mubr.f32.gmra.mrb[0].mxu0 %v1341
      %v1478 = vpop.f32.mrb[0].mxu0
      %v1479 = vadd.f32 0.0, %v1478
      %v1480 = vpop.f32.mrb[0].mxu0
      %v1481 = vadd.f32 0.0, %v1480
      %1482 = vmatprep.mubr.f32.mxu0 0.0
      %1483 = vmatmul.mubr.f32.gmra.mrb[0].mxu0 %v1344
      %v1484 = vpop.f32.mrb[0].mxu0
      %v1485 = vadd.f32 0.0, %v1484
      %v1486 = vpop.f32.mrb[0].mxu0
      %v1487 = vadd.f32 0.0, %v1486
      %1488 = vmatprep.mubr.f32.mxu0 0.0
      %1489 = vmatmul.mubr.f32.gmra.mrb[0].mxu0 %v1347
      %v1490 = vpop.f32.mrb[0].mxu0
      %v1491 = vadd.f32 0.0, %v1490
      %v1492 = vpop.f32.mrb[0].mxu0
      %v1493 = vadd.f32 0.0, %v1492
      %1494 = vmatprep.mubr.f32.mxu0 0.0
      %1495 = vmatmul.mubr.f32.gmra.mrb[0].mxu0 %v1350
      %v1496 = vpop.f32.mrb[0].mxu0
      %v1497 = vadd.f32 0.0, %v1496
      %v1498 = vpop.f32.mrb[0].mxu0
      %v1499 = vadd.f32 0.0, %v1498
      %1500 = vmatprep.mubr.f32.mxu0 0.0
      %1501 = vmatmul.mubr.f32.gmra.mrb[0].mxu0 %v1353
      %v1502 = vpop.f32.mrb[0].mxu0
      %v1503 = vadd.f32 0.0, %v1502
      %v1504 = vpop.f32.mrb[0].mxu0
      %v1505 = vadd.f32 0.0, %v1504
      %1506 = vmatprep.mubr.f32.mxu0 0.0
      %1507 = vmatmul.mubr.f32.gmra.mrb[0].mxu0 %v1356
      %v1508 = vpop.f32.mrb[0].mxu0
      %v1509 = vadd.f32 0.0, %v1508
      %v1510 = vpop.f32.mrb[0].mxu0
      %v1511 = vadd.f32 0.0, %v1510
      %1512 = vmatprep.mubr.f32.mxu0 0.0
      %1513 = vmatmul.mubr.f32.gmra.mrb[0].mxu0 %v1359
      %v1514 = vpop.f32.mrb[0].mxu0
      %v1515 = vadd.f32 0.0, %v1514
      %v1516 = vpop.f32.mrb[0].mxu0
      %v1517 = vadd.f32 0.0, %v1516
      %1518 = vmatprep.mubr.f32.mxu0 0.0
      %1519 = vmatmul.mubr.f32.gmra.mrb[0].mxu0 %v1362
      %v1520 = vpop.f32.mrb[0].mxu0
      %v1521 = vadd.f32 0.0, %v1520
      %v1522 = vpop.f32.mrb[0].mxu0
      %v1523 = vadd.f32 0.0, %v1522
      %1524 = vdwg.mxu0
      %v1525 = vadd.f32 %v1245, %v1431
      %v1526 = vadd.f32 %v1246, %v1433
      %v1527 = vadd.f32 %v1247, %v1437
      %v1528 = vadd.f32 %v1248, %v1439
      %v1529 = vadd.f32 %v1249, %v1443
      %v1530 = vadd.f32 %v1250, %v1445
      %v1531 = vadd.f32 %v1251, %v1449
      %v1532 = vadd.f32 %v1252, %v1451
      %v1533 = vadd.f32 %v1253, %v1455
      %v1534 = vadd.f32 %v1254, %v1457
      %v1535 = vadd.f32 %v1255, %v1461
      %v1536 = vadd.f32 %v1256, %v1463
      %v1537 = vadd.f32 %v1257, %v1467
      %v1538 = vadd.f32 %v1258, %v1469
      %v1539 = vadd.f32 %v1259, %v1473
      %v1540 = vadd.f32 %v1260, %v1475
      %v1541 = vadd.f32 %v1261, %v1479
      %v1542 = vadd.f32 %v1262, %v1481
      %v1543 = vadd.f32 %v1263, %v1485
      %v1544 = vadd.f32 %v1264, %v1487
      %v1545 = vadd.f32 %v1265, %v1491
      %v1546 = vadd.f32 %v1266, %v1493
      %v1547 = vadd.f32 %v1267, %v1497
      %v1548 = vadd.f32 %v1268, %v1499
      %v1549 = vadd.f32 %v1269, %v1503
      %v1550 = vadd.f32 %v1270, %v1505
      %v1551 = vadd.f32 %v1271, %v1509
      %v1552 = vadd.f32 %v1272, %v1511
      %v1553 = vadd.f32 %v1273, %v1515
      %v1554 = vadd.f32 %v1274, %v1517
      %v1555 = vadd.f32 %v1275, %v1521
      %v1556 = vadd.f32 %v1276, %v1523
      %s1557 = scalar_lea.vmem %s6, 512
      %v1558 = vld [vmem:[%s1557] sm:$0xff]
      %v1559 = vld [vmem:[%s1557 + $0x8] sm:$0xff]
      %v1560 = vld [vmem:[%s1557 + $0x10] sm:$0xff]
      %v1561 = vld [vmem:[%s1557 + $0x18] sm:$0xff]
      %v1562 = vld [vmem:[%s1557 + $0x20] sm:$0xff]
      %v1563 = vld [vmem:[%s1557 + $0x28] sm:$0xff]
      %v1564 = vld [vmem:[%s1557 + $0x30] sm:$0xff]
      %v1565 = vld [vmem:[%s1557 + $0x38] sm:$0xff]
      %v1566 = vld [vmem:[%s1557 + $0x40] sm:$0xff]
      %v1567 = vld [vmem:[%s1557 + $0x48] sm:$0xff]
      %v1568 = vld [vmem:[%s1557 + $0x50] sm:$0xff]
      %v1569 = vld [vmem:[%s1557 + $0x58] sm:$0xff]
      %v1570 = vld [vmem:[%s1557 + $0x60] sm:$0xff]
      %v1571 = vld [vmem:[%s1557 + $0x68] sm:$0xff]
      %v1572 = vld [vmem:[%s1557 + $0x70] sm:$0xff]
      %v1573 = vld [vmem:[%s1557 + $0x78] sm:$0xff]
      %v1575 = vsel %vm578, %v1558, 0
      %v1578 = vsel %vm578, %v1559, 0
      %v1581 = vsel %vm578, %v1560, 0
      %v1584 = vsel %vm578, %v1561, 0
      %v1587 = vsel %vm578, %v1562, 0
      %v1590 = vsel %vm578, %v1563, 0
      %v1593 = vsel %vm578, %v1564, 0
      %v1596 = vsel %vm578, %v1565, 0
      %v1599 = vsel %vm578, %v1566, 0
      %v1602 = vsel %vm578, %v1567, 0
      %v1605 = vsel %vm578, %v1568, 0
      %v1608 = vsel %vm578, %v1569, 0
      %v1611 = vsel %vm578, %v1570, 0
      %v1614 = vsel %vm578, %v1571, 0
      %v1617 = vsel %vm578, %v1572, 0
      %v1620 = vsel %vm578, %v1573, 0
      %1622 = vmatprep.subr.mxu0 %v396
      %1623 = vmatpush1.msra.mxu0 %v395
      %1624 = vmatprep.subr.mxu0 0.0
      %1625 = vmatpush1.msra.mxu0 0.0
      %1626 = vmatprep.subr.mxu0 0.0
      %1627 = vmatpush1.msra.mxu0 0.0
      %1628 = vmatprep.subr.mxu0 0.0
      %1629 = vmatpush1.msra.mxu0 0.0
      %1630 = vmatprep.subr.mxu0 0.0
      %1631 = vmatpush1.msra.mxu0 0.0
      %1632 = vmatprep.subr.mxu0 0.0
      %1633 = vmatpush1.msra.mxu0 0.0
      %1634 = vmatprep.subr.mxu0 0.0
      %1635 = vmatpush1.msra.mxu0 0.0
      %1636 = vmatprep.subr.mxu0 0.0
      %1637 = vmatpush1.msra.mxu0 0.0
      %1638 = vmatprep.subr.mxu0 0.0
      %1639 = vmatpush1.msra.mxu0 0.0
      %1640 = vmatprep.subr.mxu0 0.0
      %1641 = vmatpush1.msra.mxu0 0.0
      %1642 = vmatprep.subr.mxu0 0.0
      %1643 = vmatpush1.msra.mxu0 0.0
      %1644 = vmatprep.subr.mxu0 0.0
      %1645 = vmatpush1.msra.mxu0 0.0
      %1646 = vmatprep.subr.mxu0 0.0
      %1647 = vmatpush1.msra.mxu0 0.0
      %1648 = vmatprep.subr.mxu0 0.0
      %1649 = vmatpush1.msra.mxu0 0.0
      %1650 = vmatprep.subr.mxu0 0.0
      %1651 = vmatpush1.msra.mxu0 0.0
      %1652 = vmatprep.subr.mxu0 0.0
      %1653 = vmatpush1.msra.mxu0 0.0
      %1654 = vmatprep.subr.mxu0 0.0
      %1655 = vmatpush1.msra.mxu0 0.0
      %1656 = vmatprep.subr.mxu0 0.0
      %1657 = vmatpush1.msra.mxu0 0.0
      %1658 = vmatprep.subr.mxu0 0.0
      %1659 = vmatpush1.msra.mxu0 0.0
      %1660 = vmatprep.subr.mxu0 0.0
      %1661 = vmatpush1.msra.mxu0 0.0
      %1662 = vmatprep.subr.mxu0 0.0
      %1663 = vmatpush1.msra.mxu0 0.0
      %1664 = vmatprep.subr.mxu0 0.0
      %1665 = vmatpush1.msra.mxu0 0.0
      %1666 = vmatprep.subr.mxu0 0.0
      %1667 = vmatpush1.msra.mxu0 0.0
      %1668 = vmatprep.subr.mxu0 0.0
      %1669 = vmatpush1.msra.mxu0 0.0
      %1670 = vmatprep.subr.mxu0 0.0
      %1671 = vmatpush1.msra.mxu0 0.0
      %1672 = vmatprep.subr.mxu0 0.0
      %1673 = vmatpush1.msra.mxu0 0.0
      %1674 = vmatprep.subr.mxu0 0.0
      %1675 = vmatpush1.msra.mxu0 0.0
      %1676 = vmatprep.subr.mxu0 0.0
      %1677 = vmatpush1.msra.mxu0 0.0
      %1678 = vmatprep.subr.mxu0 0.0
      %1679 = vmatpush1.msra.mxu0 0.0
      %1680 = vmatprep.subr.mxu0 0.0
      %1681 = vmatpush1.msra.mxu0 0.0
      %1682 = vmatprep.subr.mxu0 0.0
      %1683 = vmatpush1.msra.mxu0 0.0
      %1684 = vmatprep.subr.mxu0 0.0
      %1685 = vmatpush1.msra.mxu0 0.0
      %1686 = vmatprep.mubr.f32.mxu0 0.0
      %1687 = vmatmul.mubr.f32.gmra.mrb[0].mxu0 %v1575
      %v1688 = vpop.f32.mrb[0].mxu0
      %v1689 = vadd.f32 0.0, %v1688
      %v1690 = vpop.f32.mrb[0].mxu0
      %v1691 = vadd.f32 0.0, %v1690
      %1692 = vmatprep.mubr.f32.mxu0 0.0
      %1693 = vmatmul.mubr.f32.gmra.mrb[0].mxu0 %v1578
      %v1694 = vpop.f32.mrb[0].mxu0
      %v1695 = vadd.f32 0.0, %v1694
      %v1696 = vpop.f32.mrb[0].mxu0
      %v1697 = vadd.f32 0.0, %v1696
      %1698 = vmatprep.mubr.f32.mxu0 0.0
      %1699 = vmatmul.mubr.f32.gmra.mrb[0].mxu0 %v1581
      %v1700 = vpop.f32.mrb[0].mxu0
      %v1701 = vadd.f32 0.0, %v1700
      %v1702 = vpop.f32.mrb[0].mxu0
      %v1703 = vadd.f32 0.0, %v1702
      %1704 = vmatprep.mubr.f32.mxu0 0.0
      %1705 = vmatmul.mubr.f32.gmra.mrb[0].mxu0 %v1584
      %v1706 = vpop.f32.mrb[0].mxu0
      %v1707 = vadd.f32 0.0, %v1706
      %v1708 = vpop.f32.mrb[0].mxu0
      %v1709 = vadd.f32 0.0, %v1708
      %1710 = vmatprep.mubr.f32.mxu0 0.0
      %1711 = vmatmul.mubr.f32.gmra.mrb[0].mxu0 %v1587
      %v1712 = vpop.f32.mrb[0].mxu0
      %v1713 = vadd.f32 0.0, %v1712
      %v1714 = vpop.f32.mrb[0].mxu0
      %v1715 = vadd.f32 0.0, %v1714
      %1716 = vmatprep.mubr.f32.mxu0 0.0
      %1717 = vmatmul.mubr.f32.gmra.mrb[0].mxu0 %v1590
      %v1718 = vpop.f32.mrb[0].mxu0
      %v1719 = vadd.f32 0.0, %v1718
      %v1720 = vpop.f32.mrb[0].mxu0
      %v1721 = vadd.f32 0.0, %v1720
      %1722 = vmatprep.mubr.f32.mxu0 0.0
      %1723 = vmatmul.mubr.f32.gmra.mrb[0].mxu0 %v1593
      %v1724 = vpop.f32.mrb[0].mxu0
      %v1725 = vadd.f32 0.0, %v1724
      %v1726 = vpop.f32.mrb[0].mxu0
      %v1727 = vadd.f32 0.0, %v1726
      %1728 = vmatprep.mubr.f32.mxu0 0.0
      %1729 = vmatmul.mubr.f32.gmra.mrb[0].mxu0 %v1596
      %v1730 = vpop.f32.mrb[0].mxu0
      %v1731 = vadd.f32 0.0, %v1730
      %v1732 = vpop.f32.mrb[0].mxu0
      %v1733 = vadd.f32 0.0, %v1732
      %1734 = vmatprep.mubr.f32.mxu0 0.0
      %1735 = vmatmul.mubr.f32.gmra.mrb[0].mxu0 %v1599
      %v1736 = vpop.f32.mrb[0].mxu0
      %v1737 = vadd.f32 0.0, %v1736
      %v1738 = vpop.f32.mrb[0].mxu0
      %v1739 = vadd.f32 0.0, %v1738
      %1740 = vmatprep.mubr.f32.mxu0 0.0
      %1741 = vmatmul.mubr.f32.gmra.mrb[0].mxu0 %v1602
      %v1742 = vpop.f32.mrb[0].mxu0
      %v1743 = vadd.f32 0.0, %v1742
      %v1744 = vpop.f32.mrb[0].mxu0
      %v1745 = vadd.f32 0.0, %v1744
      %1746 = vmatprep.mubr.f32.mxu0 0.0
      %1747 = vmatmul.mubr.f32.gmra.mrb[0].mxu0 %v1605
      %v1748 = vpop.f32.mrb[0].mxu0
      %v1749 = vadd.f32 0.0, %v1748
      %v1750 = vpop.f32.mrb[0].mxu0
      %v1751 = vadd.f32 0.0, %v1750
      %1752 = vmatprep.mubr.f32.mxu0 0.0
      %1753 = vmatmul.mubr.f32.gmra.mrb[0].mxu0 %v1608
      %v1754 = vpop.f32.mrb[0].mxu0
      %v1755 = vadd.f32 0.0, %v1754
      %v1756 = vpop.f32.mrb[0].mxu0
      %v1757 = vadd.f32 0.0, %v1756
      %1758 = vmatprep.mubr.f32.mxu0 0.0
      %1759 = vmatmul.mubr.f32.gmra.mrb[0].mxu0 %v1611
      %v1760 = vpop.f32.mrb[0].mxu0
      %v1761 = vadd.f32 0.0, %v1760
      %v1762 = vpop.f32.mrb[0].mxu0
      %v1763 = vadd.f32 0.0, %v1762
      %1764 = vmatprep.mubr.f32.mxu0 0.0
      %1765 = vmatmul.mubr.f32.gmra.mrb[0].mxu0 %v1614
      %v1766 = vpop.f32.mrb[0].mxu0
      %v1767 = vadd.f32 0.0, %v1766
      %v1768 = vpop.f32.mrb[0].mxu0
      %v1769 = vadd.f32 0.0, %v1768
      %1770 = vmatprep.mubr.f32.mxu0 0.0
      %1771 = vmatmul.mubr.f32.gmra.mrb[0].mxu0 %v1617
      %v1772 = vpop.f32.mrb[0].mxu0
      %v1773 = vadd.f32 0.0, %v1772
      %v1774 = vpop.f32.mrb[0].mxu0
      %v1775 = vadd.f32 0.0, %v1774
      %1776 = vmatprep.mubr.f32.mxu0 0.0
      %1777 = vmatmul.mubr.f32.gmra.mrb[0].mxu0 %v1620
      %v1778 = vpop.f32.mrb[0].mxu0
      %v1779 = vadd.f32 0.0, %v1778
      %v1780 = vpop.f32.mrb[0].mxu0
      %v1781 = vadd.f32 0.0, %v1780
      %1782 = vdwg.mxu0
      %v1783 = vadd.f32 %v1525, %v1689
      %v1784 = vadd.f32 %v1526, %v1691
      %v1785 = vadd.f32 %v1527, %v1695
      %v1786 = vadd.f32 %v1528, %v1697
      %v1787 = vadd.f32 %v1529, %v1701
      %v1788 = vadd.f32 %v1530, %v1703
      %v1789 = vadd.f32 %v1531, %v1707
      %v1790 = vadd.f32 %v1532, %v1709
      %v1791 = vadd.f32 %v1533, %v1713
      %v1792 = vadd.f32 %v1534, %v1715
      %v1793 = vadd.f32 %v1535, %v1719
      %v1794 = vadd.f32 %v1536, %v1721
      %v1795 = vadd.f32 %v1537, %v1725
      %v1796 = vadd.f32 %v1538, %v1727
      %v1797 = vadd.f32 %v1539, %v1731
      %v1798 = vadd.f32 %v1540, %v1733
      %v1799 = vadd.f32 %v1541, %v1737
      %v1800 = vadd.f32 %v1542, %v1739
      %v1801 = vadd.f32 %v1543, %v1743
      %v1802 = vadd.f32 %v1544, %v1745
      %v1803 = vadd.f32 %v1545, %v1749
      %v1804 = vadd.f32 %v1546, %v1751
      %v1805 = vadd.f32 %v1547, %v1755
      %v1806 = vadd.f32 %v1548, %v1757
      %v1807 = vadd.f32 %v1549, %v1761
      %v1808 = vadd.f32 %v1550, %v1763
      %v1809 = vadd.f32 %v1551, %v1767
      %v1810 = vadd.f32 %v1552, %v1769
      %v1811 = vadd.f32 %v1553, %v1773
      %v1812 = vadd.f32 %v1554, %v1775
      %v1813 = vadd.f32 %v1555, %v1779
      %v1814 = vadd.f32 %v1556, %v1781
      %1815 = vrot.lane.b32.xlu0 %v395, 127
      %v1816 = vpop.permute.xlu0 %1815
      %1817 = vrot.lane.b32.xlu0 %v396, 127
      %v1818 = vpop.permute.xlu0 %1817
      %vm1819 = vcmp.lt.s32.totalorder %v505, 127
      %v1820 = vsel %vm1819, %v1816, %v1818
      %v1821 = vsel %vm1819, %v1818, %v1816
      %s1822 = scalar_lea.vmem %s3, 10
      %v1823 = vld [vmem:[%s1822] sm:$0x3]
      %v1825 = vlaneseq
      %v1826 = vshrl.u32 %v1825, 7
      %v1827 = vsub.s32 0, %v1826
      %v1828 = vrot.slane %v1823, %v1827
      %v1829 = vlaneseq
      %v1830 = vshrl.u32 %v1829, 7
      %v1831 = vsub.s32 1, %v1830
      %v1832 = vrot.slane %v1823, %v1831
      %v1835 = vmul.f32 %v1820, %v1828
      %v1836 = vmul.f32 %v1821, %v1832
      %s1837 = scalar_lea.vmem %s6, 640
      %v1838 = vld [vmem:[%s1837] sm:$0xff]
      %v1839 = vld [vmem:[%s1837 + $0x8] sm:$0xff]
      %v1840 = vld [vmem:[%s1837 + $0x10] sm:$0xff]
      %v1841 = vld [vmem:[%s1837 + $0x18] sm:$0xff]
      %v1842 = vld [vmem:[%s1837 + $0x20] sm:$0xff]
      %v1843 = vld [vmem:[%s1837 + $0x28] sm:$0xff]
      %v1844 = vld [vmem:[%s1837 + $0x30] sm:$0xff]
      %v1845 = vld [vmem:[%s1837 + $0x38] sm:$0xff]
      %v1846 = vld [vmem:[%s1837 + $0x40] sm:$0xff]
      %v1847 = vld [vmem:[%s1837 + $0x48] sm:$0xff]
      %v1848 = vld [vmem:[%s1837 + $0x50] sm:$0xff]
      %v1849 = vld [vmem:[%s1837 + $0x58] sm:$0xff]
      %v1850 = vld [vmem:[%s1837 + $0x60] sm:$0xff]
      %v1851 = vld [vmem:[%s1837 + $0x68] sm:$0xff]
      %v1852 = vld [vmem:[%s1837 + $0x70] sm:$0xff]
      %v1853 = vld [vmem:[%s1837 + $0x78] sm:$0xff]
      %v1855 = vsel %vm578, %v1838, 0
      %v1858 = vsel %vm578, %v1839, 0
      %v1861 = vsel %vm578, %v1840, 0
      %v1864 = vsel %vm578, %v1841, 0
      %v1867 = vsel %vm578, %v1842, 0
      %v1870 = vsel %vm578, %v1843, 0
      %v1873 = vsel %vm578, %v1844, 0
      %v1876 = vsel %vm578, %v1845, 0
      %v1879 = vsel %vm578, %v1846, 0
      %v1882 = vsel %vm578, %v1847, 0
      %v1885 = vsel %vm578, %v1848, 0
      %v1888 = vsel %vm578, %v1849, 0
      %v1891 = vsel %vm578, %v1850, 0
      %v1894 = vsel %vm578, %v1851, 0
      %v1897 = vsel %vm578, %v1852, 0
      %v1900 = vsel %vm578, %v1853, 0
      %1902 = vmatprep.subr.mxu0 %v1836
      %1903 = vmatpush1.msra.mxu0 %v1835
      %1904 = vmatprep.subr.mxu0 0.0
      %1905 = vmatpush1.msra.mxu0 0.0
      %1906 = vmatprep.subr.mxu0 0.0
      %1907 = vmatpush1.msra.mxu0 0.0
      %1908 = vmatprep.subr.mxu0 0.0
      %1909 = vmatpush1.msra.mxu0 0.0
      %1910 = vmatprep.subr.mxu0 0.0
      %1911 = vmatpush1.msra.mxu0 0.0
      %1912 = vmatprep.subr.mxu0 0.0
      %1913 = vmatpush1.msra.mxu0 0.0
      %1914 = vmatprep.subr.mxu0 0.0
      %1915 = vmatpush1.msra.mxu0 0.0
      %1916 = vmatprep.subr.mxu0 0.0
      %1917 = vmatpush1.msra.mxu0 0.0
      %1918 = vmatprep.subr.mxu0 0.0
      %1919 = vmatpush1.msra.mxu0 0.0
      %1920 = vmatprep.subr.mxu0 0.0
      %1921 = vmatpush1.msra.mxu0 0.0
      %1922 = vmatprep.subr.mxu0 0.0
      %1923 = vmatpush1.msra.mxu0 0.0
      %1924 = vmatprep.subr.mxu0 0.0
      %1925 = vmatpush1.msra.mxu0 0.0
      %1926 = vmatprep.subr.mxu0 0.0
      %1927 = vmatpush1.msra.mxu0 0.0
      %1928 = vmatprep.subr.mxu0 0.0
      %1929 = vmatpush1.msra.mxu0 0.0
      %1930 = vmatprep.subr.mxu0 0.0
      %1931 = vmatpush1.msra.mxu0 0.0
      %1932 = vmatprep.subr.mxu0 0.0
      %1933 = vmatpush1.msra.mxu0 0.0
      %1934 = vmatprep.subr.mxu0 0.0
      %1935 = vmatpush1.msra.mxu0 0.0
      %1936 = vmatprep.subr.mxu0 0.0
      %1937 = vmatpush1.msra.mxu0 0.0
      %1938 = vmatprep.subr.mxu0 0.0
      %1939 = vmatpush1.msra.mxu0 0.0
      %1940 = vmatprep.subr.mxu0 0.0
      %1941 = vmatpush1.msra.mxu0 0.0
      %1942 = vmatprep.subr.mxu0 0.0
      %1943 = vmatpush1.msra.mxu0 0.0
      %1944 = vmatprep.subr.mxu0 0.0
      %1945 = vmatpush1.msra.mxu0 0.0
      %1946 = vmatprep.subr.mxu0 0.0
      %1947 = vmatpush1.msra.mxu0 0.0
      %1948 = vmatprep.subr.mxu0 0.0
      %1949 = vmatpush1.msra.mxu0 0.0
      %1950 = vmatprep.subr.mxu0 0.0
      %1951 = vmatpush1.msra.mxu0 0.0
      %1952 = vmatprep.subr.mxu0 0.0
      %1953 = vmatpush1.msra.mxu0 0.0
      %1954 = vmatprep.subr.mxu0 0.0
      %1955 = vmatpush1.msra.mxu0 0.0
      %1956 = vmatprep.subr.mxu0 0.0
      %1957 = vmatpush1.msra.mxu0 0.0
      %1958 = vmatprep.subr.mxu0 0.0
      %1959 = vmatpush1.msra.mxu0 0.0
      %1960 = vmatprep.subr.mxu0 0.0
      %1961 = vmatpush1.msra.mxu0 0.0
      %1962 = vmatprep.subr.mxu0 0.0
      %1963 = vmatpush1.msra.mxu0 0.0
      %1964 = vmatprep.subr.mxu0 0.0
      %1965 = vmatpush1.msra.mxu0 0.0
      %1966 = vmatprep.mubr.f32.mxu0 0.0
      %1967 = vmatmul.mubr.f32.gmra.mrb[0].mxu0 %v1855
      %v1968 = vpop.f32.mrb[0].mxu0
      %v1969 = vadd.f32 0.0, %v1968
      %v1970 = vpop.f32.mrb[0].mxu0
      %v1971 = vadd.f32 0.0, %v1970
      %1972 = vmatprep.mubr.f32.mxu0 0.0
      %1973 = vmatmul.mubr.f32.gmra.mrb[0].mxu0 %v1858
      %v1974 = vpop.f32.mrb[0].mxu0
      %v1975 = vadd.f32 0.0, %v1974
      %v1976 = vpop.f32.mrb[0].mxu0
      %v1977 = vadd.f32 0.0, %v1976
      %1978 = vmatprep.mubr.f32.mxu0 0.0
      %1979 = vmatmul.mubr.f32.gmra.mrb[0].mxu0 %v1861
      %v1980 = vpop.f32.mrb[0].mxu0
      %v1981 = vadd.f32 0.0, %v1980
      %v1982 = vpop.f32.mrb[0].mxu0
      %v1983 = vadd.f32 0.0, %v1982
      %1984 = vmatprep.mubr.f32.mxu0 0.0
      %1985 = vmatmul.mubr.f32.gmra.mrb[0].mxu0 %v1864
      %v1986 = vpop.f32.mrb[0].mxu0
      %v1987 = vadd.f32 0.0, %v1986
      %v1988 = vpop.f32.mrb[0].mxu0
      %v1989 = vadd.f32 0.0, %v1988
      %1990 = vmatprep.mubr.f32.mxu0 0.0
      %1991 = vmatmul.mubr.f32.gmra.mrb[0].mxu0 %v1867
      %v1992 = vpop.f32.mrb[0].mxu0
      %v1993 = vadd.f32 0.0, %v1992
      %v1994 = vpop.f32.mrb[0].mxu0
      %v1995 = vadd.f32 0.0, %v1994
      %1996 = vmatprep.mubr.f32.mxu0 0.0
      %1997 = vmatmul.mubr.f32.gmra.mrb[0].mxu0 %v1870
      %v1998 = vpop.f32.mrb[0].mxu0
      %v1999 = vadd.f32 0.0, %v1998
      %v2000 = vpop.f32.mrb[0].mxu0
      %v2001 = vadd.f32 0.0, %v2000
      %2002 = vmatprep.mubr.f32.mxu0 0.0
      %2003 = vmatmul.mubr.f32.gmra.mrb[0].mxu0 %v1873
      %v2004 = vpop.f32.mrb[0].mxu0
      %v2005 = vadd.f32 0.0, %v2004
      %v2006 = vpop.f32.mrb[0].mxu0
      %v2007 = vadd.f32 0.0, %v2006
      %2008 = vmatprep.mubr.f32.mxu0 0.0
      %2009 = vmatmul.mubr.f32.gmra.mrb[0].mxu0 %v1876
      %v2010 = vpop.f32.mrb[0].mxu0
      %v2011 = vadd.f32 0.0, %v2010
      %v2012 = vpop.f32.mrb[0].mxu0
      %v2013 = vadd.f32 0.0, %v2012
      %2014 = vmatprep.mubr.f32.mxu0 0.0
      %2015 = vmatmul.mubr.f32.gmra.mrb[0].mxu0 %v1879
      %v2016 = vpop.f32.mrb[0].mxu0
      %v2017 = vadd.f32 0.0, %v2016
      %v2018 = vpop.f32.mrb[0].mxu0
      %v2019 = vadd.f32 0.0, %v2018
      %2020 = vmatprep.mubr.f32.mxu0 0.0
      %2021 = vmatmul.mubr.f32.gmra.mrb[0].mxu0 %v1882
      %v2022 = vpop.f32.mrb[0].mxu0
      %v2023 = vadd.f32 0.0, %v2022
      %v2024 = vpop.f32.mrb[0].mxu0
      %v2025 = vadd.f32 0.0, %v2024
      %2026 = vmatprep.mubr.f32.mxu0 0.0
      %2027 = vmatmul.mubr.f32.gmra.mrb[0].mxu0 %v1885
      %v2028 = vpop.f32.mrb[0].mxu0
      %v2029 = vadd.f32 0.0, %v2028
      %v2030 = vpop.f32.mrb[0].mxu0
      %v2031 = vadd.f32 0.0, %v2030
      %2032 = vmatprep.mubr.f32.mxu0 0.0
      %2033 = vmatmul.mubr.f32.gmra.mrb[0].mxu0 %v1888
      %v2034 = vpop.f32.mrb[0].mxu0
      %v2035 = vadd.f32 0.0, %v2034
      %v2036 = vpop.f32.mrb[0].mxu0
      %v2037 = vadd.f32 0.0, %v2036
      %2038 = vmatprep.mubr.f32.mxu0 0.0
      %2039 = vmatmul.mubr.f32.gmra.mrb[0].mxu0 %v1891
      %v2040 = vpop.f32.mrb[0].mxu0
      %v2041 = vadd.f32 0.0, %v2040
      %v2042 = vpop.f32.mrb[0].mxu0
      %v2043 = vadd.f32 0.0, %v2042
      %2044 = vmatprep.mubr.f32.mxu0 0.0
      %2045 = vmatmul.mubr.f32.gmra.mrb[0].mxu0 %v1894
      %v2046 = vpop.f32.mrb[0].mxu0
      %v2047 = vadd.f32 0.0, %v2046
      %v2048 = vpop.f32.mrb[0].mxu0
      %v2049 = vadd.f32 0.0, %v2048
      %2050 = vmatprep.mubr.f32.mxu0 0.0
      %2051 = vmatmul.mubr.f32.gmra.mrb[0].mxu0 %v1897
      %v2052 = vpop.f32.mrb[0].mxu0
      %v2053 = vadd.f32 0.0, %v2052
      %v2054 = vpop.f32.mrb[0].mxu0
      %v2055 = vadd.f32 0.0, %v2054
      %2056 = vmatprep.mubr.f32.mxu0 0.0
      %2057 = vmatmul.mubr.f32.gmra.mrb[0].mxu0 %v1900
      %v2058 = vpop.f32.mrb[0].mxu0
      %v2059 = vadd.f32 0.0, %v2058
      %v2060 = vpop.f32.mrb[0].mxu0
      %v2061 = vadd.f32 0.0, %v2060
      %2062 = vdwg.mxu0
      %v2063 = vadd.f32 %v1783, %v1969
      %v2064 = vadd.f32 %v1784, %v1971
      %v2065 = vadd.f32 %v1785, %v1975
      %v2066 = vadd.f32 %v1786, %v1977
      %v2067 = vadd.f32 %v1787, %v1981
      %v2068 = vadd.f32 %v1788, %v1983
      %v2069 = vadd.f32 %v1789, %v1987
      %v2070 = vadd.f32 %v1790, %v1989
      %v2071 = vadd.f32 %v1791, %v1993
      %v2072 = vadd.f32 %v1792, %v1995
      %v2073 = vadd.f32 %v1793, %v1999
      %v2074 = vadd.f32 %v1794, %v2001
      %v2075 = vadd.f32 %v1795, %v2005
      %v2076 = vadd.f32 %v1796, %v2007
      %v2077 = vadd.f32 %v1797, %v2011
      %v2078 = vadd.f32 %v1798, %v2013
      %v2079 = vadd.f32 %v1799, %v2017
      %v2080 = vadd.f32 %v1800, %v2019
      %v2081 = vadd.f32 %v1801, %v2023
      %v2082 = vadd.f32 %v1802, %v2025
      %v2083 = vadd.f32 %v1803, %v2029
      %v2084 = vadd.f32 %v1804, %v2031
      %v2085 = vadd.f32 %v1805, %v2035
      %v2086 = vadd.f32 %v1806, %v2037
      %v2087 = vadd.f32 %v1807, %v2041
      %v2088 = vadd.f32 %v1808, %v2043
      %v2089 = vadd.f32 %v1809, %v2047
      %v2090 = vadd.f32 %v1810, %v2049
      %v2091 = vadd.f32 %v1811, %v2053
      %v2092 = vadd.f32 %v1812, %v2055
      %v2093 = vadd.f32 %v1813, %v2059
      %v2094 = vadd.f32 %v1814, %v2061
      %2095 = vrot.lane.b32.xlu0 %v395, 113
      %v2096 = vpop.permute.xlu0 %2095
      %2097 = vrot.lane.b32.xlu0 %v396, 113
      %v2098 = vpop.permute.xlu0 %2097
      %vm2099 = vcmp.lt.s32.totalorder %v505, 113
      %v2100 = vsel %vm2099, %v2096, %v2098
      %v2101 = vsel %vm2099, %v2098, %v2096
      %s2102 = scalar_lea.vmem %s3, 12
      %v2103 = vld [vmem:[%s2102] sm:$0x3]
      %v2105 = vlaneseq
      %v2106 = vshrl.u32 %v2105, 7
      %v2107 = vsub.s32 0, %v2106
      %v2108 = vrot.slane %v2103, %v2107
      %v2109 = vlaneseq
      %v2110 = vshrl.u32 %v2109, 7
      %v2111 = vsub.s32 1, %v2110
      %v2112 = vrot.slane %v2103, %v2111
      %v2115 = vmul.f32 %v2100, %v2108
      %v2116 = vmul.f32 %v2101, %v2112
      %s2117 = scalar_lea.vmem %s6, 768
      %v2118 = vld [vmem:[%s2117] sm:$0xff]
      %v2119 = vld [vmem:[%s2117 + $0x8] sm:$0xff]
      %v2120 = vld [vmem:[%s2117 + $0x10] sm:$0xff]
      %v2121 = vld [vmem:[%s2117 + $0x18] sm:$0xff]
      %v2122 = vld [vmem:[%s2117 + $0x20] sm:$0xff]
      %v2123 = vld [vmem:[%s2117 + $0x28] sm:$0xff]
      %v2124 = vld [vmem:[%s2117 + $0x30] sm:$0xff]
      %v2125 = vld [vmem:[%s2117 + $0x38] sm:$0xff]
      %v2126 = vld [vmem:[%s2117 + $0x40] sm:$0xff]
      %v2127 = vld [vmem:[%s2117 + $0x48] sm:$0xff]
      %v2128 = vld [vmem:[%s2117 + $0x50] sm:$0xff]
      %v2129 = vld [vmem:[%s2117 + $0x58] sm:$0xff]
      %v2130 = vld [vmem:[%s2117 + $0x60] sm:$0xff]
      %v2131 = vld [vmem:[%s2117 + $0x68] sm:$0xff]
      %v2132 = vld [vmem:[%s2117 + $0x70] sm:$0xff]
      %v2133 = vld [vmem:[%s2117 + $0x78] sm:$0xff]
      %v2135 = vsel %vm578, %v2118, 0
      %v2138 = vsel %vm578, %v2119, 0
      %v2141 = vsel %vm578, %v2120, 0
      %v2144 = vsel %vm578, %v2121, 0
      %v2147 = vsel %vm578, %v2122, 0
      %v2150 = vsel %vm578, %v2123, 0
      %v2153 = vsel %vm578, %v2124, 0
      %v2156 = vsel %vm578, %v2125, 0
      %v2159 = vsel %vm578, %v2126, 0
      %v2162 = vsel %vm578, %v2127, 0
      %v2165 = vsel %vm578, %v2128, 0
      %v2168 = vsel %vm578, %v2129, 0
      %v2171 = vsel %vm578, %v2130, 0
      %v2174 = vsel %vm578, %v2131, 0
      %v2177 = vsel %vm578, %v2132, 0
      %v2180 = vsel %vm578, %v2133, 0
      %2182 = vmatprep.subr.mxu0 %v2116
      %2183 = vmatpush1.msra.mxu0 %v2115
      %2184 = vmatprep.subr.mxu0 0.0
      %2185 = vmatpush1.msra.mxu0 0.0
      %2186 = vmatprep.subr.mxu0 0.0
      %2187 = vmatpush1.msra.mxu0 0.0
      %2188 = vmatprep.subr.mxu0 0.0
      %2189 = vmatpush1.msra.mxu0 0.0
      %2190 = vmatprep.subr.mxu0 0.0
      %2191 = vmatpush1.msra.mxu0 0.0
      %2192 = vmatprep.subr.mxu0 0.0
      %2193 = vmatpush1.msra.mxu0 0.0
      %2194 = vmatprep.subr.mxu0 0.0
      %2195 = vmatpush1.msra.mxu0 0.0
      %2196 = vmatprep.subr.mxu0 0.0
      %2197 = vmatpush1.msra.mxu0 0.0
      %2198 = vmatprep.subr.mxu0 0.0
      %2199 = vmatpush1.msra.mxu0 0.0
      %2200 = vmatprep.subr.mxu0 0.0
      %2201 = vmatpush1.msra.mxu0 0.0
      %2202 = vmatprep.subr.mxu0 0.0
      %2203 = vmatpush1.msra.mxu0 0.0
      %2204 = vmatprep.subr.mxu0 0.0
      %2205 = vmatpush1.msra.mxu0 0.0
      %2206 = vmatprep.subr.mxu0 0.0
      %2207 = vmatpush1.msra.mxu0 0.0
      %2208 = vmatprep.subr.mxu0 0.0
      %2209 = vmatpush1.msra.mxu0 0.0
      %2210 = vmatprep.subr.mxu0 0.0
      %2211 = vmatpush1.msra.mxu0 0.0
      %2212 = vmatprep.subr.mxu0 0.0
      %2213 = vmatpush1.msra.mxu0 0.0
      %2214 = vmatprep.subr.mxu0 0.0
      %2215 = vmatpush1.msra.mxu0 0.0
      %2216 = vmatprep.subr.mxu0 0.0
      %2217 = vmatpush1.msra.mxu0 0.0
      %2218 = vmatprep.subr.mxu0 0.0
      %2219 = vmatpush1.msra.mxu0 0.0
      %2220 = vmatprep.subr.mxu0 0.0
      %2221 = vmatpush1.msra.mxu0 0.0
      %2222 = vmatprep.subr.mxu0 0.0
      %2223 = vmatpush1.msra.mxu0 0.0
      %2224 = vmatprep.subr.mxu0 0.0
      %2225 = vmatpush1.msra.mxu0 0.0
      %2226 = vmatprep.subr.mxu0 0.0
      %2227 = vmatpush1.msra.mxu0 0.0
      %2228 = vmatprep.subr.mxu0 0.0
      %2229 = vmatpush1.msra.mxu0 0.0
      %2230 = vmatprep.subr.mxu0 0.0
      %2231 = vmatpush1.msra.mxu0 0.0
      %2232 = vmatprep.subr.mxu0 0.0
      %2233 = vmatpush1.msra.mxu0 0.0
      %2234 = vmatprep.subr.mxu0 0.0
      %2235 = vmatpush1.msra.mxu0 0.0
      %2236 = vmatprep.subr.mxu0 0.0
      %2237 = vmatpush1.msra.mxu0 0.0
      %2238 = vmatprep.subr.mxu0 0.0
      %2239 = vmatpush1.msra.mxu0 0.0
      %2240 = vmatprep.subr.mxu0 0.0
      %2241 = vmatpush1.msra.mxu0 0.0
      %2242 = vmatprep.subr.mxu0 0.0
      %2243 = vmatpush1.msra.mxu0 0.0
      %2244 = vmatprep.subr.mxu0 0.0
      %2245 = vmatpush1.msra.mxu0 0.0
      %2246 = vmatprep.mubr.f32.mxu0 0.0
      %2247 = vmatmul.mubr.f32.gmra.mrb[0].mxu0 %v2135
      %v2248 = vpop.f32.mrb[0].mxu0
      %v2249 = vadd.f32 0.0, %v2248
      %v2250 = vpop.f32.mrb[0].mxu0
      %v2251 = vadd.f32 0.0, %v2250
      %2252 = vmatprep.mubr.f32.mxu0 0.0
      %2253 = vmatmul.mubr.f32.gmra.mrb[0].mxu0 %v2138
      %v2254 = vpop.f32.mrb[0].mxu0
      %v2255 = vadd.f32 0.0, %v2254
      %v2256 = vpop.f32.mrb[0].mxu0
      %v2257 = vadd.f32 0.0, %v2256
      %2258 = vmatprep.mubr.f32.mxu0 0.0
      %2259 = vmatmul.mubr.f32.gmra.mrb[0].mxu0 %v2141
      %v2260 = vpop.f32.mrb[0].mxu0
      %v2261 = vadd.f32 0.0, %v2260
      %v2262 = vpop.f32.mrb[0].mxu0
      %v2263 = vadd.f32 0.0, %v2262
      %2264 = vmatprep.mubr.f32.mxu0 0.0
      %2265 = vmatmul.mubr.f32.gmra.mrb[0].mxu0 %v2144
      %v2266 = vpop.f32.mrb[0].mxu0
      %v2267 = vadd.f32 0.0, %v2266
      %v2268 = vpop.f32.mrb[0].mxu0
      %v2269 = vadd.f32 0.0, %v2268
      %2270 = vmatprep.mubr.f32.mxu0 0.0
      %2271 = vmatmul.mubr.f32.gmra.mrb[0].mxu0 %v2147
      %v2272 = vpop.f32.mrb[0].mxu0
      %v2273 = vadd.f32 0.0, %v2272
      %v2274 = vpop.f32.mrb[0].mxu0
      %v2275 = vadd.f32 0.0, %v2274
      %2276 = vmatprep.mubr.f32.mxu0 0.0
      %2277 = vmatmul.mubr.f32.gmra.mrb[0].mxu0 %v2150
      %v2278 = vpop.f32.mrb[0].mxu0
      %v2279 = vadd.f32 0.0, %v2278
      %v2280 = vpop.f32.mrb[0].mxu0
      %v2281 = vadd.f32 0.0, %v2280
      %2282 = vmatprep.mubr.f32.mxu0 0.0
      %2283 = vmatmul.mubr.f32.gmra.mrb[0].mxu0 %v2153
      %v2284 = vpop.f32.mrb[0].mxu0
      %v2285 = vadd.f32 0.0, %v2284
      %v2286 = vpop.f32.mrb[0].mxu0
      %v2287 = vadd.f32 0.0, %v2286
      %2288 = vmatprep.mubr.f32.mxu0 0.0
      %2289 = vmatmul.mubr.f32.gmra.mrb[0].mxu0 %v2156
      %v2290 = vpop.f32.mrb[0].mxu0
      %v2291 = vadd.f32 0.0, %v2290
      %v2292 = vpop.f32.mrb[0].mxu0
      %v2293 = vadd.f32 0.0, %v2292
      %2294 = vmatprep.mubr.f32.mxu0 0.0
      %2295 = vmatmul.mubr.f32.gmra.mrb[0].mxu0 %v2159
      %v2296 = vpop.f32.mrb[0].mxu0
      %v2297 = vadd.f32 0.0, %v2296
      %v2298 = vpop.f32.mrb[0].mxu0
      %v2299 = vadd.f32 0.0, %v2298
      %2300 = vmatprep.mubr.f32.mxu0 0.0
      %2301 = vmatmul.mubr.f32.gmra.mrb[0].mxu0 %v2162
      %v2302 = vpop.f32.mrb[0].mxu0
      %v2303 = vadd.f32 0.0, %v2302
      %v2304 = vpop.f32.mrb[0].mxu0
      %v2305 = vadd.f32 0.0, %v2304
      %2306 = vmatprep.mubr.f32.mxu0 0.0
      %2307 = vmatmul.mubr.f32.gmra.mrb[0].mxu0 %v2165
      %v2308 = vpop.f32.mrb[0].mxu0
      %v2309 = vadd.f32 0.0, %v2308
      %v2310 = vpop.f32.mrb[0].mxu0
      %v2311 = vadd.f32 0.0, %v2310
      %2312 = vmatprep.mubr.f32.mxu0 0.0
      %2313 = vmatmul.mubr.f32.gmra.mrb[0].mxu0 %v2168
      %v2314 = vpop.f32.mrb[0].mxu0
      %v2315 = vadd.f32 0.0, %v2314
      %v2316 = vpop.f32.mrb[0].mxu0
      %v2317 = vadd.f32 0.0, %v2316
      %2318 = vmatprep.mubr.f32.mxu0 0.0
      %2319 = vmatmul.mubr.f32.gmra.mrb[0].mxu0 %v2171
      %v2320 = vpop.f32.mrb[0].mxu0
      %v2321 = vadd.f32 0.0, %v2320
      %v2322 = vpop.f32.mrb[0].mxu0
      %v2323 = vadd.f32 0.0, %v2322
      %2324 = vmatprep.mubr.f32.mxu0 0.0
      %2325 = vmatmul.mubr.f32.gmra.mrb[0].mxu0 %v2174
      %v2326 = vpop.f32.mrb[0].mxu0
      %v2327 = vadd.f32 0.0, %v2326
      %v2328 = vpop.f32.mrb[0].mxu0
      %v2329 = vadd.f32 0.0, %v2328
      %2330 = vmatprep.mubr.f32.mxu0 0.0
      %2331 = vmatmul.mubr.f32.gmra.mrb[0].mxu0 %v2177
      %v2332 = vpop.f32.mrb[0].mxu0
      %v2333 = vadd.f32 0.0, %v2332
      %v2334 = vpop.f32.mrb[0].mxu0
      %v2335 = vadd.f32 0.0, %v2334
      %2336 = vmatprep.mubr.f32.mxu0 0.0
      %2337 = vmatmul.mubr.f32.gmra.mrb[0].mxu0 %v2180
      %v2338 = vpop.f32.mrb[0].mxu0
      %v2339 = vadd.f32 0.0, %v2338
      %v2340 = vpop.f32.mrb[0].mxu0
      %v2341 = vadd.f32 0.0, %v2340
      %2342 = vdwg.mxu0
      %v2343 = vadd.f32 %v2063, %v2249
      %v2344 = vadd.f32 %v2064, %v2251
      %v2345 = vadd.f32 %v2065, %v2255
      %v2346 = vadd.f32 %v2066, %v2257
      %v2347 = vadd.f32 %v2067, %v2261
      %v2348 = vadd.f32 %v2068, %v2263
      %v2349 = vadd.f32 %v2069, %v2267
      %v2350 = vadd.f32 %v2070, %v2269
      %v2351 = vadd.f32 %v2071, %v2273
      %v2352 = vadd.f32 %v2072, %v2275
      %v2353 = vadd.f32 %v2073, %v2279
      %v2354 = vadd.f32 %v2074, %v2281
      %v2355 = vadd.f32 %v2075, %v2285
      %v2356 = vadd.f32 %v2076, %v2287
      %v2357 = vadd.f32 %v2077, %v2291
      %v2358 = vadd.f32 %v2078, %v2293
      %v2359 = vadd.f32 %v2079, %v2297
      %v2360 = vadd.f32 %v2080, %v2299
      %v2361 = vadd.f32 %v2081, %v2303
      %v2362 = vadd.f32 %v2082, %v2305
      %v2363 = vadd.f32 %v2083, %v2309
      %v2364 = vadd.f32 %v2084, %v2311
      %v2365 = vadd.f32 %v2085, %v2315
      %v2366 = vadd.f32 %v2086, %v2317
      %v2367 = vadd.f32 %v2087, %v2321
      %v2368 = vadd.f32 %v2088, %v2323
      %v2369 = vadd.f32 %v2089, %v2327
      %v2370 = vadd.f32 %v2090, %v2329
      %v2371 = vadd.f32 %v2091, %v2333
      %v2372 = vadd.f32 %v2092, %v2335
      %v2373 = vadd.f32 %v2093, %v2339
      %v2374 = vadd.f32 %v2094, %v2341
      %2375 = vrot.lane.b32.xlu0 %v395, 112
      %v2376 = vpop.permute.xlu0 %2375
      %2377 = vrot.lane.b32.xlu0 %v396, 112
      %v2378 = vpop.permute.xlu0 %2377
      %vm2379 = vcmp.lt.s32.totalorder %v505, 112
      %v2380 = vsel %vm2379, %v2376, %v2378
      %v2381 = vsel %vm2379, %v2378, %v2376
      %s2382 = scalar_lea.vmem %s3, 14
      %v2383 = vld [vmem:[%s2382] sm:$0x3]
      %v2385 = vlaneseq
      %v2386 = vshrl.u32 %v2385, 7
      %v2387 = vsub.s32 0, %v2386
      %v2388 = vrot.slane %v2383, %v2387
      %v2389 = vlaneseq
      %v2390 = vshrl.u32 %v2389, 7
      %v2391 = vsub.s32 1, %v2390
      %v2392 = vrot.slane %v2383, %v2391
      %v2395 = vmul.f32 %v2380, %v2388
      %v2396 = vmul.f32 %v2381, %v2392
      %s2397 = scalar_lea.vmem %s6, 896
      %v2398 = vld [vmem:[%s2397] sm:$0xff]
      %v2399 = vld [vmem:[%s2397 + $0x8] sm:$0xff]
      %v2400 = vld [vmem:[%s2397 + $0x10] sm:$0xff]
      %v2401 = vld [vmem:[%s2397 + $0x18] sm:$0xff]
      %v2402 = vld [vmem:[%s2397 + $0x20] sm:$0xff]
      %v2403 = vld [vmem:[%s2397 + $0x28] sm:$0xff]
      %v2404 = vld [vmem:[%s2397 + $0x30] sm:$0xff]
      %v2405 = vld [vmem:[%s2397 + $0x38] sm:$0xff]
      %v2406 = vld [vmem:[%s2397 + $0x40] sm:$0xff]
      %v2407 = vld [vmem:[%s2397 + $0x48] sm:$0xff]
      %v2408 = vld [vmem:[%s2397 + $0x50] sm:$0xff]
      %v2409 = vld [vmem:[%s2397 + $0x58] sm:$0xff]
      %v2410 = vld [vmem:[%s2397 + $0x60] sm:$0xff]
      %v2411 = vld [vmem:[%s2397 + $0x68] sm:$0xff]
      %v2412 = vld [vmem:[%s2397 + $0x70] sm:$0xff]
      %v2413 = vld [vmem:[%s2397 + $0x78] sm:$0xff]
      %v2415 = vsel %vm578, %v2398, 0
      %v2418 = vsel %vm578, %v2399, 0
      %v2421 = vsel %vm578, %v2400, 0
      %v2424 = vsel %vm578, %v2401, 0
      %v2427 = vsel %vm578, %v2402, 0
      %v2430 = vsel %vm578, %v2403, 0
      %v2433 = vsel %vm578, %v2404, 0
      %v2436 = vsel %vm578, %v2405, 0
      %v2439 = vsel %vm578, %v2406, 0
      %v2442 = vsel %vm578, %v2407, 0
      %v2445 = vsel %vm578, %v2408, 0
      %v2448 = vsel %vm578, %v2409, 0
      %v2451 = vsel %vm578, %v2410, 0
      %v2454 = vsel %vm578, %v2411, 0
      %v2457 = vsel %vm578, %v2412, 0
      %v2460 = vsel %vm578, %v2413, 0
      %2462 = vmatprep.subr.mxu0 %v2396
      %2463 = vmatpush1.msra.mxu0 %v2395
      %2464 = vmatprep.subr.mxu0 0.0
      %2465 = vmatpush1.msra.mxu0 0.0
      %2466 = vmatprep.subr.mxu0 0.0
      %2467 = vmatpush1.msra.mxu0 0.0
      %2468 = vmatprep.subr.mxu0 0.0
      %2469 = vmatpush1.msra.mxu0 0.0
      %2470 = vmatprep.subr.mxu0 0.0
      %2471 = vmatpush1.msra.mxu0 0.0
      %2472 = vmatprep.subr.mxu0 0.0
      %2473 = vmatpush1.msra.mxu0 0.0
      %2474 = vmatprep.subr.mxu0 0.0
      %2475 = vmatpush1.msra.mxu0 0.0
      %2476 = vmatprep.subr.mxu0 0.0
      %2477 = vmatpush1.msra.mxu0 0.0
      %2478 = vmatprep.subr.mxu0 0.0
      %2479 = vmatpush1.msra.mxu0 0.0
      %2480 = vmatprep.subr.mxu0 0.0
      %2481 = vmatpush1.msra.mxu0 0.0
      %2482 = vmatprep.subr.mxu0 0.0
      %2483 = vmatpush1.msra.mxu0 0.0
      %2484 = vmatprep.subr.mxu0 0.0
      %2485 = vmatpush1.msra.mxu0 0.0
      %2486 = vmatprep.subr.mxu0 0.0
      %2487 = vmatpush1.msra.mxu0 0.0
      %2488 = vmatprep.subr.mxu0 0.0
      %2489 = vmatpush1.msra.mxu0 0.0
      %2490 = vmatprep.subr.mxu0 0.0
      %2491 = vmatpush1.msra.mxu0 0.0
      %2492 = vmatprep.subr.mxu0 0.0
      %2493 = vmatpush1.msra.mxu0 0.0
      %2494 = vmatprep.subr.mxu0 0.0
      %2495 = vmatpush1.msra.mxu0 0.0
      %2496 = vmatprep.subr.mxu0 0.0
      %2497 = vmatpush1.msra.mxu0 0.0
      %2498 = vmatprep.subr.mxu0 0.0
      %2499 = vmatpush1.msra.mxu0 0.0
      %2500 = vmatprep.subr.mxu0 0.0
      %2501 = vmatpush1.msra.mxu0 0.0
      %2502 = vmatprep.subr.mxu0 0.0
      %2503 = vmatpush1.msra.mxu0 0.0
      %2504 = vmatprep.subr.mxu0 0.0
      %2505 = vmatpush1.msra.mxu0 0.0
      %2506 = vmatprep.subr.mxu0 0.0
      %2507 = vmatpush1.msra.mxu0 0.0
      %2508 = vmatprep.subr.mxu0 0.0
      %2509 = vmatpush1.msra.mxu0 0.0
      %2510 = vmatprep.subr.mxu0 0.0
      %2511 = vmatpush1.msra.mxu0 0.0
      %2512 = vmatprep.subr.mxu0 0.0
      %2513 = vmatpush1.msra.mxu0 0.0
      %2514 = vmatprep.subr.mxu0 0.0
      %2515 = vmatpush1.msra.mxu0 0.0
      %2516 = vmatprep.subr.mxu0 0.0
      %2517 = vmatpush1.msra.mxu0 0.0
      %2518 = vmatprep.subr.mxu0 0.0
      %2519 = vmatpush1.msra.mxu0 0.0
      %2520 = vmatprep.subr.mxu0 0.0
      %2521 = vmatpush1.msra.mxu0 0.0
      %2522 = vmatprep.subr.mxu0 0.0
      %2523 = vmatpush1.msra.mxu0 0.0
      %2524 = vmatprep.subr.mxu0 0.0
      %2525 = vmatpush1.msra.mxu0 0.0
      %2526 = vmatprep.mubr.f32.mxu0 0.0
      %2527 = vmatmul.mubr.f32.gmra.mrb[0].mxu0 %v2415
      %v2528 = vpop.f32.mrb[0].mxu0
      %v2529 = vadd.f32 0.0, %v2528
      %v2530 = vpop.f32.mrb[0].mxu0
      %v2531 = vadd.f32 0.0, %v2530
      %2532 = vmatprep.mubr.f32.mxu0 0.0
      %2533 = vmatmul.mubr.f32.gmra.mrb[0].mxu0 %v2418
      %v2534 = vpop.f32.mrb[0].mxu0
      %v2535 = vadd.f32 0.0, %v2534
      %v2536 = vpop.f32.mrb[0].mxu0
      %v2537 = vadd.f32 0.0, %v2536
      %2538 = vmatprep.mubr.f32.mxu0 0.0
      %2539 = vmatmul.mubr.f32.gmra.mrb[0].mxu0 %v2421
      %v2540 = vpop.f32.mrb[0].mxu0
      %v2541 = vadd.f32 0.0, %v2540
      %v2542 = vpop.f32.mrb[0].mxu0
      %v2543 = vadd.f32 0.0, %v2542
      %2544 = vmatprep.mubr.f32.mxu0 0.0
      %2545 = vmatmul.mubr.f32.gmra.mrb[0].mxu0 %v2424
      %v2546 = vpop.f32.mrb[0].mxu0
      %v2547 = vadd.f32 0.0, %v2546
      %v2548 = vpop.f32.mrb[0].mxu0
      %v2549 = vadd.f32 0.0, %v2548
      %2550 = vmatprep.mubr.f32.mxu0 0.0
      %2551 = vmatmul.mubr.f32.gmra.mrb[0].mxu0 %v2427
      %v2552 = vpop.f32.mrb[0].mxu0
      %v2553 = vadd.f32 0.0, %v2552
      %v2554 = vpop.f32.mrb[0].mxu0
      %v2555 = vadd.f32 0.0, %v2554
      %2556 = vmatprep.mubr.f32.mxu0 0.0
      %2557 = vmatmul.mubr.f32.gmra.mrb[0].mxu0 %v2430
      %v2558 = vpop.f32.mrb[0].mxu0
      %v2559 = vadd.f32 0.0, %v2558
      %v2560 = vpop.f32.mrb[0].mxu0
      %v2561 = vadd.f32 0.0, %v2560
      %2562 = vmatprep.mubr.f32.mxu0 0.0
      %2563 = vmatmul.mubr.f32.gmra.mrb[0].mxu0 %v2433
      %v2564 = vpop.f32.mrb[0].mxu0
      %v2565 = vadd.f32 0.0, %v2564
      %v2566 = vpop.f32.mrb[0].mxu0
      %v2567 = vadd.f32 0.0, %v2566
      %2568 = vmatprep.mubr.f32.mxu0 0.0
      %2569 = vmatmul.mubr.f32.gmra.mrb[0].mxu0 %v2436
      %v2570 = vpop.f32.mrb[0].mxu0
      %v2571 = vadd.f32 0.0, %v2570
      %v2572 = vpop.f32.mrb[0].mxu0
      %v2573 = vadd.f32 0.0, %v2572
      %2574 = vmatprep.mubr.f32.mxu0 0.0
      %2575 = vmatmul.mubr.f32.gmra.mrb[0].mxu0 %v2439
      %v2576 = vpop.f32.mrb[0].mxu0
      %v2577 = vadd.f32 0.0, %v2576
      %v2578 = vpop.f32.mrb[0].mxu0
      %v2579 = vadd.f32 0.0, %v2578
      %2580 = vmatprep.mubr.f32.mxu0 0.0
      %2581 = vmatmul.mubr.f32.gmra.mrb[0].mxu0 %v2442
      %v2582 = vpop.f32.mrb[0].mxu0
      %v2583 = vadd.f32 0.0, %v2582
      %v2584 = vpop.f32.mrb[0].mxu0
      %v2585 = vadd.f32 0.0, %v2584
      %2586 = vmatprep.mubr.f32.mxu0 0.0
      %2587 = vmatmul.mubr.f32.gmra.mrb[0].mxu0 %v2445
      %v2588 = vpop.f32.mrb[0].mxu0
      %v2589 = vadd.f32 0.0, %v2588
      %v2590 = vpop.f32.mrb[0].mxu0
      %v2591 = vadd.f32 0.0, %v2590
      %2592 = vmatprep.mubr.f32.mxu0 0.0
      %2593 = vmatmul.mubr.f32.gmra.mrb[0].mxu0 %v2448
      %v2594 = vpop.f32.mrb[0].mxu0
      %v2595 = vadd.f32 0.0, %v2594
      %v2596 = vpop.f32.mrb[0].mxu0
      %v2597 = vadd.f32 0.0, %v2596
      %2598 = vmatprep.mubr.f32.mxu0 0.0
      %2599 = vmatmul.mubr.f32.gmra.mrb[0].mxu0 %v2451
      %v2600 = vpop.f32.mrb[0].mxu0
      %v2601 = vadd.f32 0.0, %v2600
      %v2602 = vpop.f32.mrb[0].mxu0
      %v2603 = vadd.f32 0.0, %v2602
      %2604 = vmatprep.mubr.f32.mxu0 0.0
      %2605 = vmatmul.mubr.f32.gmra.mrb[0].mxu0 %v2454
      %v2606 = vpop.f32.mrb[0].mxu0
      %v2607 = vadd.f32 0.0, %v2606
      %v2608 = vpop.f32.mrb[0].mxu0
      %v2609 = vadd.f32 0.0, %v2608
      %2610 = vmatprep.mubr.f32.mxu0 0.0
      %2611 = vmatmul.mubr.f32.gmra.mrb[0].mxu0 %v2457
      %v2612 = vpop.f32.mrb[0].mxu0
      %v2613 = vadd.f32 0.0, %v2612
      %v2614 = vpop.f32.mrb[0].mxu0
      %v2615 = vadd.f32 0.0, %v2614
      %2616 = vmatprep.mubr.f32.mxu0 0.0
      %2617 = vmatmul.mubr.f32.gmra.mrb[0].mxu0 %v2460
      %v2618 = vpop.f32.mrb[0].mxu0
      %v2619 = vadd.f32 0.0, %v2618
      %v2620 = vpop.f32.mrb[0].mxu0
      %v2621 = vadd.f32 0.0, %v2620
      %2622 = vdwg.mxu0
      %v2623 = vadd.f32 %v2343, %v2529
      %v2624 = vadd.f32 %v2344, %v2531
      %v2625 = vadd.f32 %v2345, %v2535
      %v2626 = vadd.f32 %v2346, %v2537
      %v2627 = vadd.f32 %v2347, %v2541
      %v2628 = vadd.f32 %v2348, %v2543
      %v2629 = vadd.f32 %v2349, %v2547
      %v2630 = vadd.f32 %v2350, %v2549
      %v2631 = vadd.f32 %v2351, %v2553
      %v2632 = vadd.f32 %v2352, %v2555
      %v2633 = vadd.f32 %v2353, %v2559
      %v2634 = vadd.f32 %v2354, %v2561
      %v2635 = vadd.f32 %v2355, %v2565
      %v2636 = vadd.f32 %v2356, %v2567
      %v2637 = vadd.f32 %v2357, %v2571
      %v2638 = vadd.f32 %v2358, %v2573
      %v2639 = vadd.f32 %v2359, %v2577
      %v2640 = vadd.f32 %v2360, %v2579
      %v2641 = vadd.f32 %v2361, %v2583
      %v2642 = vadd.f32 %v2362, %v2585
      %v2643 = vadd.f32 %v2363, %v2589
      %v2644 = vadd.f32 %v2364, %v2591
      %v2645 = vadd.f32 %v2365, %v2595
      %v2646 = vadd.f32 %v2366, %v2597
      %v2647 = vadd.f32 %v2367, %v2601
      %v2648 = vadd.f32 %v2368, %v2603
      %v2649 = vadd.f32 %v2369, %v2607
      %v2650 = vadd.f32 %v2370, %v2609
      %v2651 = vadd.f32 %v2371, %v2613
      %v2652 = vadd.f32 %v2372, %v2615
      %v2653 = vadd.f32 %v2373, %v2619
      %v2654 = vadd.f32 %v2374, %v2621
      %2655 = vrot.lane.b32.xlu0 %v395, 111
      %v2656 = vpop.permute.xlu0 %2655
      %2657 = vrot.lane.b32.xlu0 %v396, 111
      %v2658 = vpop.permute.xlu0 %2657
      %vm2659 = vcmp.lt.s32.totalorder %v505, 111
      %v2660 = vsel %vm2659, %v2656, %v2658
      %v2661 = vsel %vm2659, %v2658, %v2656
      %s2662 = scalar_lea.vmem %s3, 16
      %v2663 = vld [vmem:[%s2662] sm:$0x3]
      %v2665 = vlaneseq
      %v2666 = vshrl.u32 %v2665, 7
      %v2667 = vsub.s32 0, %v2666
      %v2668 = vrot.slane %v2663, %v2667
      %v2669 = vlaneseq
      %v2670 = vshrl.u32 %v2669, 7
      %v2671 = vsub.s32 1, %v2670
      %v2672 = vrot.slane %v2663, %v2671
      %v2675 = vmul.f32 %v2660, %v2668
      %v2676 = vmul.f32 %v2661, %v2672
      %s2677 = scalar_lea.vmem %s6, 1024
      %v2678 = vld [vmem:[%s2677] sm:$0xff]
      %v2679 = vld [vmem:[%s2677 + $0x8] sm:$0xff]
      %v2680 = vld [vmem:[%s2677 + $0x10] sm:$0xff]
      %v2681 = vld [vmem:[%s2677 + $0x18] sm:$0xff]
      %v2682 = vld [vmem:[%s2677 + $0x20] sm:$0xff]
      %v2683 = vld [vmem:[%s2677 + $0x28] sm:$0xff]
      %v2684 = vld [vmem:[%s2677 + $0x30] sm:$0xff]
      %v2685 = vld [vmem:[%s2677 + $0x38] sm:$0xff]
      %v2686 = vld [vmem:[%s2677 + $0x40] sm:$0xff]
      %v2687 = vld [vmem:[%s2677 + $0x48] sm:$0xff]
      %v2688 = vld [vmem:[%s2677 + $0x50] sm:$0xff]
      %v2689 = vld [vmem:[%s2677 + $0x58] sm:$0xff]
      %v2690 = vld [vmem:[%s2677 + $0x60] sm:$0xff]
      %v2691 = vld [vmem:[%s2677 + $0x68] sm:$0xff]
      %v2692 = vld [vmem:[%s2677 + $0x70] sm:$0xff]
      %v2693 = vld [vmem:[%s2677 + $0x78] sm:$0xff]
      %v2695 = vsel %vm578, %v2678, 0
      %v2698 = vsel %vm578, %v2679, 0
      %v2701 = vsel %vm578, %v2680, 0
      %v2704 = vsel %vm578, %v2681, 0
      %v2707 = vsel %vm578, %v2682, 0
      %v2710 = vsel %vm578, %v2683, 0
      %v2713 = vsel %vm578, %v2684, 0
      %v2716 = vsel %vm578, %v2685, 0
      %v2719 = vsel %vm578, %v2686, 0
      %v2722 = vsel %vm578, %v2687, 0
      %v2725 = vsel %vm578, %v2688, 0
      %v2728 = vsel %vm578, %v2689, 0
      %v2731 = vsel %vm578, %v2690, 0
      %v2734 = vsel %vm578, %v2691, 0
      %v2737 = vsel %vm578, %v2692, 0
      %v2740 = vsel %vm578, %v2693, 0
      %2742 = vmatprep.subr.mxu0 %v2676
      %2743 = vmatpush1.msra.mxu0 %v2675
      %2744 = vmatprep.subr.mxu0 0.0
      %2745 = vmatpush1.msra.mxu0 0.0
      %2746 = vmatprep.subr.mxu0 0.0
      %2747 = vmatpush1.msra.mxu0 0.0
      %2748 = vmatprep.subr.mxu0 0.0
      %2749 = vmatpush1.msra.mxu0 0.0
      %2750 = vmatprep.subr.mxu0 0.0
      %2751 = vmatpush1.msra.mxu0 0.0
      %2752 = vmatprep.subr.mxu0 0.0
      %2753 = vmatpush1.msra.mxu0 0.0
      %2754 = vmatprep.subr.mxu0 0.0
      %2755 = vmatpush1.msra.mxu0 0.0
      %2756 = vmatprep.subr.mxu0 0.0
      %2757 = vmatpush1.msra.mxu0 0.0
      %2758 = vmatprep.subr.mxu0 0.0
      %2759 = vmatpush1.msra.mxu0 0.0
      %2760 = vmatprep.subr.mxu0 0.0
      %2761 = vmatpush1.msra.mxu0 0.0
      %2762 = vmatprep.subr.mxu0 0.0
      %2763 = vmatpush1.msra.mxu0 0.0
      %2764 = vmatprep.subr.mxu0 0.0
      %2765 = vmatpush1.msra.mxu0 0.0
      %2766 = vmatprep.subr.mxu0 0.0
      %2767 = vmatpush1.msra.mxu0 0.0
      %2768 = vmatprep.subr.mxu0 0.0
      %2769 = vmatpush1.msra.mxu0 0.0
      %2770 = vmatprep.subr.mxu0 0.0
      %2771 = vmatpush1.msra.mxu0 0.0
      %2772 = vmatprep.subr.mxu0 0.0
      %2773 = vmatpush1.msra.mxu0 0.0
      %2774 = vmatprep.subr.mxu0 0.0
      %2775 = vmatpush1.msra.mxu0 0.0
      %2776 = vmatprep.subr.mxu0 0.0
      %2777 = vmatpush1.msra.mxu0 0.0
      %2778 = vmatprep.subr.mxu0 0.0
      %2779 = vmatpush1.msra.mxu0 0.0
      %2780 = vmatprep.subr.mxu0 0.0
      %2781 = vmatpush1.msra.mxu0 0.0
      %2782 = vmatprep.subr.mxu0 0.0
      %2783 = vmatpush1.msra.mxu0 0.0
      %2784 = vmatprep.subr.mxu0 0.0
      %2785 = vmatpush1.msra.mxu0 0.0
      %2786 = vmatprep.subr.mxu0 0.0
      %2787 = vmatpush1.msra.mxu0 0.0
      %2788 = vmatprep.subr.mxu0 0.0
      %2789 = vmatpush1.msra.mxu0 0.0
      %2790 = vmatprep.subr.mxu0 0.0
      %2791 = vmatpush1.msra.mxu0 0.0
      %2792 = vmatprep.subr.mxu0 0.0
      %2793 = vmatpush1.msra.mxu0 0.0
      %2794 = vmatprep.subr.mxu0 0.0
      %2795 = vmatpush1.msra.mxu0 0.0
      %2796 = vmatprep.subr.mxu0 0.0
      %2797 = vmatpush1.msra.mxu0 0.0
      %2798 = vmatprep.subr.mxu0 0.0
      %2799 = vmatpush1.msra.mxu0 0.0
      %2800 = vmatprep.subr.mxu0 0.0
      %2801 = vmatpush1.msra.mxu0 0.0
      %2802 = vmatprep.subr.mxu0 0.0
      %2803 = vmatpush1.msra.mxu0 0.0
      %2804 = vmatprep.subr.mxu0 0.0
      %2805 = vmatpush1.msra.mxu0 0.0
      %2806 = vmatprep.mubr.f32.mxu0 0.0
      %2807 = vmatmul.mubr.f32.gmra.mrb[0].mxu0 %v2695
      %v2808 = vpop.f32.mrb[0].mxu0
      %v2809 = vadd.f32 0.0, %v2808
      %v2810 = vpop.f32.mrb[0].mxu0
      %v2811 = vadd.f32 0.0, %v2810
      %2812 = vmatprep.mubr.f32.mxu0 0.0
      %2813 = vmatmul.mubr.f32.gmra.mrb[0].mxu0 %v2698
      %v2814 = vpop.f32.mrb[0].mxu0
      %v2815 = vadd.f32 0.0, %v2814
      %v2816 = vpop.f32.mrb[0].mxu0
      %v2817 = vadd.f32 0.0, %v2816
      %2818 = vmatprep.mubr.f32.mxu0 0.0
      %2819 = vmatmul.mubr.f32.gmra.mrb[0].mxu0 %v2701
      %v2820 = vpop.f32.mrb[0].mxu0
      %v2821 = vadd.f32 0.0, %v2820
      %v2822 = vpop.f32.mrb[0].mxu0
      %v2823 = vadd.f32 0.0, %v2822
      %2824 = vmatprep.mubr.f32.mxu0 0.0
      %2825 = vmatmul.mubr.f32.gmra.mrb[0].mxu0 %v2704
      %v2826 = vpop.f32.mrb[0].mxu0
      %v2827 = vadd.f32 0.0, %v2826
      %v2828 = vpop.f32.mrb[0].mxu0
      %v2829 = vadd.f32 0.0, %v2828
      %2830 = vmatprep.mubr.f32.mxu0 0.0
      %2831 = vmatmul.mubr.f32.gmra.mrb[0].mxu0 %v2707
      %v2832 = vpop.f32.mrb[0].mxu0
      %v2833 = vadd.f32 0.0, %v2832
      %v2834 = vpop.f32.mrb[0].mxu0
      %v2835 = vadd.f32 0.0, %v2834
      %2836 = vmatprep.mubr.f32.mxu0 0.0
      %2837 = vmatmul.mubr.f32.gmra.mrb[0].mxu0 %v2710
      %v2838 = vpop.f32.mrb[0].mxu0
      %v2839 = vadd.f32 0.0, %v2838
      %v2840 = vpop.f32.mrb[0].mxu0
      %v2841 = vadd.f32 0.0, %v2840
      %2842 = vmatprep.mubr.f32.mxu0 0.0
      %2843 = vmatmul.mubr.f32.gmra.mrb[0].mxu0 %v2713
      %v2844 = vpop.f32.mrb[0].mxu0
      %v2845 = vadd.f32 0.0, %v2844
      %v2846 = vpop.f32.mrb[0].mxu0
      %v2847 = vadd.f32 0.0, %v2846
      %2848 = vmatprep.mubr.f32.mxu0 0.0
      %2849 = vmatmul.mubr.f32.gmra.mrb[0].mxu0 %v2716
      %v2850 = vpop.f32.mrb[0].mxu0
      %v2851 = vadd.f32 0.0, %v2850
      %v2852 = vpop.f32.mrb[0].mxu0
      %v2853 = vadd.f32 0.0, %v2852
      %2854 = vmatprep.mubr.f32.mxu0 0.0
      %2855 = vmatmul.mubr.f32.gmra.mrb[0].mxu0 %v2719
      %v2856 = vpop.f32.mrb[0].mxu0
      %v2857 = vadd.f32 0.0, %v2856
      %v2858 = vpop.f32.mrb[0].mxu0
      %v2859 = vadd.f32 0.0, %v2858
      %2860 = vmatprep.mubr.f32.mxu0 0.0
      %2861 = vmatmul.mubr.f32.gmra.mrb[0].mxu0 %v2722
      %v2862 = vpop.f32.mrb[0].mxu0
      %v2863 = vadd.f32 0.0, %v2862
      %v2864 = vpop.f32.mrb[0].mxu0
      %v2865 = vadd.f32 0.0, %v2864
      %2866 = vmatprep.mubr.f32.mxu0 0.0
      %2867 = vmatmul.mubr.f32.gmra.mrb[0].mxu0 %v2725
      %v2868 = vpop.f32.mrb[0].mxu0
      %v2869 = vadd.f32 0.0, %v2868
      %v2870 = vpop.f32.mrb[0].mxu0
      %v2871 = vadd.f32 0.0, %v2870
      %2872 = vmatprep.mubr.f32.mxu0 0.0
      %2873 = vmatmul.mubr.f32.gmra.mrb[0].mxu0 %v2728
      %v2874 = vpop.f32.mrb[0].mxu0
      %v2875 = vadd.f32 0.0, %v2874
      %v2876 = vpop.f32.mrb[0].mxu0
      %v2877 = vadd.f32 0.0, %v2876
      %2878 = vmatprep.mubr.f32.mxu0 0.0
      %2879 = vmatmul.mubr.f32.gmra.mrb[0].mxu0 %v2731
      %v2880 = vpop.f32.mrb[0].mxu0
      %v2881 = vadd.f32 0.0, %v2880
      %v2882 = vpop.f32.mrb[0].mxu0
      %v2883 = vadd.f32 0.0, %v2882
      %2884 = vmatprep.mubr.f32.mxu0 0.0
      %2885 = vmatmul.mubr.f32.gmra.mrb[0].mxu0 %v2734
      %v2886 = vpop.f32.mrb[0].mxu0
      %v2887 = vadd.f32 0.0, %v2886
      %v2888 = vpop.f32.mrb[0].mxu0
      %v2889 = vadd.f32 0.0, %v2888
      %2890 = vmatprep.mubr.f32.mxu0 0.0
      %2891 = vmatmul.mubr.f32.gmra.mrb[0].mxu0 %v2737
      %v2892 = vpop.f32.mrb[0].mxu0
      %v2893 = vadd.f32 0.0, %v2892
      %v2894 = vpop.f32.mrb[0].mxu0
      %v2895 = vadd.f32 0.0, %v2894
      %2896 = vmatprep.mubr.f32.mxu0 0.0
      %2897 = vmatmul.mubr.f32.gmra.mrb[0].mxu0 %v2740
      %v2898 = vpop.f32.mrb[0].mxu0
      %v2899 = vadd.f32 0.0, %v2898
      %v2900 = vpop.f32.mrb[0].mxu0
      %v2901 = vadd.f32 0.0, %v2900
      %2902 = vdwg.mxu0
      %v2903 = vadd.f32 %v2623, %v2809
      %v2904 = vadd.f32 %v2624, %v2811
      %v2905 = vadd.f32 %v2625, %v2815
      %v2906 = vadd.f32 %v2626, %v2817
      %v2907 = vadd.f32 %v2627, %v2821
      %v2908 = vadd.f32 %v2628, %v2823
      %v2909 = vadd.f32 %v2629, %v2827
      %v2910 = vadd.f32 %v2630, %v2829
      %v2911 = vadd.f32 %v2631, %v2833
      %v2912 = vadd.f32 %v2632, %v2835
      %v2913 = vadd.f32 %v2633, %v2839
      %v2914 = vadd.f32 %v2634, %v2841
      %v2915 = vadd.f32 %v2635, %v2845
      %v2916 = vadd.f32 %v2636, %v2847
      %v2917 = vadd.f32 %v2637, %v2851
      %v2918 = vadd.f32 %v2638, %v2853
      %v2919 = vadd.f32 %v2639, %v2857
      %v2920 = vadd.f32 %v2640, %v2859
      %v2921 = vadd.f32 %v2641, %v2863
      %v2922 = vadd.f32 %v2642, %v2865
      %v2923 = vadd.f32 %v2643, %v2869
      %v2924 = vadd.f32 %v2644, %v2871
      %v2925 = vadd.f32 %v2645, %v2875
      %v2926 = vadd.f32 %v2646, %v2877
      %v2927 = vadd.f32 %v2647, %v2881
      %v2928 = vadd.f32 %v2648, %v2883
      %v2929 = vadd.f32 %v2649, %v2887
      %v2930 = vadd.f32 %v2650, %v2889
      %v2931 = vadd.f32 %v2651, %v2893
      %v2932 = vadd.f32 %v2652, %v2895
      %v2933 = vadd.f32 %v2653, %v2899
      %v2934 = vadd.f32 %v2654, %v2901
      %2936 = vset.pattern.permute.xlu0 0
      %2937 = vperm.xlu0 %2936, %v484
      %v2938 = vpop.permute.xlu0 %2937
      %2941 = vset.pattern.permute.xlu0 0
      %2942 = vperm.xlu0 %2941, %v485
      %v2943 = vpop.permute.xlu0 %2942
      %2946 = vset.pattern.permute.xlu0 0
      %2947 = vperm.xlu0 %2946, %v486
      %v2948 = vpop.permute.xlu0 %2947
      %2951 = vset.pattern.permute.xlu0 0
      %2952 = vperm.xlu0 %2951, %v487
      %v2953 = vpop.permute.xlu0 %2952
      %2956 = vset.pattern.permute.xlu0 0
      %2957 = vperm.xlu0 %2956, %v488
      %v2958 = vpop.permute.xlu0 %2957
      %2961 = vset.pattern.permute.xlu0 0
      %2962 = vperm.xlu0 %2961, %v489
      %v2963 = vpop.permute.xlu0 %2962
      %2966 = vset.pattern.permute.xlu0 0
      %2967 = vperm.xlu0 %2966, %v490
      %v2968 = vpop.permute.xlu0 %2967
      %2971 = vset.pattern.permute.xlu0 0
      %2972 = vperm.xlu0 %2971, %v491
      %v2973 = vpop.permute.xlu0 %2972
      %2976 = vset.pattern.permute.xlu0 0
      %2977 = vperm.xlu0 %2976, %v492
      %v2978 = vpop.permute.xlu0 %2977
      %2981 = vset.pattern.permute.xlu0 0
      %2982 = vperm.xlu0 %2981, %v493
      %v2983 = vpop.permute.xlu0 %2982
      %2986 = vset.pattern.permute.xlu0 0
      %2987 = vperm.xlu0 %2986, %v494
      %v2988 = vpop.permute.xlu0 %2987
      %2991 = vset.pattern.permute.xlu0 0
      %2992 = vperm.xlu0 %2991, %v495
      %v2993 = vpop.permute.xlu0 %2992
      %2996 = vset.pattern.permute.xlu0 0
      %2997 = vperm.xlu0 %2996, %v496
      %v2998 = vpop.permute.xlu0 %2997
      %3001 = vset.pattern.permute.xlu0 0
      %3002 = vperm.xlu0 %3001, %v497
      %v3003 = vpop.permute.xlu0 %3002
      %3006 = vset.pattern.permute.xlu0 0
      %3007 = vperm.xlu0 %3006, %v498
      %v3008 = vpop.permute.xlu0 %3007
      %3011 = vset.pattern.permute.xlu0 0
      %3012 = vperm.xlu0 %3011, %v499
      %v3013 = vpop.permute.xlu0 %3012
      %v3015 = vadd.f32 %v2903, %v2938
      %v3016 = vadd.f32 %v2904, %v2938
      %v3017 = vadd.f32 %v2905, %v2943
      %v3018 = vadd.f32 %v2906, %v2943
      %v3019 = vadd.f32 %v2907, %v2948
      %v3020 = vadd.f32 %v2908, %v2948
      %v3021 = vadd.f32 %v2909, %v2953
      %v3022 = vadd.f32 %v2910, %v2953
      %v3023 = vadd.f32 %v2911, %v2958
      %v3024 = vadd.f32 %v2912, %v2958
      %v3025 = vadd.f32 %v2913, %v2963
      %v3026 = vadd.f32 %v2914, %v2963
      %v3027 = vadd.f32 %v2915, %v2968
      %v3028 = vadd.f32 %v2916, %v2968
      %v3029 = vadd.f32 %v2917, %v2973
      %v3030 = vadd.f32 %v2918, %v2973
      %v3031 = vadd.f32 %v2919, %v2978
      %v3032 = vadd.f32 %v2920, %v2978
      %v3033 = vadd.f32 %v2921, %v2983
      %v3034 = vadd.f32 %v2922, %v2983
      %v3035 = vadd.f32 %v2923, %v2988
      %v3036 = vadd.f32 %v2924, %v2988
      %v3037 = vadd.f32 %v2925, %v2993
      %v3038 = vadd.f32 %v2926, %v2993
      %v3039 = vadd.f32 %v2927, %v2998
      %v3040 = vadd.f32 %v2928, %v2998
      %v3041 = vadd.f32 %v2929, %v3003
      %v3042 = vadd.f32 %v2930, %v3003
      %v3043 = vadd.f32 %v2931, %v3008
      %v3044 = vadd.f32 %v2932, %v3008
      %v3045 = vadd.f32 %v2933, %v3013
      %v3046 = vadd.f32 %v2934, %v3013
      %v3047 = vmax.f32 %v3015, 0.0
      %v3048 = vmax.f32 %v3016, 0.0
      %v3049 = vmax.f32 %v3017, 0.0
      %v3050 = vmax.f32 %v3018, 0.0
      %v3051 = vmax.f32 %v3019, 0.0
      %v3052 = vmax.f32 %v3020, 0.0
      %v3053 = vmax.f32 %v3021, 0.0
      %v3054 = vmax.f32 %v3022, 0.0
      %v3055 = vmax.f32 %v3023, 0.0
      %v3056 = vmax.f32 %v3024, 0.0
      %v3057 = vmax.f32 %v3025, 0.0
      %v3058 = vmax.f32 %v3026, 0.0
      %v3059 = vmax.f32 %v3027, 0.0
      %v3060 = vmax.f32 %v3028, 0.0
      %v3061 = vmax.f32 %v3029, 0.0
      %v3062 = vmax.f32 %v3030, 0.0
      %v3063 = vmax.f32 %v3031, 0.0
      %v3064 = vmax.f32 %v3032, 0.0
      %v3065 = vmax.f32 %v3033, 0.0
      %v3066 = vmax.f32 %v3034, 0.0
      %v3067 = vmax.f32 %v3035, 0.0
      %v3068 = vmax.f32 %v3036, 0.0
      %v3069 = vmax.f32 %v3037, 0.0
      %v3070 = vmax.f32 %v3038, 0.0
      %v3071 = vmax.f32 %v3039, 0.0
      %v3072 = vmax.f32 %v3040, 0.0
      %v3073 = vmax.f32 %v3041, 0.0
      %v3074 = vmax.f32 %v3042, 0.0
      %v3075 = vmax.f32 %v3043, 0.0
      %v3076 = vmax.f32 %v3044, 0.0
      %v3077 = vmax.f32 %v3045, 0.0
      %v3078 = vmax.f32 %v3046, 0.0
      %v3079 = vld [vmem:[%s9] sm:$0xff]
      %3080 = vrot.lane.b32.xlu0 %v3047, 17
      %v3081 = vpop.permute.xlu0 %3080
      %3082 = vrot.lane.b32.xlu0 %v3049, 17
      %v3083 = vpop.permute.xlu0 %3082
      %3084 = vrot.lane.b32.xlu0 %v3051, 17
      %v3085 = vpop.permute.xlu0 %3084
      %3086 = vrot.lane.b32.xlu0 %v3053, 17
      %v3087 = vpop.permute.xlu0 %3086
      %3088 = vrot.lane.b32.xlu0 %v3055, 17
      %v3089 = vpop.permute.xlu0 %3088
      %3090 = vrot.lane.b32.xlu0 %v3057, 17
      %v3091 = vpop.permute.xlu0 %3090
      %3092 = vrot.lane.b32.xlu0 %v3059, 17
      %v3093 = vpop.permute.xlu0 %3092
      %3094 = vrot.lane.b32.xlu0 %v3061, 17
      %v3095 = vpop.permute.xlu0 %3094
      %3096 = vrot.lane.b32.xlu0 %v3063, 17
      %v3097 = vpop.permute.xlu0 %3096
      %3098 = vrot.lane.b32.xlu0 %v3065, 17
      %v3099 = vpop.permute.xlu0 %3098
      %3100 = vrot.lane.b32.xlu0 %v3067, 17
      %v3101 = vpop.permute.xlu0 %3100
      %3102 = vrot.lane.b32.xlu0 %v3069, 17
      %v3103 = vpop.permute.xlu0 %3102
      %3104 = vrot.lane.b32.xlu0 %v3071, 17
      %v3105 = vpop.permute.xlu0 %3104
      %3106 = vrot.lane.b32.xlu0 %v3073, 17
      %v3107 = vpop.permute.xlu0 %3106
      %3108 = vrot.lane.b32.xlu0 %v3075, 17
      %v3109 = vpop.permute.xlu0 %3108
      %3110 = vrot.lane.b32.xlu0 %v3077, 17
      %v3111 = vpop.permute.xlu0 %3110
      %3112 = vrot.lane.b32.xlu0 %v3048, 17
      %v3113 = vpop.permute.xlu0 %3112
      %3114 = vrot.lane.b32.xlu0 %v3050, 17
      %v3115 = vpop.permute.xlu0 %3114
      %3116 = vrot.lane.b32.xlu0 %v3052, 17
      %v3117 = vpop.permute.xlu0 %3116
      %3118 = vrot.lane.b32.xlu0 %v3054, 17
      %v3119 = vpop.permute.xlu0 %3118
      %3120 = vrot.lane.b32.xlu0 %v3056, 17
      %v3121 = vpop.permute.xlu0 %3120
      %3122 = vrot.lane.b32.xlu0 %v3058, 17
      %v3123 = vpop.permute.xlu0 %3122
      %3124 = vrot.lane.b32.xlu0 %v3060, 17
      %v3125 = vpop.permute.xlu0 %3124
      %3126 = vrot.lane.b32.xlu0 %v3062, 17
      %v3127 = vpop.permute.xlu0 %3126
      %3128 = vrot.lane.b32.xlu0 %v3064, 17
      %v3129 = vpop.permute.xlu0 %3128
      %3130 = vrot.lane.b32.xlu0 %v3066, 17
      %v3131 = vpop.permute.xlu0 %3130
      %3132 = vrot.lane.b32.xlu0 %v3068, 17
      %v3133 = vpop.permute.xlu0 %3132
      %3134 = vrot.lane.b32.xlu0 %v3070, 17
      %v3135 = vpop.permute.xlu0 %3134
      %3136 = vrot.lane.b32.xlu0 %v3072, 17
      %v3137 = vpop.permute.xlu0 %3136
      %3138 = vrot.lane.b32.xlu0 %v3074, 17
      %v3139 = vpop.permute.xlu0 %3138
      %3140 = vrot.lane.b32.xlu0 %v3076, 17
      %v3141 = vpop.permute.xlu0 %3140
      %3142 = vrot.lane.b32.xlu0 %v3078, 17
      %v3143 = vpop.permute.xlu0 %3142
      %v3144 = vsel %vm506, %v3081, %v3113
      %v3145 = vsel %vm506, %v3083, %v3115
      %v3146 = vsel %vm506, %v3085, %v3117
      %v3147 = vsel %vm506, %v3087, %v3119
      %v3148 = vsel %vm506, %v3089, %v3121
      %v3149 = vsel %vm506, %v3091, %v3123
      %v3150 = vsel %vm506, %v3093, %v3125
      %v3151 = vsel %vm506, %v3095, %v3127
      %v3152 = vsel %vm506, %v3097, %v3129
      %v3153 = vsel %vm506, %v3099, %v3131
      %v3154 = vsel %vm506, %v3101, %v3133
      %v3155 = vsel %vm506, %v3103, %v3135
      %v3156 = vsel %vm506, %v3105, %v3137
      %v3157 = vsel %vm506, %v3107, %v3139
      %v3158 = vsel %vm506, %v3109, %v3141
      %v3159 = vsel %vm506, %v3111, %v3143
      %v3160 = vsel %vm506, %v3113, %v3081
      %v3161 = vsel %vm506, %v3115, %v3083
      %v3162 = vsel %vm506, %v3117, %v3085
      %v3163 = vsel %vm506, %v3119, %v3087
      %v3164 = vsel %vm506, %v3121, %v3089
      %v3165 = vsel %vm506, %v3123, %v3091
      %v3166 = vsel %vm506, %v3125, %v3093
      %v3167 = vsel %vm506, %v3127, %v3095
      %v3168 = vsel %vm506, %v3129, %v3097
      %v3169 = vsel %vm506, %v3131, %v3099
      %v3170 = vsel %vm506, %v3133, %v3101
      %v3171 = vsel %vm506, %v3135, %v3103
      %v3172 = vsel %vm506, %v3137, %v3105
      %v3173 = vsel %vm506, %v3139, %v3107
      %v3174 = vsel %vm506, %v3141, %v3109
      %v3175 = vsel %vm506, %v3143, %v3111
      %v3176 = vmul.f32 %v3160, %v514
      %v3177 = vmul.f32 %v3144, %v518
      %v3178 = vmul.f32 %v3161, %v514
      %v3179 = vmul.f32 %v3145, %v518
      %v3180 = vmul.f32 %v3162, %v514
      %v3181 = vmul.f32 %v3146, %v518
      %v3182 = vmul.f32 %v3163, %v514
      %v3183 = vmul.f32 %v3147, %v518
      %v3184 = vmul.f32 %v3164, %v514
      %v3185 = vmul.f32 %v3148, %v518
      %v3186 = vmul.f32 %v3165, %v514
      %v3187 = vmul.f32 %v3149, %v518
      %v3188 = vmul.f32 %v3166, %v514
      %v3189 = vmul.f32 %v3150, %v518
      %v3190 = vmul.f32 %v3167, %v514
      %v3191 = vmul.f32 %v3151, %v518
      %v3192 = vmul.f32 %v3168, %v514
      %v3193 = vmul.f32 %v3152, %v518
      %v3194 = vmul.f32 %v3169, %v514
      %v3195 = vmul.f32 %v3153, %v518
      %v3196 = vmul.f32 %v3170, %v514
      %v3197 = vmul.f32 %v3154, %v518
      %v3198 = vmul.f32 %v3171, %v514
      %v3199 = vmul.f32 %v3155, %v518
      %v3200 = vmul.f32 %v3172, %v514
      %v3201 = vmul.f32 %v3156, %v518
      %v3202 = vmul.f32 %v3173, %v514
      %v3203 = vmul.f32 %v3157, %v518
      %v3204 = vmul.f32 %v3174, %v514
      %v3205 = vmul.f32 %v3158, %v518
      %v3206 = vmul.f32 %v3175, %v514
      %v3207 = vmul.f32 %v3159, %v518
      %v3208 = vld [vmem:[%s8] sm:$0xff]
      %3209 = vrot.lane.b32.xlu0 %v3047, 16
      %v3210 = vpop.permute.xlu0 %3209
      %3211 = vrot.lane.b32.xlu0 %v3049, 16
      %v3212 = vpop.permute.xlu0 %3211
      %3213 = vrot.lane.b32.xlu0 %v3051, 16
      %v3214 = vpop.permute.xlu0 %3213
      %3215 = vrot.lane.b32.xlu0 %v3053, 16
      %v3216 = vpop.permute.xlu0 %3215
      %3217 = vrot.lane.b32.xlu0 %v3055, 16
      %v3218 = vpop.permute.xlu0 %3217
      %3219 = vrot.lane.b32.xlu0 %v3057, 16
      %v3220 = vpop.permute.xlu0 %3219
      %3221 = vrot.lane.b32.xlu0 %v3059, 16
      %v3222 = vpop.permute.xlu0 %3221
      %3223 = vrot.lane.b32.xlu0 %v3061, 16
      %v3224 = vpop.permute.xlu0 %3223
      %3225 = vrot.lane.b32.xlu0 %v3063, 16
      %v3226 = vpop.permute.xlu0 %3225
      %3227 = vrot.lane.b32.xlu0 %v3065, 16
      %v3228 = vpop.permute.xlu0 %3227
      %3229 = vrot.lane.b32.xlu0 %v3067, 16
      %v3230 = vpop.permute.xlu0 %3229
      %3231 = vrot.lane.b32.xlu0 %v3069, 16
      %v3232 = vpop.permute.xlu0 %3231
      %3233 = vrot.lane.b32.xlu0 %v3071, 16
      %v3234 = vpop.permute.xlu0 %3233
      %3235 = vrot.lane.b32.xlu0 %v3073, 16
      %v3236 = vpop.permute.xlu0 %3235
      %3237 = vrot.lane.b32.xlu0 %v3075, 16
      %v3238 = vpop.permute.xlu0 %3237
      %3239 = vrot.lane.b32.xlu0 %v3077, 16
      %v3240 = vpop.permute.xlu0 %3239
      %3241 = vrot.lane.b32.xlu0 %v3048, 16
      %v3242 = vpop.permute.xlu0 %3241
      %3243 = vrot.lane.b32.xlu0 %v3050, 16
      %v3244 = vpop.permute.xlu0 %3243
      %3245 = vrot.lane.b32.xlu0 %v3052, 16
      %v3246 = vpop.permute.xlu0 %3245
      %3247 = vrot.lane.b32.xlu0 %v3054, 16
      %v3248 = vpop.permute.xlu0 %3247
      %3249 = vrot.lane.b32.xlu0 %v3056, 16
      %v3250 = vpop.permute.xlu0 %3249
      %3251 = vrot.lane.b32.xlu0 %v3058, 16
      %v3252 = vpop.permute.xlu0 %3251
      %3253 = vrot.lane.b32.xlu0 %v3060, 16
      %v3254 = vpop.permute.xlu0 %3253
      %3255 = vrot.lane.b32.xlu0 %v3062, 16
      %v3256 = vpop.permute.xlu0 %3255
      %3257 = vrot.lane.b32.xlu0 %v3064, 16
      %v3258 = vpop.permute.xlu0 %3257
      %3259 = vrot.lane.b32.xlu0 %v3066, 16
      %v3260 = vpop.permute.xlu0 %3259
      %3261 = vrot.lane.b32.xlu0 %v3068, 16
      %v3262 = vpop.permute.xlu0 %3261
      %3263 = vrot.lane.b32.xlu0 %v3070, 16
      %v3264 = vpop.permute.xlu0 %3263
      %3265 = vrot.lane.b32.xlu0 %v3072, 16
      %v3266 = vpop.permute.xlu0 %3265
      %3267 = vrot.lane.b32.xlu0 %v3074, 16
      %v3268 = vpop.permute.xlu0 %3267
      %3269 = vrot.lane.b32.xlu0 %v3076, 16
      %v3270 = vpop.permute.xlu0 %3269
      %3271 = vrot.lane.b32.xlu0 %v3078, 16
      %v3272 = vpop.permute.xlu0 %3271
      %v3273 = vsel %vm543, %v3210, %v3242
      %v3274 = vsel %vm543, %v3212, %v3244
      %v3275 = vsel %vm543, %v3214, %v3246
      %v3276 = vsel %vm543, %v3216, %v3248
      %v3277 = vsel %vm543, %v3218, %v3250
      %v3278 = vsel %vm543, %v3220, %v3252
      %v3279 = vsel %vm543, %v3222, %v3254
      %v3280 = vsel %vm543, %v3224, %v3256
      %v3281 = vsel %vm543, %v3226, %v3258
      %v3282 = vsel %vm543, %v3228, %v3260
      %v3283 = vsel %vm543, %v3230, %v3262
      %v3284 = vsel %vm543, %v3232, %v3264
      %v3285 = vsel %vm543, %v3234, %v3266
      %v3286 = vsel %vm543, %v3236, %v3268
      %v3287 = vsel %vm543, %v3238, %v3270
      %v3288 = vsel %vm543, %v3240, %v3272
      %v3289 = vsel %vm543, %v3242, %v3210
      %v3290 = vsel %vm543, %v3244, %v3212
      %v3291 = vsel %vm543, %v3246, %v3214
      %v3292 = vsel %vm543, %v3248, %v3216
      %v3293 = vsel %vm543, %v3250, %v3218
      %v3294 = vsel %vm543, %v3252, %v3220
      %v3295 = vsel %vm543, %v3254, %v3222
      %v3296 = vsel %vm543, %v3256, %v3224
      %v3297 = vsel %vm543, %v3258, %v3226
      %v3298 = vsel %vm543, %v3260, %v3228
      %v3299 = vsel %vm543, %v3262, %v3230
      %v3300 = vsel %vm543, %v3264, %v3232
      %v3301 = vsel %vm543, %v3266, %v3234
      %v3302 = vsel %vm543, %v3268, %v3236
      %v3303 = vsel %vm543, %v3270, %v3238
      %v3304 = vsel %vm543, %v3272, %v3240
      %v3305 = vmul.f32 %v3289, %v552
      %v3306 = vmul.f32 %v3273, %v556
      %v3307 = vmul.f32 %v3290, %v552
      %v3308 = vmul.f32 %v3274, %v556
      %v3309 = vmul.f32 %v3291, %v552
      %v3310 = vmul.f32 %v3275, %v556
      %v3311 = vmul.f32 %v3292, %v552
      %v3312 = vmul.f32 %v3276, %v556
      %v3313 = vmul.f32 %v3293, %v552
      %v3314 = vmul.f32 %v3277, %v556
      %v3315 = vmul.f32 %v3294, %v552
      %v3316 = vmul.f32 %v3278, %v556
      %v3317 = vmul.f32 %v3295, %v552
      %v3318 = vmul.f32 %v3279, %v556
      %v3319 = vmul.f32 %v3296, %v552
      %v3320 = vmul.f32 %v3280, %v556
      %v3321 = vmul.f32 %v3297, %v552
      %v3322 = vmul.f32 %v3281, %v556
      %v3323 = vmul.f32 %v3298, %v552
      %v3324 = vmul.f32 %v3282, %v556
      %v3325 = vmul.f32 %v3299, %v552
      %v3326 = vmul.f32 %v3283, %v556
      %v3327 = vmul.f32 %v3300, %v552
      %v3328 = vmul.f32 %v3284, %v556
      %v3329 = vmul.f32 %v3301, %v552
      %v3330 = vmul.f32 %v3285, %v556
      %v3331 = vmul.f32 %v3302, %v552
      %v3332 = vmul.f32 %v3286, %v556
      %v3333 = vmul.f32 %v3303, %v552
      %v3334 = vmul.f32 %v3287, %v556
      %v3335 = vmul.f32 %v3304, %v552
      %v3336 = vmul.f32 %v3288, %v556
      %s3337 = scalar_lea.vmem %s8, 8
      %v3338 = vld [vmem:[%s3337] sm:$0xff]
      %3339 = vmatprep.subr.mxu0 %v3306
      %3340 = vmatpush1.msra.mxu0 %v3305
      %3341 = vmatprep.subr.mxu0 %v3308
      %3342 = vmatpush1.msra.mxu0 %v3307
      %3343 = vmatprep.subr.mxu0 %v3310
      %3344 = vmatpush1.msra.mxu0 %v3309
      %3345 = vmatprep.subr.mxu0 %v3312
      %3346 = vmatpush1.msra.mxu0 %v3311
      %3347 = vmatprep.subr.mxu0 %v3314
      %3348 = vmatpush1.msra.mxu0 %v3313
      %3349 = vmatprep.subr.mxu0 %v3316
      %3350 = vmatpush1.msra.mxu0 %v3315
      %3351 = vmatprep.subr.mxu0 %v3318
      %3352 = vmatpush1.msra.mxu0 %v3317
      %3353 = vmatprep.subr.mxu0 %v3320
      %3354 = vmatpush1.msra.mxu0 %v3319
      %3355 = vmatprep.subr.mxu0 %v3322
      %3356 = vmatpush1.msra.mxu0 %v3321
      %3357 = vmatprep.subr.mxu0 %v3324
      %3358 = vmatpush1.msra.mxu0 %v3323
      %3359 = vmatprep.subr.mxu0 %v3326
      %3360 = vmatpush1.msra.mxu0 %v3325
      %3361 = vmatprep.subr.mxu0 %v3328
      %3362 = vmatpush1.msra.mxu0 %v3327
      %3363 = vmatprep.subr.mxu0 %v3330
      %3364 = vmatpush1.msra.mxu0 %v3329
      %3365 = vmatprep.subr.mxu0 %v3332
      %3366 = vmatpush1.msra.mxu0 %v3331
      %3367 = vmatprep.subr.mxu0 %v3334
      %3368 = vmatpush1.msra.mxu0 %v3333
      %3369 = vmatprep.subr.mxu0 %v3336
      %3370 = vmatpush1.msra.mxu0 %v3335
      %3371 = vmatprep.subr.mxu0 0.0
      %3372 = vmatpush1.msra.mxu0 0.0
      %3373 = vmatprep.subr.mxu0 0.0
      %3374 = vmatpush1.msra.mxu0 0.0
      %3375 = vmatprep.subr.mxu0 0.0
      %3376 = vmatpush1.msra.mxu0 0.0
      %3377 = vmatprep.subr.mxu0 0.0
      %3378 = vmatpush1.msra.mxu0 0.0
      %3379 = vmatprep.subr.mxu0 0.0
      %3380 = vmatpush1.msra.mxu0 0.0
      %3381 = vmatprep.subr.mxu0 0.0
      %3382 = vmatpush1.msra.mxu0 0.0
      %3383 = vmatprep.subr.mxu0 0.0
      %3384 = vmatpush1.msra.mxu0 0.0
      %3385 = vmatprep.subr.mxu0 0.0
      %3386 = vmatpush1.msra.mxu0 0.0
      %3387 = vmatprep.subr.mxu0 0.0
      %3388 = vmatpush1.msra.mxu0 0.0
      %3389 = vmatprep.subr.mxu0 0.0
      %3390 = vmatpush1.msra.mxu0 0.0
      %3391 = vmatprep.subr.mxu0 0.0
      %3392 = vmatpush1.msra.mxu0 0.0
      %3393 = vmatprep.subr.mxu0 0.0
      %3394 = vmatpush1.msra.mxu0 0.0
      %3395 = vmatprep.subr.mxu0 0.0
      %3396 = vmatpush1.msra.mxu0 0.0
      %3397 = vmatprep.subr.mxu0 0.0
      %3398 = vmatpush1.msra.mxu0 0.0
      %3399 = vmatprep.subr.mxu0 0.0
      %3400 = vmatpush1.msra.mxu0 0.0
      %3401 = vmatprep.subr.mxu0 0.0
      %3402 = vmatpush1.msra.mxu0 0.0
      %3403 = vmatprep.mubr.f32.mxu0 0.0
      %3404 = vmatmul.mubr.f32.gmra.mrb[0].mxu0 %v3338
      %v3405 = vpop.f32.mrb[0].mxu0
      %v3406 = vadd.f32 0.0, %v3405
      %v3407 = vpop.f32.mrb[0].mxu0
      %v3408 = vadd.f32 0.0, %v3407
      %3409 = vdwg.mxu0
      %3410 = vmatprep.subr.mxu0 %v3177
      %3411 = vmatpush1.msra.mxu0 %v3176
      %3412 = vmatprep.subr.mxu0 %v3179
      %3413 = vmatpush1.msra.mxu0 %v3178
      %3414 = vmatprep.subr.mxu0 %v3181
      %3415 = vmatpush1.msra.mxu0 %v3180
      %3416 = vmatprep.subr.mxu0 %v3183
      %3417 = vmatpush1.msra.mxu0 %v3182
      %3418 = vmatprep.subr.mxu0 %v3185
      %3419 = vmatpush1.msra.mxu0 %v3184
      %3420 = vmatprep.subr.mxu0 %v3187
      %3421 = vmatpush1.msra.mxu0 %v3186
      %3422 = vmatprep.subr.mxu0 %v3189
      %3423 = vmatpush1.msra.mxu0 %v3188
      %3424 = vmatprep.subr.mxu0 %v3191
      %3425 = vmatpush1.msra.mxu0 %v3190
      %3426 = vmatprep.subr.mxu0 %v3193
      %3427 = vmatpush1.msra.mxu0 %v3192
      %3428 = vmatprep.subr.mxu0 %v3195
      %3429 = vmatpush1.msra.mxu0 %v3194
      %3430 = vmatprep.subr.mxu0 %v3197
      %3431 = vmatpush1.msra.mxu0 %v3196
      %3432 = vmatprep.subr.mxu0 %v3199
      %3433 = vmatpush1.msra.mxu0 %v3198
      %3434 = vmatprep.subr.mxu0 %v3201
      %3435 = vmatpush1.msra.mxu0 %v3200
      %3436 = vmatprep.subr.mxu0 %v3203
      %3437 = vmatpush1.msra.mxu0 %v3202
      %3438 = vmatprep.subr.mxu0 %v3205
      %3439 = vmatpush1.msra.mxu0 %v3204
      %3440 = vmatprep.subr.mxu0 %v3207
      %3441 = vmatpush1.msra.mxu0 %v3206
      %3442 = vmatprep.subr.mxu0 0.0
      %3443 = vmatpush1.msra.mxu0 0.0
      %3444 = vmatprep.subr.mxu0 0.0
      %3445 = vmatpush1.msra.mxu0 0.0
      %3446 = vmatprep.subr.mxu0 0.0
      %3447 = vmatpush1.msra.mxu0 0.0
      %3448 = vmatprep.subr.mxu0 0.0
      %3449 = vmatpush1.msra.mxu0 0.0
      %3450 = vmatprep.subr.mxu0 0.0
      %3451 = vmatpush1.msra.mxu0 0.0
      %3452 = vmatprep.subr.mxu0 0.0
      %3453 = vmatpush1.msra.mxu0 0.0
      %3454 = vmatprep.subr.mxu0 0.0
      %3455 = vmatpush1.msra.mxu0 0.0
      %3456 = vmatprep.subr.mxu0 0.0
      %3457 = vmatpush1.msra.mxu0 0.0
      %3458 = vmatprep.subr.mxu0 0.0
      %3459 = vmatpush1.msra.mxu0 0.0
      %3460 = vmatprep.subr.mxu0 0.0
      %3461 = vmatpush1.msra.mxu0 0.0
      %3462 = vmatprep.subr.mxu0 0.0
      %3463 = vmatpush1.msra.mxu0 0.0
      %3464 = vmatprep.subr.mxu0 0.0
      %3465 = vmatpush1.msra.mxu0 0.0
      %3466 = vmatprep.subr.mxu0 0.0
      %3467 = vmatpush1.msra.mxu0 0.0
      %3468 = vmatprep.subr.mxu0 0.0
      %3469 = vmatpush1.msra.mxu0 0.0
      %3470 = vmatprep.subr.mxu0 0.0
      %3471 = vmatpush1.msra.mxu0 0.0
      %3472 = vmatprep.subr.mxu0 0.0
      %3473 = vmatpush1.msra.mxu0 0.0
      %3474 = vmatprep.mubr.f32.mxu0 0.0
      %3475 = vmatmul.mubr.f32.gmra.mrb[0].mxu0 %v3208
      %v3476 = vpop.f32.mrb[0].mxu0
      %v3477 = vadd.f32 %v3406, %v3476
      %v3478 = vpop.f32.mrb[0].mxu0
      %v3479 = vadd.f32 %v3408, %v3478
      %3480 = vdwg.mxu0
      %3481 = vrot.lane.b32.xlu0 %v3047, 15
      %v3482 = vpop.permute.xlu0 %3481
      %3483 = vrot.lane.b32.xlu0 %v3049, 15
      %v3484 = vpop.permute.xlu0 %3483
      %3485 = vrot.lane.b32.xlu0 %v3051, 15
      %v3486 = vpop.permute.xlu0 %3485
      %3487 = vrot.lane.b32.xlu0 %v3053, 15
      %v3488 = vpop.permute.xlu0 %3487
      %3489 = vrot.lane.b32.xlu0 %v3055, 15
      %v3490 = vpop.permute.xlu0 %3489
      %3491 = vrot.lane.b32.xlu0 %v3057, 15
      %v3492 = vpop.permute.xlu0 %3491
      %3493 = vrot.lane.b32.xlu0 %v3059, 15
      %v3494 = vpop.permute.xlu0 %3493
      %3495 = vrot.lane.b32.xlu0 %v3061, 15
      %v3496 = vpop.permute.xlu0 %3495
      %3497 = vrot.lane.b32.xlu0 %v3063, 15
      %v3498 = vpop.permute.xlu0 %3497
      %3499 = vrot.lane.b32.xlu0 %v3065, 15
      %v3500 = vpop.permute.xlu0 %3499
      %3501 = vrot.lane.b32.xlu0 %v3067, 15
      %v3502 = vpop.permute.xlu0 %3501
      %3503 = vrot.lane.b32.xlu0 %v3069, 15
      %v3504 = vpop.permute.xlu0 %3503
      %3505 = vrot.lane.b32.xlu0 %v3071, 15
      %v3506 = vpop.permute.xlu0 %3505
      %3507 = vrot.lane.b32.xlu0 %v3073, 15
      %v3508 = vpop.permute.xlu0 %3507
      %3509 = vrot.lane.b32.xlu0 %v3075, 15
      %v3510 = vpop.permute.xlu0 %3509
      %3511 = vrot.lane.b32.xlu0 %v3077, 15
      %v3512 = vpop.permute.xlu0 %3511
      %3513 = vrot.lane.b32.xlu0 %v3048, 15
      %v3514 = vpop.permute.xlu0 %3513
      %3515 = vrot.lane.b32.xlu0 %v3050, 15
      %v3516 = vpop.permute.xlu0 %3515
      %3517 = vrot.lane.b32.xlu0 %v3052, 15
      %v3518 = vpop.permute.xlu0 %3517
      %3519 = vrot.lane.b32.xlu0 %v3054, 15
      %v3520 = vpop.permute.xlu0 %3519
      %3521 = vrot.lane.b32.xlu0 %v3056, 15
      %v3522 = vpop.permute.xlu0 %3521
      %3523 = vrot.lane.b32.xlu0 %v3058, 15
      %v3524 = vpop.permute.xlu0 %3523
      %3525 = vrot.lane.b32.xlu0 %v3060, 15
      %v3526 = vpop.permute.xlu0 %3525
      %3527 = vrot.lane.b32.xlu0 %v3062, 15
      %v3528 = vpop.permute.xlu0 %3527
      %3529 = vrot.lane.b32.xlu0 %v3064, 15
      %v3530 = vpop.permute.xlu0 %3529
      %3531 = vrot.lane.b32.xlu0 %v3066, 15
      %v3532 = vpop.permute.xlu0 %3531
      %3533 = vrot.lane.b32.xlu0 %v3068, 15
      %v3534 = vpop.permute.xlu0 %3533
      %3535 = vrot.lane.b32.xlu0 %v3070, 15
      %v3536 = vpop.permute.xlu0 %3535
      %3537 = vrot.lane.b32.xlu0 %v3072, 15
      %v3538 = vpop.permute.xlu0 %3537
      %3539 = vrot.lane.b32.xlu0 %v3074, 15
      %v3540 = vpop.permute.xlu0 %3539
      %3541 = vrot.lane.b32.xlu0 %v3076, 15
      %v3542 = vpop.permute.xlu0 %3541
      %3543 = vrot.lane.b32.xlu0 %v3078, 15
      %v3544 = vpop.permute.xlu0 %3543
      %v3545 = vsel %vm1001, %v3482, %v3514
      %v3546 = vsel %vm1001, %v3484, %v3516
      %v3547 = vsel %vm1001, %v3486, %v3518
      %v3548 = vsel %vm1001, %v3488, %v3520
      %v3549 = vsel %vm1001, %v3490, %v3522
      %v3550 = vsel %vm1001, %v3492, %v3524
      %v3551 = vsel %vm1001, %v3494, %v3526
      %v3552 = vsel %vm1001, %v3496, %v3528
      %v3553 = vsel %vm1001, %v3498, %v3530
      %v3554 = vsel %vm1001, %v3500, %v3532
      %v3555 = vsel %vm1001, %v3502, %v3534
      %v3556 = vsel %vm1001, %v3504, %v3536
      %v3557 = vsel %vm1001, %v3506, %v3538
      %v3558 = vsel %vm1001, %v3508, %v3540
      %v3559 = vsel %vm1001, %v3510, %v3542
      %v3560 = vsel %vm1001, %v3512, %v3544
      %v3561 = vsel %vm1001, %v3514, %v3482
      %v3562 = vsel %vm1001, %v3516, %v3484
      %v3563 = vsel %vm1001, %v3518, %v3486
      %v3564 = vsel %vm1001, %v3520, %v3488
      %v3565 = vsel %vm1001, %v3522, %v3490
      %v3566 = vsel %vm1001, %v3524, %v3492
      %v3567 = vsel %vm1001, %v3526, %v3494
      %v3568 = vsel %vm1001, %v3528, %v3496
      %v3569 = vsel %vm1001, %v3530, %v3498
      %v3570 = vsel %vm1001, %v3532, %v3500
      %v3571 = vsel %vm1001, %v3534, %v3502
      %v3572 = vsel %vm1001, %v3536, %v3504
      %v3573 = vsel %vm1001, %v3538, %v3506
      %v3574 = vsel %vm1001, %v3540, %v3508
      %v3575 = vsel %vm1001, %v3542, %v3510
      %v3576 = vsel %vm1001, %v3544, %v3512
      %v3577 = vmul.f32 %v3561, %v1010
      %v3578 = vmul.f32 %v3545, %v1014
      %v3579 = vmul.f32 %v3562, %v1010
      %v3580 = vmul.f32 %v3546, %v1014
      %v3581 = vmul.f32 %v3563, %v1010
      %v3582 = vmul.f32 %v3547, %v1014
      %v3583 = vmul.f32 %v3564, %v1010
      %v3584 = vmul.f32 %v3548, %v1014
      %v3585 = vmul.f32 %v3565, %v1010
      %v3586 = vmul.f32 %v3549, %v1014
      %v3587 = vmul.f32 %v3566, %v1010
      %v3588 = vmul.f32 %v3550, %v1014
      %v3589 = vmul.f32 %v3567, %v1010
      %v3590 = vmul.f32 %v3551, %v1014
      %v3591 = vmul.f32 %v3568, %v1010
      %v3592 = vmul.f32 %v3552, %v1014
      %v3593 = vmul.f32 %v3569, %v1010
      %v3594 = vmul.f32 %v3553, %v1014
      %v3595 = vmul.f32 %v3570, %v1010
      %v3596 = vmul.f32 %v3554, %v1014
      %v3597 = vmul.f32 %v3571, %v1010
      %v3598 = vmul.f32 %v3555, %v1014
      %v3599 = vmul.f32 %v3572, %v1010
      %v3600 = vmul.f32 %v3556, %v1014
      %v3601 = vmul.f32 %v3573, %v1010
      %v3602 = vmul.f32 %v3557, %v1014
      %v3603 = vmul.f32 %v3574, %v1010
      %v3604 = vmul.f32 %v3558, %v1014
      %v3605 = vmul.f32 %v3575, %v1010
      %v3606 = vmul.f32 %v3559, %v1014
      %v3607 = vmul.f32 %v3576, %v1010
      %v3608 = vmul.f32 %v3560, %v1014
      %s3609 = scalar_lea.vmem %s8, 16
      %v3610 = vld [vmem:[%s3609] sm:$0xff]
      %3611 = vmatprep.subr.mxu0 %v3578
      %3612 = vmatpush1.msra.mxu0 %v3577
      %3613 = vmatprep.subr.mxu0 %v3580
      %3614 = vmatpush1.msra.mxu0 %v3579
      %3615 = vmatprep.subr.mxu0 %v3582
      %3616 = vmatpush1.msra.mxu0 %v3581
      %3617 = vmatprep.subr.mxu0 %v3584
      %3618 = vmatpush1.msra.mxu0 %v3583
      %3619 = vmatprep.subr.mxu0 %v3586
      %3620 = vmatpush1.msra.mxu0 %v3585
      %3621 = vmatprep.subr.mxu0 %v3588
      %3622 = vmatpush1.msra.mxu0 %v3587
      %3623 = vmatprep.subr.mxu0 %v3590
      %3624 = vmatpush1.msra.mxu0 %v3589
      %3625 = vmatprep.subr.mxu0 %v3592
      %3626 = vmatpush1.msra.mxu0 %v3591
      %3627 = vmatprep.subr.mxu0 %v3594
      %3628 = vmatpush1.msra.mxu0 %v3593
      %3629 = vmatprep.subr.mxu0 %v3596
      %3630 = vmatpush1.msra.mxu0 %v3595
      %3631 = vmatprep.subr.mxu0 %v3598
      %3632 = vmatpush1.msra.mxu0 %v3597
      %3633 = vmatprep.subr.mxu0 %v3600
      %3634 = vmatpush1.msra.mxu0 %v3599
      %3635 = vmatprep.subr.mxu0 %v3602
      %3636 = vmatpush1.msra.mxu0 %v3601
      %3637 = vmatprep.subr.mxu0 %v3604
      %3638 = vmatpush1.msra.mxu0 %v3603
      %3639 = vmatprep.subr.mxu0 %v3606
      %3640 = vmatpush1.msra.mxu0 %v3605
      %3641 = vmatprep.subr.mxu0 %v3608
      %3642 = vmatpush1.msra.mxu0 %v3607
      %3643 = vmatprep.subr.mxu0 0.0
      %3644 = vmatpush1.msra.mxu0 0.0
      %3645 = vmatprep.subr.mxu0 0.0
      %3646 = vmatpush1.msra.mxu0 0.0
      %3647 = vmatprep.subr.mxu0 0.0
      %3648 = vmatpush1.msra.mxu0 0.0
      %3649 = vmatprep.subr.mxu0 0.0
      %3650 = vmatpush1.msra.mxu0 0.0
      %3651 = vmatprep.subr.mxu0 0.0
      %3652 = vmatpush1.msra.mxu0 0.0
      %3653 = vmatprep.subr.mxu0 0.0
      %3654 = vmatpush1.msra.mxu0 0.0
      %3655 = vmatprep.subr.mxu0 0.0
      %3656 = vmatpush1.msra.mxu0 0.0
      %3657 = vmatprep.subr.mxu0 0.0
      %3658 = vmatpush1.msra.mxu0 0.0
      %3659 = vmatprep.subr.mxu0 0.0
      %3660 = vmatpush1.msra.mxu0 0.0
      %3661 = vmatprep.subr.mxu0 0.0
      %3662 = vmatpush1.msra.mxu0 0.0
      %3663 = vmatprep.subr.mxu0 0.0
      %3664 = vmatpush1.msra.mxu0 0.0
      %3665 = vmatprep.subr.mxu0 0.0
      %3666 = vmatpush1.msra.mxu0 0.0
      %3667 = vmatprep.subr.mxu0 0.0
      %3668 = vmatpush1.msra.mxu0 0.0
      %3669 = vmatprep.subr.mxu0 0.0
      %3670 = vmatpush1.msra.mxu0 0.0
      %3671 = vmatprep.subr.mxu0 0.0
      %3672 = vmatpush1.msra.mxu0 0.0
      %3673 = vmatprep.subr.mxu0 0.0
      %3674 = vmatpush1.msra.mxu0 0.0
      %3675 = vmatprep.mubr.f32.mxu0 0.0
      %3676 = vmatmul.mubr.f32.gmra.mrb[0].mxu0 %v3610
      %v3677 = vpop.f32.mrb[0].mxu0
      %v3678 = vadd.f32 0.0, %v3677
      %v3679 = vpop.f32.mrb[0].mxu0
      %v3680 = vadd.f32 0.0, %v3679
      %3681 = vdwg.mxu0
      %v3682 = vadd.f32 %v3477, %v3678
      %v3683 = vadd.f32 %v3479, %v3680
      %3684 = vrot.lane.b32.xlu0 %v3047, 1
      %v3685 = vpop.permute.xlu0 %3684
      %3686 = vrot.lane.b32.xlu0 %v3049, 1
      %v3687 = vpop.permute.xlu0 %3686
      %3688 = vrot.lane.b32.xlu0 %v3051, 1
      %v3689 = vpop.permute.xlu0 %3688
      %3690 = vrot.lane.b32.xlu0 %v3053, 1
      %v3691 = vpop.permute.xlu0 %3690
      %3692 = vrot.lane.b32.xlu0 %v3055, 1
      %v3693 = vpop.permute.xlu0 %3692
      %3694 = vrot.lane.b32.xlu0 %v3057, 1
      %v3695 = vpop.permute.xlu0 %3694
      %3696 = vrot.lane.b32.xlu0 %v3059, 1
      %v3697 = vpop.permute.xlu0 %3696
      %3698 = vrot.lane.b32.xlu0 %v3061, 1
      %v3699 = vpop.permute.xlu0 %3698
      %3700 = vrot.lane.b32.xlu0 %v3063, 1
      %v3701 = vpop.permute.xlu0 %3700
      %3702 = vrot.lane.b32.xlu0 %v3065, 1
      %v3703 = vpop.permute.xlu0 %3702
      %3704 = vrot.lane.b32.xlu0 %v3067, 1
      %v3705 = vpop.permute.xlu0 %3704
      %3706 = vrot.lane.b32.xlu0 %v3069, 1
      %v3707 = vpop.permute.xlu0 %3706
      %3708 = vrot.lane.b32.xlu0 %v3071, 1
      %v3709 = vpop.permute.xlu0 %3708
      %3710 = vrot.lane.b32.xlu0 %v3073, 1
      %v3711 = vpop.permute.xlu0 %3710
      %3712 = vrot.lane.b32.xlu0 %v3075, 1
      %v3713 = vpop.permute.xlu0 %3712
      %3714 = vrot.lane.b32.xlu0 %v3077, 1
      %v3715 = vpop.permute.xlu0 %3714
      %3716 = vrot.lane.b32.xlu0 %v3048, 1
      %v3717 = vpop.permute.xlu0 %3716
      %3718 = vrot.lane.b32.xlu0 %v3050, 1
      %v3719 = vpop.permute.xlu0 %3718
      %3720 = vrot.lane.b32.xlu0 %v3052, 1
      %v3721 = vpop.permute.xlu0 %3720
      %3722 = vrot.lane.b32.xlu0 %v3054, 1
      %v3723 = vpop.permute.xlu0 %3722
      %3724 = vrot.lane.b32.xlu0 %v3056, 1
      %v3725 = vpop.permute.xlu0 %3724
      %3726 = vrot.lane.b32.xlu0 %v3058, 1
      %v3727 = vpop.permute.xlu0 %3726
      %3728 = vrot.lane.b32.xlu0 %v3060, 1
      %v3729 = vpop.permute.xlu0 %3728
      %3730 = vrot.lane.b32.xlu0 %v3062, 1
      %v3731 = vpop.permute.xlu0 %3730
      %3732 = vrot.lane.b32.xlu0 %v3064, 1
      %v3733 = vpop.permute.xlu0 %3732
      %3734 = vrot.lane.b32.xlu0 %v3066, 1
      %v3735 = vpop.permute.xlu0 %3734
      %3736 = vrot.lane.b32.xlu0 %v3068, 1
      %v3737 = vpop.permute.xlu0 %3736
      %3738 = vrot.lane.b32.xlu0 %v3070, 1
      %v3739 = vpop.permute.xlu0 %3738
      %3740 = vrot.lane.b32.xlu0 %v3072, 1
      %v3741 = vpop.permute.xlu0 %3740
      %3742 = vrot.lane.b32.xlu0 %v3074, 1
      %v3743 = vpop.permute.xlu0 %3742
      %3744 = vrot.lane.b32.xlu0 %v3076, 1
      %v3745 = vpop.permute.xlu0 %3744
      %3746 = vrot.lane.b32.xlu0 %v3078, 1
      %v3747 = vpop.permute.xlu0 %3746
      %v3748 = vsel %vm1281, %v3685, %v3717
      %v3749 = vsel %vm1281, %v3687, %v3719
      %v3750 = vsel %vm1281, %v3689, %v3721
      %v3751 = vsel %vm1281, %v3691, %v3723
      %v3752 = vsel %vm1281, %v3693, %v3725
      %v3753 = vsel %vm1281, %v3695, %v3727
      %v3754 = vsel %vm1281, %v3697, %v3729
      %v3755 = vsel %vm1281, %v3699, %v3731
      %v3756 = vsel %vm1281, %v3701, %v3733
      %v3757 = vsel %vm1281, %v3703, %v3735
      %v3758 = vsel %vm1281, %v3705, %v3737
      %v3759 = vsel %vm1281, %v3707, %v3739
      %v3760 = vsel %vm1281, %v3709, %v3741
      %v3761 = vsel %vm1281, %v3711, %v3743
      %v3762 = vsel %vm1281, %v3713, %v3745
      %v3763 = vsel %vm1281, %v3715, %v3747
      %v3764 = vsel %vm1281, %v3717, %v3685
      %v3765 = vsel %vm1281, %v3719, %v3687
      %v3766 = vsel %vm1281, %v3721, %v3689
      %v3767 = vsel %vm1281, %v3723, %v3691
      %v3768 = vsel %vm1281, %v3725, %v3693
      %v3769 = vsel %vm1281, %v3727, %v3695
      %v3770 = vsel %vm1281, %v3729, %v3697
      %v3771 = vsel %vm1281, %v3731, %v3699
      %v3772 = vsel %vm1281, %v3733, %v3701
      %v3773 = vsel %vm1281, %v3735, %v3703
      %v3774 = vsel %vm1281, %v3737, %v3705
      %v3775 = vsel %vm1281, %v3739, %v3707
      %v3776 = vsel %vm1281, %v3741, %v3709
      %v3777 = vsel %vm1281, %v3743, %v3711
      %v3778 = vsel %vm1281, %v3745, %v3713
      %v3779 = vsel %vm1281, %v3747, %v3715
      %v3780 = vmul.f32 %v3764, %v1290
      %v3781 = vmul.f32 %v3748, %v1294
      %v3782 = vmul.f32 %v3765, %v1290
      %v3783 = vmul.f32 %v3749, %v1294
      %v3784 = vmul.f32 %v3766, %v1290
      %v3785 = vmul.f32 %v3750, %v1294
      %v3786 = vmul.f32 %v3767, %v1290
      %v3787 = vmul.f32 %v3751, %v1294
      %v3788 = vmul.f32 %v3768, %v1290
      %v3789 = vmul.f32 %v3752, %v1294
      %v3790 = vmul.f32 %v3769, %v1290
      %v3791 = vmul.f32 %v3753, %v1294
      %v3792 = vmul.f32 %v3770, %v1290
      %v3793 = vmul.f32 %v3754, %v1294
      %v3794 = vmul.f32 %v3771, %v1290
      %v3795 = vmul.f32 %v3755, %v1294
      %v3796 = vmul.f32 %v3772, %v1290
      %v3797 = vmul.f32 %v3756, %v1294
      %v3798 = vmul.f32 %v3773, %v1290
      %v3799 = vmul.f32 %v3757, %v1294
      %v3800 = vmul.f32 %v3774, %v1290
      %v3801 = vmul.f32 %v3758, %v1294
      %v3802 = vmul.f32 %v3775, %v1290
      %v3803 = vmul.f32 %v3759, %v1294
      %v3804 = vmul.f32 %v3776, %v1290
      %v3805 = vmul.f32 %v3760, %v1294
      %v3806 = vmul.f32 %v3777, %v1290
      %v3807 = vmul.f32 %v3761, %v1294
      %v3808 = vmul.f32 %v3778, %v1290
      %v3809 = vmul.f32 %v3762, %v1294
      %v3810 = vmul.f32 %v3779, %v1290
      %v3811 = vmul.f32 %v3763, %v1294
      %s3812 = scalar_lea.vmem %s8, 24
      %v3813 = vld [vmem:[%s3812] sm:$0xff]
      %3814 = vmatprep.subr.mxu0 %v3781
      %3815 = vmatpush1.msra.mxu0 %v3780
      %3816 = vmatprep.subr.mxu0 %v3783
      %3817 = vmatpush1.msra.mxu0 %v3782
      %3818 = vmatprep.subr.mxu0 %v3785
      %3819 = vmatpush1.msra.mxu0 %v3784
      %3820 = vmatprep.subr.mxu0 %v3787
      %3821 = vmatpush1.msra.mxu0 %v3786
      %3822 = vmatprep.subr.mxu0 %v3789
      %3823 = vmatpush1.msra.mxu0 %v3788
      %3824 = vmatprep.subr.mxu0 %v3791
      %3825 = vmatpush1.msra.mxu0 %v3790
      %3826 = vmatprep.subr.mxu0 %v3793
      %3827 = vmatpush1.msra.mxu0 %v3792
      %3828 = vmatprep.subr.mxu0 %v3795
      %3829 = vmatpush1.msra.mxu0 %v3794
      %3830 = vmatprep.subr.mxu0 %v3797
      %3831 = vmatpush1.msra.mxu0 %v3796
      %3832 = vmatprep.subr.mxu0 %v3799
      %3833 = vmatpush1.msra.mxu0 %v3798
      %3834 = vmatprep.subr.mxu0 %v3801
      %3835 = vmatpush1.msra.mxu0 %v3800
      %3836 = vmatprep.subr.mxu0 %v3803
      %3837 = vmatpush1.msra.mxu0 %v3802
      %3838 = vmatprep.subr.mxu0 %v3805
      %3839 = vmatpush1.msra.mxu0 %v3804
      %3840 = vmatprep.subr.mxu0 %v3807
      %3841 = vmatpush1.msra.mxu0 %v3806
      %3842 = vmatprep.subr.mxu0 %v3809
      %3843 = vmatpush1.msra.mxu0 %v3808
      %3844 = vmatprep.subr.mxu0 %v3811
      %3845 = vmatpush1.msra.mxu0 %v3810
      %3846 = vmatprep.subr.mxu0 0.0
      %3847 = vmatpush1.msra.mxu0 0.0
      %3848 = vmatprep.subr.mxu0 0.0
      %3849 = vmatpush1.msra.mxu0 0.0
      %3850 = vmatprep.subr.mxu0 0.0
      %3851 = vmatpush1.msra.mxu0 0.0
      %3852 = vmatprep.subr.mxu0 0.0
      %3853 = vmatpush1.msra.mxu0 0.0
      %3854 = vmatprep.subr.mxu0 0.0
      %3855 = vmatpush1.msra.mxu0 0.0
      %3856 = vmatprep.subr.mxu0 0.0
      %3857 = vmatpush1.msra.mxu0 0.0
      %3858 = vmatprep.subr.mxu0 0.0
      %3859 = vmatpush1.msra.mxu0 0.0
      %3860 = vmatprep.subr.mxu0 0.0
      %3861 = vmatpush1.msra.mxu0 0.0
      %3862 = vmatprep.subr.mxu0 0.0
      %3863 = vmatpush1.msra.mxu0 0.0
      %3864 = vmatprep.subr.mxu0 0.0
      %3865 = vmatpush1.msra.mxu0 0.0
      %3866 = vmatprep.subr.mxu0 0.0
      %3867 = vmatpush1.msra.mxu0 0.0
      %3868 = vmatprep.subr.mxu0 0.0
      %3869 = vmatpush1.msra.mxu0 0.0
      %3870 = vmatprep.subr.mxu0 0.0
      %3871 = vmatpush1.msra.mxu0 0.0
      %3872 = vmatprep.subr.mxu0 0.0
      %3873 = vmatpush1.msra.mxu0 0.0
      %3874 = vmatprep.subr.mxu0 0.0
      %3875 = vmatpush1.msra.mxu0 0.0
      %3876 = vmatprep.subr.mxu0 0.0
      %3877 = vmatpush1.msra.mxu0 0.0
      %3878 = vmatprep.mubr.f32.mxu0 0.0
      %3879 = vmatmul.mubr.f32.gmra.mrb[0].mxu0 %v3813
      %v3880 = vpop.f32.mrb[0].mxu0
      %v3881 = vadd.f32 0.0, %v3880
      %v3882 = vpop.f32.mrb[0].mxu0
      %v3883 = vadd.f32 0.0, %v3882
      %3884 = vdwg.mxu0
      %v3885 = vadd.f32 %v3682, %v3881
      %v3886 = vadd.f32 %v3683, %v3883
      %s3887 = scalar_lea.vmem %s8, 32
      %v3888 = vld [vmem:[%s3887] sm:$0xff]
      %3889 = vmatprep.subr.mxu0 %v3048
      %3890 = vmatpush1.msra.mxu0 %v3047
      %3891 = vmatprep.subr.mxu0 %v3050
      %3892 = vmatpush1.msra.mxu0 %v3049
      %3893 = vmatprep.subr.mxu0 %v3052
      %3894 = vmatpush1.msra.mxu0 %v3051
      %3895 = vmatprep.subr.mxu0 %v3054
      %3896 = vmatpush1.msra.mxu0 %v3053
      %3897 = vmatprep.subr.mxu0 %v3056
      %3898 = vmatpush1.msra.mxu0 %v3055
      %3899 = vmatprep.subr.mxu0 %v3058
      %3900 = vmatpush1.msra.mxu0 %v3057
      %3901 = vmatprep.subr.mxu0 %v3060
      %3902 = vmatpush1.msra.mxu0 %v3059
      %3903 = vmatprep.subr.mxu0 %v3062
      %3904 = vmatpush1.msra.mxu0 %v3061
      %3905 = vmatprep.subr.mxu0 %v3064
      %3906 = vmatpush1.msra.mxu0 %v3063
      %3907 = vmatprep.subr.mxu0 %v3066
      %3908 = vmatpush1.msra.mxu0 %v3065
      %3909 = vmatprep.subr.mxu0 %v3068
      %3910 = vmatpush1.msra.mxu0 %v3067
      %3911 = vmatprep.subr.mxu0 %v3070
      %3912 = vmatpush1.msra.mxu0 %v3069
      %3913 = vmatprep.subr.mxu0 %v3072
      %3914 = vmatpush1.msra.mxu0 %v3071
      %3915 = vmatprep.subr.mxu0 %v3074
      %3916 = vmatpush1.msra.mxu0 %v3073
      %3917 = vmatprep.subr.mxu0 %v3076
      %3918 = vmatpush1.msra.mxu0 %v3075
      %3919 = vmatprep.subr.mxu0 %v3078
      %3920 = vmatpush1.msra.mxu0 %v3077
      %3921 = vmatprep.subr.mxu0 0.0
      %3922 = vmatpush1.msra.mxu0 0.0
      %3923 = vmatprep.subr.mxu0 0.0
      %3924 = vmatpush1.msra.mxu0 0.0
      %3925 = vmatprep.subr.mxu0 0.0
      %3926 = vmatpush1.msra.mxu0 0.0
      %3927 = vmatprep.subr.mxu0 0.0
      %3928 = vmatpush1.msra.mxu0 0.0
      %3929 = vmatprep.subr.mxu0 0.0
      %3930 = vmatpush1.msra.mxu0 0.0
      %3931 = vmatprep.subr.mxu0 0.0
      %3932 = vmatpush1.msra.mxu0 0.0
      %3933 = vmatprep.subr.mxu0 0.0
      %3934 = vmatpush1.msra.mxu0 0.0
      %3935 = vmatprep.subr.mxu0 0.0
      %3936 = vmatpush1.msra.mxu0 0.0
      %3937 = vmatprep.subr.mxu0 0.0
      %3938 = vmatpush1.msra.mxu0 0.0
      %3939 = vmatprep.subr.mxu0 0.0
      %3940 = vmatpush1.msra.mxu0 0.0
      %3941 = vmatprep.subr.mxu0 0.0
      %3942 = vmatpush1.msra.mxu0 0.0
      %3943 = vmatprep.subr.mxu0 0.0
      %3944 = vmatpush1.msra.mxu0 0.0
      %3945 = vmatprep.subr.mxu0 0.0
      %3946 = vmatpush1.msra.mxu0 0.0
      %3947 = vmatprep.subr.mxu0 0.0
      %3948 = vmatpush1.msra.mxu0 0.0
      %3949 = vmatprep.subr.mxu0 0.0
      %3950 = vmatpush1.msra.mxu0 0.0
      %3951 = vmatprep.subr.mxu0 0.0
      %3952 = vmatpush1.msra.mxu0 0.0
      %3953 = vmatprep.mubr.f32.mxu0 0.0
      %3954 = vmatmul.mubr.f32.gmra.mrb[0].mxu0 %v3888
      %v3955 = vpop.f32.mrb[0].mxu0
      %v3956 = vadd.f32 0.0, %v3955
      %v3957 = vpop.f32.mrb[0].mxu0
      %v3958 = vadd.f32 0.0, %v3957
      %3959 = vdwg.mxu0
      %v3960 = vadd.f32 %v3885, %v3956
      %v3961 = vadd.f32 %v3886, %v3958
      %3962 = vrot.lane.b32.xlu0 %v3047, 127
      %v3963 = vpop.permute.xlu0 %3962
      %3964 = vrot.lane.b32.xlu0 %v3049, 127
      %v3965 = vpop.permute.xlu0 %3964
      %3966 = vrot.lane.b32.xlu0 %v3051, 127
      %v3967 = vpop.permute.xlu0 %3966
      %3968 = vrot.lane.b32.xlu0 %v3053, 127
      %v3969 = vpop.permute.xlu0 %3968
      %3970 = vrot.lane.b32.xlu0 %v3055, 127
      %v3971 = vpop.permute.xlu0 %3970
      %3972 = vrot.lane.b32.xlu0 %v3057, 127
      %v3973 = vpop.permute.xlu0 %3972
      %3974 = vrot.lane.b32.xlu0 %v3059, 127
      %v3975 = vpop.permute.xlu0 %3974
      %3976 = vrot.lane.b32.xlu0 %v3061, 127
      %v3977 = vpop.permute.xlu0 %3976
      %3978 = vrot.lane.b32.xlu0 %v3063, 127
      %v3979 = vpop.permute.xlu0 %3978
      %3980 = vrot.lane.b32.xlu0 %v3065, 127
      %v3981 = vpop.permute.xlu0 %3980
      %3982 = vrot.lane.b32.xlu0 %v3067, 127
      %v3983 = vpop.permute.xlu0 %3982
      %3984 = vrot.lane.b32.xlu0 %v3069, 127
      %v3985 = vpop.permute.xlu0 %3984
      %3986 = vrot.lane.b32.xlu0 %v3071, 127
      %v3987 = vpop.permute.xlu0 %3986
      %3988 = vrot.lane.b32.xlu0 %v3073, 127
      %v3989 = vpop.permute.xlu0 %3988
      %3990 = vrot.lane.b32.xlu0 %v3075, 127
      %v3991 = vpop.permute.xlu0 %3990
      %3992 = vrot.lane.b32.xlu0 %v3077, 127
      %v3993 = vpop.permute.xlu0 %3992
      %3994 = vrot.lane.b32.xlu0 %v3048, 127
      %v3995 = vpop.permute.xlu0 %3994
      %3996 = vrot.lane.b32.xlu0 %v3050, 127
      %v3997 = vpop.permute.xlu0 %3996
      %3998 = vrot.lane.b32.xlu0 %v3052, 127
      %v3999 = vpop.permute.xlu0 %3998
      %4000 = vrot.lane.b32.xlu0 %v3054, 127
      %v4001 = vpop.permute.xlu0 %4000
      %4002 = vrot.lane.b32.xlu0 %v3056, 127
      %v4003 = vpop.permute.xlu0 %4002
      %4004 = vrot.lane.b32.xlu0 %v3058, 127
      %v4005 = vpop.permute.xlu0 %4004
      %4006 = vrot.lane.b32.xlu0 %v3060, 127
      %v4007 = vpop.permute.xlu0 %4006
      %4008 = vrot.lane.b32.xlu0 %v3062, 127
      %v4009 = vpop.permute.xlu0 %4008
      %4010 = vrot.lane.b32.xlu0 %v3064, 127
      %v4011 = vpop.permute.xlu0 %4010
      %4012 = vrot.lane.b32.xlu0 %v3066, 127
      %v4013 = vpop.permute.xlu0 %4012
      %4014 = vrot.lane.b32.xlu0 %v3068, 127
      %v4015 = vpop.permute.xlu0 %4014
      %4016 = vrot.lane.b32.xlu0 %v3070, 127
      %v4017 = vpop.permute.xlu0 %4016
      %4018 = vrot.lane.b32.xlu0 %v3072, 127
      %v4019 = vpop.permute.xlu0 %4018
      %4020 = vrot.lane.b32.xlu0 %v3074, 127
      %v4021 = vpop.permute.xlu0 %4020
      %4022 = vrot.lane.b32.xlu0 %v3076, 127
      %v4023 = vpop.permute.xlu0 %4022
      %4024 = vrot.lane.b32.xlu0 %v3078, 127
      %v4025 = vpop.permute.xlu0 %4024
      %v4026 = vsel %vm1819, %v3963, %v3995
      %v4027 = vsel %vm1819, %v3965, %v3997
      %v4028 = vsel %vm1819, %v3967, %v3999
      %v4029 = vsel %vm1819, %v3969, %v4001
      %v4030 = vsel %vm1819, %v3971, %v4003
      %v4031 = vsel %vm1819, %v3973, %v4005
      %v4032 = vsel %vm1819, %v3975, %v4007
      %v4033 = vsel %vm1819, %v3977, %v4009
      %v4034 = vsel %vm1819, %v3979, %v4011
      %v4035 = vsel %vm1819, %v3981, %v4013
      %v4036 = vsel %vm1819, %v3983, %v4015
      %v4037 = vsel %vm1819, %v3985, %v4017
      %v4038 = vsel %vm1819, %v3987, %v4019
      %v4039 = vsel %vm1819, %v3989, %v4021
      %v4040 = vsel %vm1819, %v3991, %v4023
      %v4041 = vsel %vm1819, %v3993, %v4025
      %v4042 = vsel %vm1819, %v3995, %v3963
      %v4043 = vsel %vm1819, %v3997, %v3965
      %v4044 = vsel %vm1819, %v3999, %v3967
      %v4045 = vsel %vm1819, %v4001, %v3969
      %v4046 = vsel %vm1819, %v4003, %v3971
      %v4047 = vsel %vm1819, %v4005, %v3973
      %v4048 = vsel %vm1819, %v4007, %v3975
      %v4049 = vsel %vm1819, %v4009, %v3977
      %v4050 = vsel %vm1819, %v4011, %v3979
      %v4051 = vsel %vm1819, %v4013, %v3981
      %v4052 = vsel %vm1819, %v4015, %v3983
      %v4053 = vsel %vm1819, %v4017, %v3985
      %v4054 = vsel %vm1819, %v4019, %v3987
      %v4055 = vsel %vm1819, %v4021, %v3989
      %v4056 = vsel %vm1819, %v4023, %v3991
      %v4057 = vsel %vm1819, %v4025, %v3993
      %v4058 = vmul.f32 %v4026, %v1828
      %v4059 = vmul.f32 %v4042, %v1832
      %v4060 = vmul.f32 %v4027, %v1828
      %v4061 = vmul.f32 %v4043, %v1832
      %v4062 = vmul.f32 %v4028, %v1828
      %v4063 = vmul.f32 %v4044, %v1832
      %v4064 = vmul.f32 %v4029, %v1828
      %v4065 = vmul.f32 %v4045, %v1832
      %v4066 = vmul.f32 %v4030, %v1828
      %v4067 = vmul.f32 %v4046, %v1832
      %v4068 = vmul.f32 %v4031, %v1828
      %v4069 = vmul.f32 %v4047, %v1832
      %v4070 = vmul.f32 %v4032, %v1828
      %v4071 = vmul.f32 %v4048, %v1832
      %v4072 = vmul.f32 %v4033, %v1828
      %v4073 = vmul.f32 %v4049, %v1832
      %v4074 = vmul.f32 %v4034, %v1828
      %v4075 = vmul.f32 %v4050, %v1832
      %v4076 = vmul.f32 %v4035, %v1828
      %v4077 = vmul.f32 %v4051, %v1832
      %v4078 = vmul.f32 %v4036, %v1828
      %v4079 = vmul.f32 %v4052, %v1832
      %v4080 = vmul.f32 %v4037, %v1828
      %v4081 = vmul.f32 %v4053, %v1832
      %v4082 = vmul.f32 %v4038, %v1828
      %v4083 = vmul.f32 %v4054, %v1832
      %v4084 = vmul.f32 %v4039, %v1828
      %v4085 = vmul.f32 %v4055, %v1832
      %v4086 = vmul.f32 %v4040, %v1828
      %v4087 = vmul.f32 %v4056, %v1832
      %v4088 = vmul.f32 %v4041, %v1828
      %v4089 = vmul.f32 %v4057, %v1832
      %s4090 = scalar_lea.vmem %s8, 40
      %v4091 = vld [vmem:[%s4090] sm:$0xff]
      %4092 = vmatprep.subr.mxu0 %v4059
      %4093 = vmatpush1.msra.mxu0 %v4058
      %4094 = vmatprep.subr.mxu0 %v4061
      %4095 = vmatpush1.msra.mxu0 %v4060
      %4096 = vmatprep.subr.mxu0 %v4063
      %4097 = vmatpush1.msra.mxu0 %v4062
      %4098 = vmatprep.subr.mxu0 %v4065
      %4099 = vmatpush1.msra.mxu0 %v4064
      %4100 = vmatprep.subr.mxu0 %v4067
      %4101 = vmatpush1.msra.mxu0 %v4066
      %4102 = vmatprep.subr.mxu0 %v4069
      %4103 = vmatpush1.msra.mxu0 %v4068
      %4104 = vmatprep.subr.mxu0 %v4071
      %4105 = vmatpush1.msra.mxu0 %v4070
      %4106 = vmatprep.subr.mxu0 %v4073
      %4107 = vmatpush1.msra.mxu0 %v4072
      %4108 = vmatprep.subr.mxu0 %v4075
      %4109 = vmatpush1.msra.mxu0 %v4074
      %4110 = vmatprep.subr.mxu0 %v4077
      %4111 = vmatpush1.msra.mxu0 %v4076
      %4112 = vmatprep.subr.mxu0 %v4079
      %4113 = vmatpush1.msra.mxu0 %v4078
      %4114 = vmatprep.subr.mxu0 %v4081
      %4115 = vmatpush1.msra.mxu0 %v4080
      %4116 = vmatprep.subr.mxu0 %v4083
      %4117 = vmatpush1.msra.mxu0 %v4082
      %4118 = vmatprep.subr.mxu0 %v4085
      %4119 = vmatpush1.msra.mxu0 %v4084
      %4120 = vmatprep.subr.mxu0 %v4087
      %4121 = vmatpush1.msra.mxu0 %v4086
      %4122 = vmatprep.subr.mxu0 %v4089
      %4123 = vmatpush1.msra.mxu0 %v4088
      %4124 = vmatprep.subr.mxu0 0.0
      %4125 = vmatpush1.msra.mxu0 0.0
      %4126 = vmatprep.subr.mxu0 0.0
      %4127 = vmatpush1.msra.mxu0 0.0
      %4128 = vmatprep.subr.mxu0 0.0
      %4129 = vmatpush1.msra.mxu0 0.0
      %4130 = vmatprep.subr.mxu0 0.0
      %4131 = vmatpush1.msra.mxu0 0.0
      %4132 = vmatprep.subr.mxu0 0.0
      %4133 = vmatpush1.msra.mxu0 0.0
      %4134 = vmatprep.subr.mxu0 0.0
      %4135 = vmatpush1.msra.mxu0 0.0
      %4136 = vmatprep.subr.mxu0 0.0
      %4137 = vmatpush1.msra.mxu0 0.0
      %4138 = vmatprep.subr.mxu0 0.0
      %4139 = vmatpush1.msra.mxu0 0.0
      %4140 = vmatprep.subr.mxu0 0.0
      %4141 = vmatpush1.msra.mxu0 0.0
      %4142 = vmatprep.subr.mxu0 0.0
      %4143 = vmatpush1.msra.mxu0 0.0
      %4144 = vmatprep.subr.mxu0 0.0
      %4145 = vmatpush1.msra.mxu0 0.0
      %4146 = vmatprep.subr.mxu0 0.0
      %4147 = vmatpush1.msra.mxu0 0.0
      %4148 = vmatprep.subr.mxu0 0.0
      %4149 = vmatpush1.msra.mxu0 0.0
      %4150 = vmatprep.subr.mxu0 0.0
      %4151 = vmatpush1.msra.mxu0 0.0
      %4152 = vmatprep.subr.mxu0 0.0
      %4153 = vmatpush1.msra.mxu0 0.0
      %4154 = vmatprep.subr.mxu0 0.0
      %4155 = vmatpush1.msra.mxu0 0.0
      %4156 = vmatprep.mubr.f32.mxu0 0.0
      %4157 = vmatmul.mubr.f32.gmra.mrb[0].mxu0 %v4091
      %v4158 = vpop.f32.mrb[0].mxu0
      %v4159 = vadd.f32 0.0, %v4158
      %v4160 = vpop.f32.mrb[0].mxu0
      %v4161 = vadd.f32 0.0, %v4160
      %4162 = vdwg.mxu0
      %v4163 = vadd.f32 %v3960, %v4159
      %v4164 = vadd.f32 %v3961, %v4161
      %4165 = vrot.lane.b32.xlu0 %v3047, 113
      %v4166 = vpop.permute.xlu0 %4165
      %4167 = vrot.lane.b32.xlu0 %v3049, 113
      %v4168 = vpop.permute.xlu0 %4167
      %4169 = vrot.lane.b32.xlu0 %v3051, 113
      %v4170 = vpop.permute.xlu0 %4169
      %4171 = vrot.lane.b32.xlu0 %v3053, 113
      %v4172 = vpop.permute.xlu0 %4171
      %4173 = vrot.lane.b32.xlu0 %v3055, 113
      %v4174 = vpop.permute.xlu0 %4173
      %4175 = vrot.lane.b32.xlu0 %v3057, 113
      %v4176 = vpop.permute.xlu0 %4175
      %4177 = vrot.lane.b32.xlu0 %v3059, 113
      %v4178 = vpop.permute.xlu0 %4177
      %4179 = vrot.lane.b32.xlu0 %v3061, 113
      %v4180 = vpop.permute.xlu0 %4179
      %4181 = vrot.lane.b32.xlu0 %v3063, 113
      %v4182 = vpop.permute.xlu0 %4181
      %4183 = vrot.lane.b32.xlu0 %v3065, 113
      %v4184 = vpop.permute.xlu0 %4183
      %4185 = vrot.lane.b32.xlu0 %v3067, 113
      %v4186 = vpop.permute.xlu0 %4185
      %4187 = vrot.lane.b32.xlu0 %v3069, 113
      %v4188 = vpop.permute.xlu0 %4187
      %4189 = vrot.lane.b32.xlu0 %v3071, 113
      %v4190 = vpop.permute.xlu0 %4189
      %4191 = vrot.lane.b32.xlu0 %v3073, 113
      %v4192 = vpop.permute.xlu0 %4191
      %4193 = vrot.lane.b32.xlu0 %v3075, 113
      %v4194 = vpop.permute.xlu0 %4193
      %4195 = vrot.lane.b32.xlu0 %v3077, 113
      %v4196 = vpop.permute.xlu0 %4195
      %4197 = vrot.lane.b32.xlu0 %v3048, 113
      %v4198 = vpop.permute.xlu0 %4197
      %4199 = vrot.lane.b32.xlu0 %v3050, 113
      %v4200 = vpop.permute.xlu0 %4199
      %4201 = vrot.lane.b32.xlu0 %v3052, 113
      %v4202 = vpop.permute.xlu0 %4201
      %4203 = vrot.lane.b32.xlu0 %v3054, 113
      %v4204 = vpop.permute.xlu0 %4203
      %4205 = vrot.lane.b32.xlu0 %v3056, 113
      %v4206 = vpop.permute.xlu0 %4205
      %4207 = vrot.lane.b32.xlu0 %v3058, 113
      %v4208 = vpop.permute.xlu0 %4207
      %4209 = vrot.lane.b32.xlu0 %v3060, 113
      %v4210 = vpop.permute.xlu0 %4209
      %4211 = vrot.lane.b32.xlu0 %v3062, 113
      %v4212 = vpop.permute.xlu0 %4211
      %4213 = vrot.lane.b32.xlu0 %v3064, 113
      %v4214 = vpop.permute.xlu0 %4213
      %4215 = vrot.lane.b32.xlu0 %v3066, 113
      %v4216 = vpop.permute.xlu0 %4215
      %4217 = vrot.lane.b32.xlu0 %v3068, 113
      %v4218 = vpop.permute.xlu0 %4217
      %4219 = vrot.lane.b32.xlu0 %v3070, 113
      %v4220 = vpop.permute.xlu0 %4219
      %4221 = vrot.lane.b32.xlu0 %v3072, 113
      %v4222 = vpop.permute.xlu0 %4221
      %4223 = vrot.lane.b32.xlu0 %v3074, 113
      %v4224 = vpop.permute.xlu0 %4223
      %4225 = vrot.lane.b32.xlu0 %v3076, 113
      %v4226 = vpop.permute.xlu0 %4225
      %4227 = vrot.lane.b32.xlu0 %v3078, 113
      %v4228 = vpop.permute.xlu0 %4227
      %v4229 = vsel %vm2099, %v4166, %v4198
      %v4230 = vsel %vm2099, %v4168, %v4200
      %v4231 = vsel %vm2099, %v4170, %v4202
      %v4232 = vsel %vm2099, %v4172, %v4204
      %v4233 = vsel %vm2099, %v4174, %v4206
      %v4234 = vsel %vm2099, %v4176, %v4208
      %v4235 = vsel %vm2099, %v4178, %v4210
      %v4236 = vsel %vm2099, %v4180, %v4212
      %v4237 = vsel %vm2099, %v4182, %v4214
      %v4238 = vsel %vm2099, %v4184, %v4216
      %v4239 = vsel %vm2099, %v4186, %v4218
      %v4240 = vsel %vm2099, %v4188, %v4220
      %v4241 = vsel %vm2099, %v4190, %v4222
      %v4242 = vsel %vm2099, %v4192, %v4224
      %v4243 = vsel %vm2099, %v4194, %v4226
      %v4244 = vsel %vm2099, %v4196, %v4228
      %v4245 = vsel %vm2099, %v4198, %v4166
      %v4246 = vsel %vm2099, %v4200, %v4168
      %v4247 = vsel %vm2099, %v4202, %v4170
      %v4248 = vsel %vm2099, %v4204, %v4172
      %v4249 = vsel %vm2099, %v4206, %v4174
      %v4250 = vsel %vm2099, %v4208, %v4176
      %v4251 = vsel %vm2099, %v4210, %v4178
      %v4252 = vsel %vm2099, %v4212, %v4180
      %v4253 = vsel %vm2099, %v4214, %v4182
      %v4254 = vsel %vm2099, %v4216, %v4184
      %v4255 = vsel %vm2099, %v4218, %v4186
      %v4256 = vsel %vm2099, %v4220, %v4188
      %v4257 = vsel %vm2099, %v4222, %v4190
      %v4258 = vsel %vm2099, %v4224, %v4192
      %v4259 = vsel %vm2099, %v4226, %v4194
      %v4260 = vsel %vm2099, %v4228, %v4196
      %v4261 = vmul.f32 %v4229, %v2108
      %v4262 = vmul.f32 %v4245, %v2112
      %v4263 = vmul.f32 %v4230, %v2108
      %v4264 = vmul.f32 %v4246, %v2112
      %v4265 = vmul.f32 %v4231, %v2108
      %v4266 = vmul.f32 %v4247, %v2112
      %v4267 = vmul.f32 %v4232, %v2108
      %v4268 = vmul.f32 %v4248, %v2112
      %v4269 = vmul.f32 %v4233, %v2108
      %v4270 = vmul.f32 %v4249, %v2112
      %v4271 = vmul.f32 %v4234, %v2108
      %v4272 = vmul.f32 %v4250, %v2112
      %v4273 = vmul.f32 %v4235, %v2108
      %v4274 = vmul.f32 %v4251, %v2112
      %v4275 = vmul.f32 %v4236, %v2108
      %v4276 = vmul.f32 %v4252, %v2112
      %v4277 = vmul.f32 %v4237, %v2108
      %v4278 = vmul.f32 %v4253, %v2112
      %v4279 = vmul.f32 %v4238, %v2108
      %v4280 = vmul.f32 %v4254, %v2112
      %v4281 = vmul.f32 %v4239, %v2108
      %v4282 = vmul.f32 %v4255, %v2112
      %v4283 = vmul.f32 %v4240, %v2108
      %v4284 = vmul.f32 %v4256, %v2112
      %v4285 = vmul.f32 %v4241, %v2108
      %v4286 = vmul.f32 %v4257, %v2112
      %v4287 = vmul.f32 %v4242, %v2108
      %v4288 = vmul.f32 %v4258, %v2112
      %v4289 = vmul.f32 %v4243, %v2108
      %v4290 = vmul.f32 %v4259, %v2112
      %v4291 = vmul.f32 %v4244, %v2108
      %v4292 = vmul.f32 %v4260, %v2112
      %s4293 = scalar_lea.vmem %s8, 48
      %v4294 = vld [vmem:[%s4293] sm:$0xff]
      %4295 = vmatprep.subr.mxu0 %v4262
      %4296 = vmatpush1.msra.mxu0 %v4261
      %4297 = vmatprep.subr.mxu0 %v4264
      %4298 = vmatpush1.msra.mxu0 %v4263
      %4299 = vmatprep.subr.mxu0 %v4266
      %4300 = vmatpush1.msra.mxu0 %v4265
      %4301 = vmatprep.subr.mxu0 %v4268
      %4302 = vmatpush1.msra.mxu0 %v4267
      %4303 = vmatprep.subr.mxu0 %v4270
      %4304 = vmatpush1.msra.mxu0 %v4269
      %4305 = vmatprep.subr.mxu0 %v4272
      %4306 = vmatpush1.msra.mxu0 %v4271
      %4307 = vmatprep.subr.mxu0 %v4274
      %4308 = vmatpush1.msra.mxu0 %v4273
      %4309 = vmatprep.subr.mxu0 %v4276
      %4310 = vmatpush1.msra.mxu0 %v4275
      %4311 = vmatprep.subr.mxu0 %v4278
      %4312 = vmatpush1.msra.mxu0 %v4277
      %4313 = vmatprep.subr.mxu0 %v4280
      %4314 = vmatpush1.msra.mxu0 %v4279
      %4315 = vmatprep.subr.mxu0 %v4282
      %4316 = vmatpush1.msra.mxu0 %v4281
      %4317 = vmatprep.subr.mxu0 %v4284
      %4318 = vmatpush1.msra.mxu0 %v4283
      %4319 = vmatprep.subr.mxu0 %v4286
      %4320 = vmatpush1.msra.mxu0 %v4285
      %4321 = vmatprep.subr.mxu0 %v4288
      %4322 = vmatpush1.msra.mxu0 %v4287
      %4323 = vmatprep.subr.mxu0 %v4290
      %4324 = vmatpush1.msra.mxu0 %v4289
      %4325 = vmatprep.subr.mxu0 %v4292
      %4326 = vmatpush1.msra.mxu0 %v4291
      %4327 = vmatprep.subr.mxu0 0.0
      %4328 = vmatpush1.msra.mxu0 0.0
      %4329 = vmatprep.subr.mxu0 0.0
      %4330 = vmatpush1.msra.mxu0 0.0
      %4331 = vmatprep.subr.mxu0 0.0
      %4332 = vmatpush1.msra.mxu0 0.0
      %4333 = vmatprep.subr.mxu0 0.0
      %4334 = vmatpush1.msra.mxu0 0.0
      %4335 = vmatprep.subr.mxu0 0.0
      %4336 = vmatpush1.msra.mxu0 0.0
      %4337 = vmatprep.subr.mxu0 0.0
      %4338 = vmatpush1.msra.mxu0 0.0
      %4339 = vmatprep.subr.mxu0 0.0
      %4340 = vmatpush1.msra.mxu0 0.0
      %4341 = vmatprep.subr.mxu0 0.0
      %4342 = vmatpush1.msra.mxu0 0.0
      %4343 = vmatprep.subr.mxu0 0.0
      %4344 = vmatpush1.msra.mxu0 0.0
      %4345 = vmatprep.subr.mxu0 0.0
      %4346 = vmatpush1.msra.mxu0 0.0
      %4347 = vmatprep.subr.mxu0 0.0
      %4348 = vmatpush1.msra.mxu0 0.0
      %4349 = vmatprep.subr.mxu0 0.0
      %4350 = vmatpush1.msra.mxu0 0.0
      %4351 = vmatprep.subr.mxu0 0.0
      %4352 = vmatpush1.msra.mxu0 0.0
      %4353 = vmatprep.subr.mxu0 0.0
      %4354 = vmatpush1.msra.mxu0 0.0
      %4355 = vmatprep.subr.mxu0 0.0
      %4356 = vmatpush1.msra.mxu0 0.0
      %4357 = vmatprep.subr.mxu0 0.0
      %4358 = vmatpush1.msra.mxu0 0.0
      %4359 = vmatprep.mubr.f32.mxu0 0.0
      %4360 = vmatmul.mubr.f32.gmra.mrb[0].mxu0 %v4294
      %v4361 = vpop.f32.mrb[0].mxu0
      %v4362 = vadd.f32 0.0, %v4361
      %v4363 = vpop.f32.mrb[0].mxu0
      %v4364 = vadd.f32 0.0, %v4363
      %4365 = vdwg.mxu0
      %v4366 = vadd.f32 %v4163, %v4362
      %v4367 = vadd.f32 %v4164, %v4364
      %4368 = vrot.lane.b32.xlu0 %v3047, 112
      %v4369 = vpop.permute.xlu0 %4368
      %4370 = vrot.lane.b32.xlu0 %v3049, 112
      %v4371 = vpop.permute.xlu0 %4370
      %4372 = vrot.lane.b32.xlu0 %v3051, 112
      %v4373 = vpop.permute.xlu0 %4372
      %4374 = vrot.lane.b32.xlu0 %v3053, 112
      %v4375 = vpop.permute.xlu0 %4374
      %4376 = vrot.lane.b32.xlu0 %v3055, 112
      %v4377 = vpop.permute.xlu0 %4376
      %4378 = vrot.lane.b32.xlu0 %v3057, 112
      %v4379 = vpop.permute.xlu0 %4378
      %4380 = vrot.lane.b32.xlu0 %v3059, 112
      %v4381 = vpop.permute.xlu0 %4380
      %4382 = vrot.lane.b32.xlu0 %v3061, 112
      %v4383 = vpop.permute.xlu0 %4382
      %4384 = vrot.lane.b32.xlu0 %v3063, 112
      %v4385 = vpop.permute.xlu0 %4384
      %4386 = vrot.lane.b32.xlu0 %v3065, 112
      %v4387 = vpop.permute.xlu0 %4386
      %4388 = vrot.lane.b32.xlu0 %v3067, 112
      %v4389 = vpop.permute.xlu0 %4388
      %4390 = vrot.lane.b32.xlu0 %v3069, 112
      %v4391 = vpop.permute.xlu0 %4390
      %4392 = vrot.lane.b32.xlu0 %v3071, 112
      %v4393 = vpop.permute.xlu0 %4392
      %4394 = vrot.lane.b32.xlu0 %v3073, 112
      %v4395 = vpop.permute.xlu0 %4394
      %4396 = vrot.lane.b32.xlu0 %v3075, 112
      %v4397 = vpop.permute.xlu0 %4396
      %4398 = vrot.lane.b32.xlu0 %v3077, 112
      %v4399 = vpop.permute.xlu0 %4398
      %4400 = vrot.lane.b32.xlu0 %v3048, 112
      %v4401 = vpop.permute.xlu0 %4400
      %4402 = vrot.lane.b32.xlu0 %v3050, 112
      %v4403 = vpop.permute.xlu0 %4402
      %4404 = vrot.lane.b32.xlu0 %v3052, 112
      %v4405 = vpop.permute.xlu0 %4404
      %4406 = vrot.lane.b32.xlu0 %v3054, 112
      %v4407 = vpop.permute.xlu0 %4406
      %4408 = vrot.lane.b32.xlu0 %v3056, 112
      %v4409 = vpop.permute.xlu0 %4408
      %4410 = vrot.lane.b32.xlu0 %v3058, 112
      %v4411 = vpop.permute.xlu0 %4410
      %4412 = vrot.lane.b32.xlu0 %v3060, 112
      %v4413 = vpop.permute.xlu0 %4412
      %4414 = vrot.lane.b32.xlu0 %v3062, 112
      %v4415 = vpop.permute.xlu0 %4414
      %4416 = vrot.lane.b32.xlu0 %v3064, 112
      %v4417 = vpop.permute.xlu0 %4416
      %4418 = vrot.lane.b32.xlu0 %v3066, 112
      %v4419 = vpop.permute.xlu0 %4418
      %4420 = vrot.lane.b32.xlu0 %v3068, 112
      %v4421 = vpop.permute.xlu0 %4420
      %4422 = vrot.lane.b32.xlu0 %v3070, 112
      %v4423 = vpop.permute.xlu0 %4422
      %4424 = vrot.lane.b32.xlu0 %v3072, 112
      %v4425 = vpop.permute.xlu0 %4424
      %4426 = vrot.lane.b32.xlu0 %v3074, 112
      %v4427 = vpop.permute.xlu0 %4426
      %4428 = vrot.lane.b32.xlu0 %v3076, 112
      %v4429 = vpop.permute.xlu0 %4428
      %4430 = vrot.lane.b32.xlu0 %v3078, 112
      %v4431 = vpop.permute.xlu0 %4430
      %v4432 = vsel %vm2379, %v4369, %v4401
      %v4433 = vsel %vm2379, %v4371, %v4403
      %v4434 = vsel %vm2379, %v4373, %v4405
      %v4435 = vsel %vm2379, %v4375, %v4407
      %v4436 = vsel %vm2379, %v4377, %v4409
      %v4437 = vsel %vm2379, %v4379, %v4411
      %v4438 = vsel %vm2379, %v4381, %v4413
      %v4439 = vsel %vm2379, %v4383, %v4415
      %v4440 = vsel %vm2379, %v4385, %v4417
      %v4441 = vsel %vm2379, %v4387, %v4419
      %v4442 = vsel %vm2379, %v4389, %v4421
      %v4443 = vsel %vm2379, %v4391, %v4423
      %v4444 = vsel %vm2379, %v4393, %v4425
      %v4445 = vsel %vm2379, %v4395, %v4427
      %v4446 = vsel %vm2379, %v4397, %v4429
      %v4447 = vsel %vm2379, %v4399, %v4431
      %v4448 = vsel %vm2379, %v4401, %v4369
      %v4449 = vsel %vm2379, %v4403, %v4371
      %v4450 = vsel %vm2379, %v4405, %v4373
      %v4451 = vsel %vm2379, %v4407, %v4375
      %v4452 = vsel %vm2379, %v4409, %v4377
      %v4453 = vsel %vm2379, %v4411, %v4379
      %v4454 = vsel %vm2379, %v4413, %v4381
      %v4455 = vsel %vm2379, %v4415, %v4383
      %v4456 = vsel %vm2379, %v4417, %v4385
      %v4457 = vsel %vm2379, %v4419, %v4387
      %v4458 = vsel %vm2379, %v4421, %v4389
      %v4459 = vsel %vm2379, %v4423, %v4391
      %v4460 = vsel %vm2379, %v4425, %v4393
      %v4461 = vsel %vm2379, %v4427, %v4395
      %v4462 = vsel %vm2379, %v4429, %v4397
      %v4463 = vsel %vm2379, %v4431, %v4399
      %v4464 = vmul.f32 %v4432, %v2388
      %v4465 = vmul.f32 %v4448, %v2392
      %v4466 = vmul.f32 %v4433, %v2388
      %v4467 = vmul.f32 %v4449, %v2392
      %v4468 = vmul.f32 %v4434, %v2388
      %v4469 = vmul.f32 %v4450, %v2392
      %v4470 = vmul.f32 %v4435, %v2388
      %v4471 = vmul.f32 %v4451, %v2392
      %v4472 = vmul.f32 %v4436, %v2388
      %v4473 = vmul.f32 %v4452, %v2392
      %v4474 = vmul.f32 %v4437, %v2388
      %v4475 = vmul.f32 %v4453, %v2392
      %v4476 = vmul.f32 %v4438, %v2388
      %v4477 = vmul.f32 %v4454, %v2392
      %v4478 = vmul.f32 %v4439, %v2388
      %v4479 = vmul.f32 %v4455, %v2392
      %v4480 = vmul.f32 %v4440, %v2388
      %v4481 = vmul.f32 %v4456, %v2392
      %v4482 = vmul.f32 %v4441, %v2388
      %v4483 = vmul.f32 %v4457, %v2392
      %v4484 = vmul.f32 %v4442, %v2388
      %v4485 = vmul.f32 %v4458, %v2392
      %v4486 = vmul.f32 %v4443, %v2388
      %v4487 = vmul.f32 %v4459, %v2392
      %v4488 = vmul.f32 %v4444, %v2388
      %v4489 = vmul.f32 %v4460, %v2392
      %v4490 = vmul.f32 %v4445, %v2388
      %v4491 = vmul.f32 %v4461, %v2392
      %v4492 = vmul.f32 %v4446, %v2388
      %v4493 = vmul.f32 %v4462, %v2392
      %v4494 = vmul.f32 %v4447, %v2388
      %v4495 = vmul.f32 %v4463, %v2392
      %s4496 = scalar_lea.vmem %s8, 56
      %v4497 = vld [vmem:[%s4496] sm:$0xff]
      %4498 = vmatprep.subr.mxu0 %v4465
      %4499 = vmatpush1.msra.mxu0 %v4464
      %4500 = vmatprep.subr.mxu0 %v4467
      %4501 = vmatpush1.msra.mxu0 %v4466
      %4502 = vmatprep.subr.mxu0 %v4469
      %4503 = vmatpush1.msra.mxu0 %v4468
      %4504 = vmatprep.subr.mxu0 %v4471
      %4505 = vmatpush1.msra.mxu0 %v4470
      %4506 = vmatprep.subr.mxu0 %v4473
      %4507 = vmatpush1.msra.mxu0 %v4472
      %4508 = vmatprep.subr.mxu0 %v4475
      %4509 = vmatpush1.msra.mxu0 %v4474
      %4510 = vmatprep.subr.mxu0 %v4477
      %4511 = vmatpush1.msra.mxu0 %v4476
      %4512 = vmatprep.subr.mxu0 %v4479
      %4513 = vmatpush1.msra.mxu0 %v4478
      %4514 = vmatprep.subr.mxu0 %v4481
      %4515 = vmatpush1.msra.mxu0 %v4480
      %4516 = vmatprep.subr.mxu0 %v4483
      %4517 = vmatpush1.msra.mxu0 %v4482
      %4518 = vmatprep.subr.mxu0 %v4485
      %4519 = vmatpush1.msra.mxu0 %v4484
      %4520 = vmatprep.subr.mxu0 %v4487
      %4521 = vmatpush1.msra.mxu0 %v4486
      %4522 = vmatprep.subr.mxu0 %v4489
      %4523 = vmatpush1.msra.mxu0 %v4488
      %4524 = vmatprep.subr.mxu0 %v4491
      %4525 = vmatpush1.msra.mxu0 %v4490
      %4526 = vmatprep.subr.mxu0 %v4493
      %4527 = vmatpush1.msra.mxu0 %v4492
      %4528 = vmatprep.subr.mxu0 %v4495
      %4529 = vmatpush1.msra.mxu0 %v4494
      %4530 = vmatprep.subr.mxu0 0.0
      %4531 = vmatpush1.msra.mxu0 0.0
      %4532 = vmatprep.subr.mxu0 0.0
      %4533 = vmatpush1.msra.mxu0 0.0
      %4534 = vmatprep.subr.mxu0 0.0
      %4535 = vmatpush1.msra.mxu0 0.0
      %4536 = vmatprep.subr.mxu0 0.0
      %4537 = vmatpush1.msra.mxu0 0.0
      %4538 = vmatprep.subr.mxu0 0.0
      %4539 = vmatpush1.msra.mxu0 0.0
      %4540 = vmatprep.subr.mxu0 0.0
      %4541 = vmatpush1.msra.mxu0 0.0
      %4542 = vmatprep.subr.mxu0 0.0
      %4543 = vmatpush1.msra.mxu0 0.0
      %4544 = vmatprep.subr.mxu0 0.0
      %4545 = vmatpush1.msra.mxu0 0.0
      %4546 = vmatprep.subr.mxu0 0.0
      %4547 = vmatpush1.msra.mxu0 0.0
      %4548 = vmatprep.subr.mxu0 0.0
      %4549 = vmatpush1.msra.mxu0 0.0
      %4550 = vmatprep.subr.mxu0 0.0
      %4551 = vmatpush1.msra.mxu0 0.0
      %4552 = vmatprep.subr.mxu0 0.0
      %4553 = vmatpush1.msra.mxu0 0.0
      %4554 = vmatprep.subr.mxu0 0.0
      %4555 = vmatpush1.msra.mxu0 0.0
      %4556 = vmatprep.subr.mxu0 0.0
      %4557 = vmatpush1.msra.mxu0 0.0
      %4558 = vmatprep.subr.mxu0 0.0
      %4559 = vmatpush1.msra.mxu0 0.0
      %4560 = vmatprep.subr.mxu0 0.0
      %4561 = vmatpush1.msra.mxu0 0.0
      %4562 = vmatprep.mubr.f32.mxu0 0.0
      %4563 = vmatmul.mubr.f32.gmra.mrb[0].mxu0 %v4497
      %v4564 = vpop.f32.mrb[0].mxu0
      %v4565 = vadd.f32 0.0, %v4564
      %v4566 = vpop.f32.mrb[0].mxu0
      %v4567 = vadd.f32 0.0, %v4566
      %4568 = vdwg.mxu0
      %v4569 = vadd.f32 %v4366, %v4565
      %v4570 = vadd.f32 %v4367, %v4567
      %4571 = vrot.lane.b32.xlu0 %v3047, 111
      %v4572 = vpop.permute.xlu0 %4571
      %4573 = vrot.lane.b32.xlu0 %v3049, 111
      %v4574 = vpop.permute.xlu0 %4573
      %4575 = vrot.lane.b32.xlu0 %v3051, 111
      %v4576 = vpop.permute.xlu0 %4575
      %4577 = vrot.lane.b32.xlu0 %v3053, 111
      %v4578 = vpop.permute.xlu0 %4577
      %4579 = vrot.lane.b32.xlu0 %v3055, 111
      %v4580 = vpop.permute.xlu0 %4579
      %4581 = vrot.lane.b32.xlu0 %v3057, 111
      %v4582 = vpop.permute.xlu0 %4581
      %4583 = vrot.lane.b32.xlu0 %v3059, 111
      %v4584 = vpop.permute.xlu0 %4583
      %4585 = vrot.lane.b32.xlu0 %v3061, 111
      %v4586 = vpop.permute.xlu0 %4585
      %4587 = vrot.lane.b32.xlu0 %v3063, 111
      %v4588 = vpop.permute.xlu0 %4587
      %4589 = vrot.lane.b32.xlu0 %v3065, 111
      %v4590 = vpop.permute.xlu0 %4589
      %4591 = vrot.lane.b32.xlu0 %v3067, 111
      %v4592 = vpop.permute.xlu0 %4591
      %4593 = vrot.lane.b32.xlu0 %v3069, 111
      %v4594 = vpop.permute.xlu0 %4593
      %4595 = vrot.lane.b32.xlu0 %v3071, 111
      %v4596 = vpop.permute.xlu0 %4595
      %4597 = vrot.lane.b32.xlu0 %v3073, 111
      %v4598 = vpop.permute.xlu0 %4597
      %4599 = vrot.lane.b32.xlu0 %v3075, 111
      %v4600 = vpop.permute.xlu0 %4599
      %4601 = vrot.lane.b32.xlu0 %v3077, 111
      %v4602 = vpop.permute.xlu0 %4601
      %4603 = vrot.lane.b32.xlu0 %v3048, 111
      %v4604 = vpop.permute.xlu0 %4603
      %4605 = vrot.lane.b32.xlu0 %v3050, 111
      %v4606 = vpop.permute.xlu0 %4605
      %4607 = vrot.lane.b32.xlu0 %v3052, 111
      %v4608 = vpop.permute.xlu0 %4607
      %4609 = vrot.lane.b32.xlu0 %v3054, 111
      %v4610 = vpop.permute.xlu0 %4609
      %4611 = vrot.lane.b32.xlu0 %v3056, 111
      %v4612 = vpop.permute.xlu0 %4611
      %4613 = vrot.lane.b32.xlu0 %v3058, 111
      %v4614 = vpop.permute.xlu0 %4613
      %4615 = vrot.lane.b32.xlu0 %v3060, 111
      %v4616 = vpop.permute.xlu0 %4615
      %4617 = vrot.lane.b32.xlu0 %v3062, 111
      %v4618 = vpop.permute.xlu0 %4617
      %4619 = vrot.lane.b32.xlu0 %v3064, 111
      %v4620 = vpop.permute.xlu0 %4619
      %4621 = vrot.lane.b32.xlu0 %v3066, 111
      %v4622 = vpop.permute.xlu0 %4621
      %4623 = vrot.lane.b32.xlu0 %v3068, 111
      %v4624 = vpop.permute.xlu0 %4623
      %4625 = vrot.lane.b32.xlu0 %v3070, 111
      %v4626 = vpop.permute.xlu0 %4625
      %4627 = vrot.lane.b32.xlu0 %v3072, 111
      %v4628 = vpop.permute.xlu0 %4627
      %4629 = vrot.lane.b32.xlu0 %v3074, 111
      %v4630 = vpop.permute.xlu0 %4629
      %4631 = vrot.lane.b32.xlu0 %v3076, 111
      %v4632 = vpop.permute.xlu0 %4631
      %4633 = vrot.lane.b32.xlu0 %v3078, 111
      %v4634 = vpop.permute.xlu0 %4633
      %v4635 = vsel %vm2659, %v4572, %v4604
      %v4636 = vsel %vm2659, %v4574, %v4606
      %v4637 = vsel %vm2659, %v4576, %v4608
      %v4638 = vsel %vm2659, %v4578, %v4610
      %v4639 = vsel %vm2659, %v4580, %v4612
      %v4640 = vsel %vm2659, %v4582, %v4614
      %v4641 = vsel %vm2659, %v4584, %v4616
      %v4642 = vsel %vm2659, %v4586, %v4618
      %v4643 = vsel %vm2659, %v4588, %v4620
      %v4644 = vsel %vm2659, %v4590, %v4622
      %v4645 = vsel %vm2659, %v4592, %v4624
      %v4646 = vsel %vm2659, %v4594, %v4626
      %v4647 = vsel %vm2659, %v4596, %v4628
      %v4648 = vsel %vm2659, %v4598, %v4630
      %v4649 = vsel %vm2659, %v4600, %v4632
      %v4650 = vsel %vm2659, %v4602, %v4634
      %v4651 = vsel %vm2659, %v4604, %v4572
      %v4652 = vsel %vm2659, %v4606, %v4574
      %v4653 = vsel %vm2659, %v4608, %v4576
      %v4654 = vsel %vm2659, %v4610, %v4578
      %v4655 = vsel %vm2659, %v4612, %v4580
      %v4656 = vsel %vm2659, %v4614, %v4582
      %v4657 = vsel %vm2659, %v4616, %v4584
      %v4658 = vsel %vm2659, %v4618, %v4586
      %v4659 = vsel %vm2659, %v4620, %v4588
      %v4660 = vsel %vm2659, %v4622, %v4590
      %v4661 = vsel %vm2659, %v4624, %v4592
      %v4662 = vsel %vm2659, %v4626, %v4594
      %v4663 = vsel %vm2659, %v4628, %v4596
      %v4664 = vsel %vm2659, %v4630, %v4598
      %v4665 = vsel %vm2659, %v4632, %v4600
      %v4666 = vsel %vm2659, %v4634, %v4602
      %v4667 = vmul.f32 %v4635, %v2668
      %v4668 = vmul.f32 %v4651, %v2672
      %v4669 = vmul.f32 %v4636, %v2668
      %v4670 = vmul.f32 %v4652, %v2672
      %v4671 = vmul.f32 %v4637, %v2668
      %v4672 = vmul.f32 %v4653, %v2672
      %v4673 = vmul.f32 %v4638, %v2668
      %v4674 = vmul.f32 %v4654, %v2672
      %v4675 = vmul.f32 %v4639, %v2668
      %v4676 = vmul.f32 %v4655, %v2672
      %v4677 = vmul.f32 %v4640, %v2668
      %v4678 = vmul.f32 %v4656, %v2672
      %v4679 = vmul.f32 %v4641, %v2668
      %v4680 = vmul.f32 %v4657, %v2672
      %v4681 = vmul.f32 %v4642, %v2668
      %v4682 = vmul.f32 %v4658, %v2672
      %v4683 = vmul.f32 %v4643, %v2668
      %v4684 = vmul.f32 %v4659, %v2672
      %v4685 = vmul.f32 %v4644, %v2668
      %v4686 = vmul.f32 %v4660, %v2672
      %v4687 = vmul.f32 %v4645, %v2668
      %v4688 = vmul.f32 %v4661, %v2672
      %v4689 = vmul.f32 %v4646, %v2668
      %v4690 = vmul.f32 %v4662, %v2672
      %v4691 = vmul.f32 %v4647, %v2668
      %v4692 = vmul.f32 %v4663, %v2672
      %v4693 = vmul.f32 %v4648, %v2668
      %v4694 = vmul.f32 %v4664, %v2672
      %v4695 = vmul.f32 %v4649, %v2668
      %v4696 = vmul.f32 %v4665, %v2672
      %v4697 = vmul.f32 %v4650, %v2668
      %v4698 = vmul.f32 %v4666, %v2672
      %s4699 = scalar_lea.vmem %s8, 64
      %v4700 = vld [vmem:[%s4699] sm:$0xff]
      %4701 = vmatprep.subr.mxu0 %v4668
      %4702 = vmatpush1.msra.mxu0 %v4667
      %4703 = vmatprep.subr.mxu0 %v4670
      %4704 = vmatpush1.msra.mxu0 %v4669
      %4705 = vmatprep.subr.mxu0 %v4672
      %4706 = vmatpush1.msra.mxu0 %v4671
      %4707 = vmatprep.subr.mxu0 %v4674
      %4708 = vmatpush1.msra.mxu0 %v4673
      %4709 = vmatprep.subr.mxu0 %v4676
      %4710 = vmatpush1.msra.mxu0 %v4675
      %4711 = vmatprep.subr.mxu0 %v4678
      %4712 = vmatpush1.msra.mxu0 %v4677
      %4713 = vmatprep.subr.mxu0 %v4680
      %4714 = vmatpush1.msra.mxu0 %v4679
      %4715 = vmatprep.subr.mxu0 %v4682
      %4716 = vmatpush1.msra.mxu0 %v4681
      %4717 = vmatprep.subr.mxu0 %v4684
      %4718 = vmatpush1.msra.mxu0 %v4683
      %4719 = vmatprep.subr.mxu0 %v4686
      %4720 = vmatpush1.msra.mxu0 %v4685
      %4721 = vmatprep.subr.mxu0 %v4688
      %4722 = vmatpush1.msra.mxu0 %v4687
      %4723 = vmatprep.subr.mxu0 %v4690
      %4724 = vmatpush1.msra.mxu0 %v4689
      %4725 = vmatprep.subr.mxu0 %v4692
      %4726 = vmatpush1.msra.mxu0 %v4691
      %4727 = vmatprep.subr.mxu0 %v4694
      %4728 = vmatpush1.msra.mxu0 %v4693
      %4729 = vmatprep.subr.mxu0 %v4696
      %4730 = vmatpush1.msra.mxu0 %v4695
      %4731 = vmatprep.subr.mxu0 %v4698
      %4732 = vmatpush1.msra.mxu0 %v4697
      %4733 = vmatprep.subr.mxu0 0.0
      %4734 = vmatpush1.msra.mxu0 0.0
      %4735 = vmatprep.subr.mxu0 0.0
      %4736 = vmatpush1.msra.mxu0 0.0
      %4737 = vmatprep.subr.mxu0 0.0
      %4738 = vmatpush1.msra.mxu0 0.0
      %4739 = vmatprep.subr.mxu0 0.0
      %4740 = vmatpush1.msra.mxu0 0.0
      %4741 = vmatprep.subr.mxu0 0.0
      %4742 = vmatpush1.msra.mxu0 0.0
      %4743 = vmatprep.subr.mxu0 0.0
      %4744 = vmatpush1.msra.mxu0 0.0
      %4745 = vmatprep.subr.mxu0 0.0
      %4746 = vmatpush1.msra.mxu0 0.0
      %4747 = vmatprep.subr.mxu0 0.0
      %4748 = vmatpush1.msra.mxu0 0.0
      %4749 = vmatprep.subr.mxu0 0.0
      %4750 = vmatpush1.msra.mxu0 0.0
      %4751 = vmatprep.subr.mxu0 0.0
      %4752 = vmatpush1.msra.mxu0 0.0
      %4753 = vmatprep.subr.mxu0 0.0
      %4754 = vmatpush1.msra.mxu0 0.0
      %4755 = vmatprep.subr.mxu0 0.0
      %4756 = vmatpush1.msra.mxu0 0.0
      %4757 = vmatprep.subr.mxu0 0.0
      %4758 = vmatpush1.msra.mxu0 0.0
      %4759 = vmatprep.subr.mxu0 0.0
      %4760 = vmatpush1.msra.mxu0 0.0
      %4761 = vmatprep.subr.mxu0 0.0
      %4762 = vmatpush1.msra.mxu0 0.0
      %4763 = vmatprep.subr.mxu0 0.0
      %4764 = vmatpush1.msra.mxu0 0.0
      %4765 = vmatprep.mubr.f32.mxu0 0.0
      %4766 = vmatmul.mubr.f32.gmra.mrb[0].mxu0 %v4700
      %v4767 = vpop.f32.mrb[0].mxu0
      %v4768 = vadd.f32 0.0, %v4767
      %v4769 = vpop.f32.mrb[0].mxu0
      %v4770 = vadd.f32 0.0, %v4769
      %4771 = vdwg.mxu0
      %v4772 = vadd.f32 %v4569, %v4768
      %v4773 = vadd.f32 %v4570, %v4770
      %4775 = vset.pattern.permute.xlu0 0
      %4776 = vperm.xlu0 %4775, %v3079
      %v4777 = vpop.permute.xlu0 %4776
      %v4779 = vadd.f32 %v4772, %v4777
      %v4780 = vadd.f32 %v4773, %v4777
      %v4781 = vadd.f32 %v4779, 1.0
      %v4782 = vadd.f32 %v4780, 1.0
      %v4785 = vcombine.low %v4781, %v4782
      %v4787 = vmul.f32 %v483, %v4785
      %v4790 = vcombine.high %v4779, %v4780
      %v4792 = vadd.f32 %v4787, %v4790
      %v4793 = vadd.f32 %v4792, %v441
      %v4794 = vmul.f32 %v4793, 0.5
      %4795 = vst [vmem:[%s393] sm:$0xff] %v4794
      %p4796 = scmp.lt.s32.totalorder %s21, 1
      %s4797 = scalar_select %p4796, %s21, 1
      %s4798 = smul.addr %s4797, 2
      %s4799 = smul.addr %s4798, 4
      %s4800 = scalar_lea.vmem %s10, %s4799
      // Predicated region
      $region61: #{spade_style_block.1} parent=59 // pred_check
        %p4801 = pneg %p264
      $region62: #{spade_style_block.1} parent=59 // pred_check_branch
        %4803 = sbr.rel (%p4801) target = $region64
      $region63: #{spade_style_block.1} parent=59 // pred_region
        _
      $region64: #{spade_style_block.1} parent=59 // pred_fallthru
        _
    $region60: #{spade_style_block.1} parent=5 // pred_fallthru
      _
    %p4804 = scmp.le.s32.totalorder 2, %s16
    // Predicated region
    $region65: #{spade_style_block.1} parent=5 // pred_check
      %p4805 = pneg %p4804
    $region66: #{spade_style_block.1} parent=5 // pred_check_branch
      %4807 = sbr.rel (%p4805) target = $region68
    $region67: #{spade_style_block.1} parent=5 // pred_region
      %s4808 = ssub.s32 %s16, 2
      // Predicated region
      $region69: #{spade_style_block.1} parent=67 // pred_check
        %p4809 = pneg %p270
      $region70: #{spade_style_block.1} parent=67 // pred_check_branch
        %4811 = sbr.rel (%p4809) target = $region72
      $region71: #{spade_style_block.1} parent=67 // pred_region
        %p4812 = scmp.lt.s32.totalorder %s22, 1
        %s4813 = scalar_select %p4812, %s22, 1
        %s4814 = smul.addr %s4813, 2
        %s4815 = smul.addr %s4814, 4
        %s4816 = scalar_lea.vmem %s10, %s4815
      $region72: #{spade_style_block.1} parent=67 // pred_fallthru
        _
    $region68: #{spade_style_block.1} parent=5 // pred_fallthru
      _
  $region6: #{spade_style_block.1} parent=0 // loop_footer
    %s20 = sadd.s32 1, %s16
  $region7: #{spade_style_block.1} parent=0 // loop_footer_branch
    %15 = sbr.rel target = $region3
  $region8: #{spade_style_block.1} parent=0 // loop_exit
    _

</llo_original>
